<compile_context>
chip_gen: v7x
topology: tpu7x:2x2x1
jax: 0.10.0
libtpu: 0.0.40
codegen_flags: <defaults>
</compile_context>

<pallas_src>
import functools

import jax
import jax.numpy as jnp
from jax import lax
from jax.experimental import pallas as pl
from jax.experimental.pallas import tpu as pltpu


def _round_up(x, m):
    return (x + m - 1) // m * m


def _pad2(a, r, c):
    return jnp.zeros((r, c), a.dtype).at[:a.shape[0], :a.shape[1]].set(a)


def _pad_bias(b, c):
    return jnp.zeros((1, c), b.dtype).at[0, :b.shape[0]].set(b)


def _pick_row_tile(ho, wo, w, stride, pp):
    """Largest divisor of ho whose per-block working set fits a VMEM budget."""
    budget = 10 * 2**20
    best = 1
    for t in range(1, ho + 1):
        if ho % t:
            continue
        hin = stride * (t - 1) + 3
        need = (hin * (w + 2) * pp * 2          # bf16 expanded-activation scratch
                + hin * w * pp * 4              # stage-1 f32 intermediate
                + 4 * t * wo * pp * 4)          # acc / z / matmul operands (f32)
        if need <= budget:
            best = t
    return best


# ------------------------------ fused kernel ------------------------------

def _fused_block_kernel(x_ref, w1_ref, b1_ref, w2_ref, b2_ref, w3_ref, b3_ref,
                        *rest, stride, th, h, w, wo, cout, has_res,
                        has_sc_conv, mxu_expand):
    if has_sc_conv:
        ws_ref, bs_ref, o_ref, y1_ref = rest
    else:
        o_ref, y1_ref = rest

    pp = y1_ref.shape[-1]            # lane-padded expanded planes
    op = w3_ref.shape[-1]            # lane-padded output planes
    hin = stride * (th - 1) + 3      # expanded rows needed by this block (w/ halo)
    rb = pl.program_id(1)
    r0 = rb * th                     # first output row of this block

    # ---- stage 1: expand 1x1 conv + BN + ReLU6 for this row block only -----
    # x_ref is the spatially row-padded image: padded row p == original row p-1.
    xr = x_ref[pl.ds(stride * r0, hin), :, :]                  # (hin, w, ck) bf16
    if mxu_expand:
        y = jnp.dot(xr.reshape(hin * w, xr.shape[-1]), w1_ref[...],
                    preferred_element_type=jnp.float32).reshape(hin, w, pp)
    else:
        # tiny cin: rank-1 VPU updates beat inflating the input 8-32x in HBM.
        y = jnp.zeros((hin, w, pp), jnp.float32)
        for c in range(w1_ref.shape[0]):
            y = y + (xr[:, :, c:c + 1].astype(jnp.float32)
                     * w1_ref[pl.ds(c, 1), :].astype(jnp.float32))
    y = jnp.clip(y + b1_ref[...], 0.0, 6.0)

    # The depthwise 3x3 pads with zeros *after* BN+ReLU6, so the scratch carries
    # an explicit zero halo: interior store, halo columns, then (conditionally)
    # the rows that correspond to the spatial zero padding of the image.
    y1_ref[:, pl.ds(1, w), :] = y.astype(jnp.bfloat16)
    y1_ref[:, pl.ds(0, 1), :] = jnp.zeros((hin, 1, pp), jnp.bfloat16)
    y1_ref[:, pl.ds(w + 1, 1), :] = jnp.zeros((hin, 1, pp), jnp.bfloat16)

    @pl.when(r0 == 0)                                   # top image halo row
    def _():
        y1_ref[pl.ds(0, 1), :, :] = jnp.zeros((1, w + 2, pp), jnp.bfloat16)

    @pl.when(stride * r0 + hin > h + 1)                 # bottom image halo row
    def _():
        y1_ref[pl.ds(hin - 1, 1), :, :] = jnp.zeros((1, w + 2, pp), jnp.bfloat16)

    # ---- stage 2: depthwise 3x3 conv + BN + ReLU6 ---------------------------
    w2 = w2_ref[...]                                            # (9, pp) f32
    w2rows = [w2[k:k + 1, :] for k in range(9)]                 # hoisted extracts
    acc = jnp.zeros((th, wo, pp), jnp.float32)
    for di in range(3):
        for dj in range(3):
            if stride == 1:
                tap = y1_ref[pl.ds(di, th), pl.ds(dj, wo), :]
            else:
                tap = y1_ref[pl.ds(di, th, stride), pl.ds(dj, wo, stride), :]
            acc = acc + tap.astype(jnp.float32) * w2rows[di * 3 + dj]
    z = jnp.clip(acc + b2_ref[...], 0.0, 6.0)                   # (th, wo, pp) f32

    # ---- stage 3: project 1x1 conv + BN (+ fused residual / shortcut) ------
    out = jnp.dot(z.astype(jnp.bfloat16).reshape(th * wo, pp), w3_ref[...],
                  preferred_element_type=jnp.float32)
    out = out.reshape(th, wo, op) + b3_ref[...]
    if has_res:
        xres = x_ref[pl.ds(r0 + 1, th), :, :]                   # (th, w == wo, ck)
        if has_sc_conv:
            if mxu_expand:
                sc = jnp.dot(xres.reshape(th * wo, xres.shape[-1]), ws_ref[...],
                             preferred_element_type=jnp.float32)
                sc = sc.reshape(th, wo, op)
            else:
                sc = jnp.zeros((th, wo, op), jnp.float32)
                for c in range(ws_ref.shape[0]):
                    sc = sc + (xres[:, :, c:c + 1].astype(jnp.float32)
                               * ws_ref[pl.ds(c, 1), :].astype(jnp.float32))
            out = out + sc + bs_ref[...]
    if op != cout:
        out = out[:, :, :cout]                                  # drop padded lanes
    if has_res and not has_sc_conv:
        out = out + xres[:, :, :cout].astype(jnp.float32)       # identity (cin==cout)
    o_ref[...] = out.astype(o_ref.dtype)


# ----------------------------- wrapper (host) ------------------------------

def block_forward(x_nchw, params, stride):
    n, cin, h, w = x_nchw.shape
    planes = params["w1"].shape[1]
    cout = params["w3"].shape[1]
    pp = _round_up(planes, 128)
    op = _round_up(cout, 128)
    ho = (h - 1) // stride + 1
    wo = (w - 1) // stride + 1
    has_res = stride == 1
    has_sc_conv = has_res and ("ws" in params)   # shortcut only applied at stride 1
    mxu_expand = cin >= 64                        # lane-pad input only if <= 2x cost
    ck = _round_up(cin, 128) if mxu_expand else cin

    # NCHW -> NHWC, bf16, one zero row of spatial padding top/bottom (and lane
    # padding only on the MXU path); fused into a single XLA pass.
    x = jnp.transpose(x_nchw, (0, 2, 3, 1)).astype(jnp.bfloat16)
    x = jnp.pad(x, ((0, 0), (1, 1), (0, 0), (0, ck - cin)))

    th = _pick_row_tile(ho, wo, w, stride, pp)
    hin = stride * (th - 1) + 3

    args = [x,
            _pad2(params["w1"], ck, pp).astype(jnp.bfloat16),
            _pad_bias(params["b1"], pp),
            _pad2(params["w2"], 9, pp),
            _pad_bias(params["b2"], pp),
            _pad2(params["w3"], pp, op).astype(jnp.bfloat16),
            _pad_bias(params["b3"], op)]
    in_specs = [
        pl.BlockSpec((None, h + 2, w, ck), lambda ni, ri: (ni, 0, 0, 0)),
        pl.BlockSpec((ck, pp), lambda ni, ri: (0, 0)),
        pl.BlockSpec((1, pp), lambda ni, ri: (0, 0)),
        pl.BlockSpec((9, pp), lambda ni, ri: (0, 0)),
        pl.BlockSpec((1, pp), lambda ni, ri: (0, 0)),
        pl.BlockSpec((pp, op), lambda ni, ri: (0, 0)),
        pl.BlockSpec((1, op), lambda ni, ri: (0, 0)),
    ]
    if has_sc_conv:
        args += [_pad2(params["ws"], ck, op).astype(jnp.bfloat16),
                 _pad_bias(params["bs"], op)]
        in_specs += [pl.BlockSpec((ck, op), lambda ni, ri: (0, 0)),
                     pl.BlockSpec((1, op), lambda ni, ri: (0, 0))]

    # VMEM budget from the actual buffers (double-buffered blocks + scratch +
    # in-kernel f32 intermediates) with headroom, clamped to sane bounds.
    xblk = (h + 2) * w * ck * 2
    wgt = sum(int(a.size) * a.dtype.itemsize for a in args[1:])
    oblk = th * wo * cout * 4
    scratch = hin * (w + 2) * pp * 2
    work = hin * w * pp * 4 + 4 * th * wo * pp * 4
    vmem_limit = int(min(max(32 * 2**20,
                             2 * (2 * (xblk + wgt + oblk) + scratch + work)),
                         96 * 2**20))

    flops = (2 * n * (ho // th) * hin * w * ck * pp
             + 2 * n * ho * wo * 9 * pp
             + 2 * n * ho * wo * pp * op)
    if has_sc_conv:
        flops += 2 * n * ho * wo * ck * op
    bytes_accessed = int(x.size) * 2 + int(wgt) + n * ho * wo * cout * 4

    out = pl.pallas_call(
        functools.partial(_fused_block_kernel, stride=stride, th=th, h=h, w=w,
                          wo=wo, cout=cout, has_res=has_res,
                          has_sc_conv=has_sc_conv, mxu_expand=mxu_expand),
        out_shape=jax.ShapeDtypeStruct((n, ho, wo, cout), jnp.float32),
        grid=(n, ho // th),
        in_specs=in_specs,
        out_specs=pl.BlockSpec((None, th, wo, cout), lambda ni, ri: (ni, ri, 0, 0)),
        scratch_shapes=[pltpu.VMEM((hin, w + 2, pp), jnp.bfloat16)],
        compiler_params=pltpu.CompilerParams(
            dimension_semantics=("parallel", "parallel"),
            vmem_limit_bytes=vmem_limit),
        cost_estimate=pl.CostEstimate(flops=int(flops), transcendentals=0,
                                      bytes_accessed=int(bytes_accessed)),
    )(*args)
    return jnp.transpose(out, (0, 3, 1, 2))      # NHWC -> NCHW


# ------------------------------ parameters --------------------------------

def bn_fold(key, c, eps=1e-5):
    k1, k2, k3, k4 = jax.random.split(key, 4)
    gamma = 1.0 + 0.1 * jax.random.normal(k1, (c,), jnp.float32)
    beta = 0.1 * jax.random.normal(k2, (c,), jnp.float32)
    mean = 0.1 * jax.random.normal(k3, (c,), jnp.float32)
    var = jnp.abs(jax.random.normal(k4, (c,), jnp.float32)) + 0.5
    scale = gamma / jnp.sqrt(var + eps)
    shift = beta - mean * scale
    return scale, shift


def make_block_params(key, in_planes, out_planes, expansion, stride, flag):
    planes = expansion * in_planes
    keys = jax.random.split(key, 8)
    w1 = jax.random.normal(keys[0], (in_planes, planes), jnp.float32) / jnp.sqrt(in_planes)
    w2 = jax.random.normal(keys[1], (9, planes), jnp.float32) / 3.0
    w3 = jax.random.normal(keys[2], (planes, out_planes), jnp.float32) / jnp.sqrt(planes)
    s1, t1 = bn_fold(keys[3], planes)
    s2, t2 = bn_fold(keys[4], planes)
    s3, t3 = bn_fold(keys[5], out_planes)
    params = {"w1": w1 * s1[None, :], "b1": t1,
              "w2": w2 * s2[None, :], "b2": t2,
              "w3": w3 * s3[None, :], "b3": t3}
    if (flag == 0 and stride == 1 and in_planes != out_planes) or flag == 1:
        ws = jax.random.normal(keys[6], (in_planes, out_planes), jnp.float32) / jnp.sqrt(in_planes)
        ss, ts = bn_fold(keys[7], out_planes)
        params["ws"] = ws * ss[None, :]
        params["bs"] = ts
    return params


# --------------------------- pure-JAX reference ----------------------------

def block_reference(x_nchw, params, stride):
    """lax.conv reference mirroring the kernel's precision policy (bf16 conv
    operands, f32 accumulation, bf16 intermediate storage)."""
    dn = ("NHWC", "HWIO", "NHWC")
    f32 = jnp.float32
    x = jnp.transpose(x_nchw, (0, 2, 3, 1))
    xb = x.astype(jnp.bfloat16)
    cin = x.shape[-1]
    planes = params["w1"].shape[1]
    cout = params["w3"].shape[1]
    y = lax.conv_general_dilated(
        xb, params["w1"].astype(jnp.bfloat16).reshape(1, 1, cin, planes),
        (1, 1), "VALID", dimension_numbers=dn, preferred_element_type=f32)
    y = jnp.clip(y + params["b1"], 0.0, 6.0).astype(jnp.bfloat16)
    dw = params["w2"].reshape(3, 3, planes)[:, :, None, :]
    y = lax.conv_general_dilated(
        y.astype(f32), dw, (stride, stride), ((1, 1), (1, 1)),
        feature_group_count=planes, dimension_numbers=dn,
        precision=lax.Precision.HIGHEST)
    y = jnp.clip(y + params["b2"], 0.0, 6.0).astype(jnp.bfloat16)
    y = lax.conv_general_dilated(
        y, params["w3"].astype(jnp.bfloat16).reshape(1, 1, planes, cout),
        (1, 1), "VALID", dimension_numbers=dn, preferred_element_type=f32)
    y = y + params["b3"]
    if stride == 1:
        if "ws" in params:
            sc = lax.conv_general_dilated(
                xb, params["ws"].astype(jnp.bfloat16).reshape(1, 1, cin, cout),
                (1, 1), "VALID", dimension_numbers=dn,
                preferred_element_type=f32) + params["bs"]
        else:
            sc = xb.astype(f32)
        y = y + sc
    return jnp.transpose(y, (0, 3, 1, 2))


# ----------------------------------- main -----------------------------------

if __name__ == "__main__":
    N = 2
    configs = [
        # (in_planes, out_planes, expansion, stride, flag, H, W)
        (4, 8, 2, 1, 0, 16, 16),    # projection shortcut (cin != cout), VPU expand
        (8, 8, 2, 1, 0, 16, 16),    # identity shortcut
        (8, 16, 3, 2, 0, 15, 15),   # stride 2, no residual, odd spatial dims
        (32, 32, 2, 1, 1, 16, 16),  # flag == 1 forces a shortcut conv
        (64, 64, 2, 1, 0, 16, 16),  # cin >= 64 -> MXU expand path (lane-padded x)
    ]
    key = jax.random.PRNGKey(0)
    for cfg in configs:
        cin, cout, expansion, stride, flag, hh, ww = cfg
        key, kx, kp = jax.random.split(key, 3)
        x = jax.random.normal(kx, (N, cin, hh, ww), jnp.float32)
        params = make_block_params(kp, cin, cout, expansion, stride, flag)

        out = jax.block_until_ready(block_forward(x, params, stride))
        ref = jax.block_until_ready(block_reference(x, params, stride))

        assert out.shape == ref.shape, (cfg, out.shape, ref.shape)
        err = float(jnp.max(jnp.abs(out - ref)))
        assert jnp.allclose(out, ref, rtol=2e-2, atol=2e-2), (cfg, err)

    print("KERNEL_OK")
</pallas_src>

<mosaic_0001>
module attributes {stable_mosaic.version = 11 : i64} {
  func.func @_fused_block_kernel(%arg0: i32, %arg1: i32, %arg2: memref<1x18x16x4xbf16, #tpu.memory_space<vmem>>, %arg3: memref<4x128xbf16, #tpu.memory_space<vmem>>, %arg4: memref<1x128xf32, #tpu.memory_space<vmem>>, %arg5: memref<9x128xf32, #tpu.memory_space<vmem>>, %arg6: memref<1x128xf32, #tpu.memory_space<vmem>>, %arg7: memref<128x128xbf16, #tpu.memory_space<vmem>>, %arg8: memref<1x128xf32, #tpu.memory_space<vmem>>, %arg9: memref<4x128xbf16, #tpu.memory_space<vmem>>, %arg10: memref<1x128xf32, #tpu.memory_space<vmem>>, %arg11: memref<1x16x16x8xf32, #tpu.memory_space<vmem>>, %arg12: memref<18x18x128xbf16, #tpu.memory_space<vmem>>) attributes {dimension_semantics = [#tpu.dimension_semantics<parallel>, #tpu.dimension_semantics<parallel>], iteration_bounds = array<i64: 2, 1>, scalar_prefetch = 0 : i64, scratch_operands = 1 : i64, tpu.core_type = #tpu.core_type<tc>, window_params = [{transform_indices = @transform_0, window_bounds = array<i64: 1, 18, 16, 4>}, {pipeline_mode = #tpu.pipeline_mode<synchronous>, transform_indices = @transform_1, window_bounds = array<i64: 4, 128>}, {pipeline_mode = #tpu.pipeline_mode<synchronous>, transform_indices = @transform_2, window_bounds = array<i64: 1, 128>}, {pipeline_mode = #tpu.pipeline_mode<synchronous>, transform_indices = @transform_3, window_bounds = array<i64: 9, 128>}, {pipeline_mode = #tpu.pipeline_mode<synchronous>, transform_indices = @transform_4, window_bounds = array<i64: 1, 128>}, {pipeline_mode = #tpu.pipeline_mode<synchronous>, transform_indices = @transform_5, window_bounds = array<i64: 128, 128>}, {pipeline_mode = #tpu.pipeline_mode<synchronous>, transform_indices = @transform_6, window_bounds = array<i64: 1, 128>}, {pipeline_mode = #tpu.pipeline_mode<synchronous>, transform_indices = @transform_7, window_bounds = array<i64: 4, 128>}, {pipeline_mode = #tpu.pipeline_mode<synchronous>, transform_indices = @transform_8, window_bounds = array<i64: 1, 128>}, {transform_indices = @transform_9, window_bounds = array<i64: 1, 16, 16, 8>}]} {
    %c16_i32 = arith.constant 16 : i32
    %0 = arith.muli %arg1, %c16_i32 : i32
    %c1_i32 = arith.constant 1 : i32
    %1 = arith.muli %c1_i32, %0 : i32
    %c0 = arith.constant 0 : index
    %2 = arith.index_cast %1 : i32 to index
    %c0_0 = arith.constant 0 : index
    %c0_1 = arith.constant 0 : index
    %3 = vector.load %arg2[%c0, %2, %c0_0, %c0_1] : memref<1x18x16x4xbf16, #tpu.memory_space<vmem>>, vector<1x18x16x4xbf16>
    %4 = vector.shape_cast %3 : vector<1x18x16x4xbf16> to vector<18x16x4xbf16>
    %cst = arith.constant 0.000000e+00 : f32
    %5 = vector.broadcast %cst : f32 to vector<18x16x128xf32>
    %6 = vector.extract_strided_slice %4 {offsets = [0, 0, 0], sizes = [18, 16, 1], strides = [1, 1, 1]} : vector<18x16x4xbf16> to vector<18x16x1xbf16>
    %7 = arith.extf %6 : vector<18x16x1xbf16> to vector<18x16x1xf32>
    %c0_2 = arith.constant 0 : index
    %c0_3 = arith.constant 0 : index
    %8 = vector.load %arg3[%c0_2, %c0_3] : memref<4x128xbf16, #tpu.memory_space<vmem>>, vector<1x128xbf16>
    %9 = arith.extf %8 : vector<1x128xbf16> to vector<1x128xf32>
    %10 = vector.shape_cast %9 : vector<1x128xf32> to vector<1x1x128xf32>
    %11 = vector.broadcast %7 : vector<18x16x1xf32> to vector<18x16x128xf32>
    %12 = vector.broadcast %10 : vector<1x1x128xf32> to vector<18x16x128xf32>
    %13 = arith.mulf %11, %12 : vector<18x16x128xf32>
    %14 = arith.addf %5, %13 : vector<18x16x128xf32>
    %15 = vector.extract_strided_slice %4 {offsets = [0, 0, 1], sizes = [18, 16, 1], strides = [1, 1, 1]} : vector<18x16x4xbf16> to vector<18x16x1xbf16>
    %16 = arith.extf %15 : vector<18x16x1xbf16> to vector<18x16x1xf32>
    %c1 = arith.constant 1 : index
    %c0_4 = arith.constant 0 : index
    %17 = vector.load %arg3[%c1, %c0_4] : memref<4x128xbf16, #tpu.memory_space<vmem>>, vector<1x128xbf16>
    %18 = arith.extf %17 : vector<1x128xbf16> to vector<1x128xf32>
    %19 = vector.shape_cast %18 : vector<1x128xf32> to vector<1x1x128xf32>
    %20 = vector.broadcast %16 : vector<18x16x1xf32> to vector<18x16x128xf32>
    %21 = vector.broadcast %19 : vector<1x1x128xf32> to vector<18x16x128xf32>
    %22 = arith.mulf %20, %21 : vector<18x16x128xf32>
    %23 = arith.addf %14, %22 : vector<18x16x128xf32>
    %24 = vector.extract_strided_slice %4 {offsets = [0, 0, 2], sizes = [18, 16, 1], strides = [1, 1, 1]} : vector<18x16x4xbf16> to vector<18x16x1xbf16>
    %25 = arith.extf %24 : vector<18x16x1xbf16> to vector<18x16x1xf32>
    %c2 = arith.constant 2 : index
    %c0_5 = arith.constant 0 : index
    %26 = vector.load %arg3[%c2, %c0_5] : memref<4x128xbf16, #tpu.memory_space<vmem>>, vector<1x128xbf16>
    %27 = arith.extf %26 : vector<1x128xbf16> to vector<1x128xf32>
    %28 = vector.shape_cast %27 : vector<1x128xf32> to vector<1x1x128xf32>
    %29 = vector.broadcast %25 : vector<18x16x1xf32> to vector<18x16x128xf32>
    %30 = vector.broadcast %28 : vector<1x1x128xf32> to vector<18x16x128xf32>
    %31 = arith.mulf %29, %30 : vector<18x16x128xf32>
    %32 = arith.addf %23, %31 : vector<18x16x128xf32>
    %33 = vector.extract_strided_slice %4 {offsets = [0, 0, 3], sizes = [18, 16, 1], strides = [1, 1, 1]} : vector<18x16x4xbf16> to vector<18x16x1xbf16>
    %34 = arith.extf %33 : vector<18x16x1xbf16> to vector<18x16x1xf32>
    %c3 = arith.constant 3 : index
    %c0_6 = arith.constant 0 : index
    %35 = vector.load %arg3[%c3, %c0_6] : memref<4x128xbf16, #tpu.memory_space<vmem>>, vector<1x128xbf16>
    %36 = arith.extf %35 : vector<1x128xbf16> to vector<1x128xf32>
    %37 = vector.shape_cast %36 : vector<1x128xf32> to vector<1x1x128xf32>
    %38 = vector.broadcast %34 : vector<18x16x1xf32> to vector<18x16x128xf32>
    %39 = vector.broadcast %37 : vector<1x1x128xf32> to vector<18x16x128xf32>
    %40 = arith.mulf %38, %39 : vector<18x16x128xf32>
    %41 = arith.addf %32, %40 : vector<18x16x128xf32>
    %c0_7 = arith.constant 0 : index
    %c0_8 = arith.constant 0 : index
    %42 = vector.load %arg4[%c0_7, %c0_8] : memref<1x128xf32, #tpu.memory_space<vmem>>, vector<1x128xf32>
    %43 = vector.shape_cast %42 : vector<1x128xf32> to vector<1x1x128xf32>
    %44 = vector.broadcast %43 : vector<1x1x128xf32> to vector<18x16x128xf32>
    %45 = arith.addf %41, %44 : vector<18x16x128xf32>
    %cst_9 = arith.constant 0.000000e+00 : f32
    %cst_10 = arith.constant 6.000000e+00 : f32
    %46 = vector.broadcast %cst_9 : f32 to vector<18x16x128xf32>
    %47 = arith.maximumf %46, %45 : vector<18x16x128xf32>
    %48 = vector.broadcast %cst_10 : f32 to vector<18x16x128xf32>
    %49 = arith.minimumf %48, %47 : vector<18x16x128xf32>
    %50 = arith.truncf %49 : vector<18x16x128xf32> to vector<18x16x128xbf16>
    %c0_11 = arith.constant 0 : index
    %c1_12 = arith.constant 1 : index
    %c0_13 = arith.constant 0 : index
    %51 = vector.load %arg12[%c0_11, %c1_12, %c0_13] : memref<18x18x128xbf16, #tpu.memory_space<vmem>>, vector<18x16x128xbf16>
    tpu.vector_store %arg12[%c0_11, %c1_12, %c0_13], %50 {strides = array<i32>} : memref<18x18x128xbf16, #tpu.memory_space<vmem>>, vector<18x16x128xbf16>,
    %cst_14 = arith.constant 0.000000e+00 : bf16
    %52 = vector.broadcast %cst_14 : bf16 to vector<18x1x128xbf16>
    %c0_15 = arith.constant 0 : index
    %c0_16 = arith.constant 0 : index
    %c0_17 = arith.constant 0 : index
    %53 = vector.load %arg12[%c0_15, %c0_16, %c0_17] : memref<18x18x128xbf16, #tpu.memory_space<vmem>>, vector<18x1x128xbf16>
    tpu.vector_store %arg12[%c0_15, %c0_16, %c0_17], %52 {strides = array<i32>} : memref<18x18x128xbf16, #tpu.memory_space<vmem>>, vector<18x1x128xbf16>,
    %cst_18 = arith.constant 0.000000e+00 : bf16
    %54 = vector.broadcast %cst_18 : bf16 to vector<18x1x128xbf16>
    %c0_19 = arith.constant 0 : index
    %c17 = arith.constant 17 : index
    %c0_20 = arith.constant 0 : index
    %55 = vector.load %arg12[%c0_19, %c17, %c0_20] : memref<18x18x128xbf16, #tpu.memory_space<vmem>>, vector<18x1x128xbf16>
    tpu.vector_store %arg12[%c0_19, %c17, %c0_20], %54 {strides = array<i32>} : memref<18x18x128xbf16, #tpu.memory_space<vmem>>, vector<18x1x128xbf16>,
    %c0_i32 = arith.constant 0 : i32
    %56 = arith.cmpi eq, %0, %c0_i32 : i32
    %57 = arith.extui %56 : i1 to i32
    %c0_i32_21 = arith.constant 0 : i32
    %58 = arith.cmpi ne, %57, %c0_i32_21 : i32
    scf.if %58 {
      %cst_82 = arith.constant 0.000000e+00 : bf16
      %196 = vector.broadcast %cst_82 : bf16 to vector<1x18x128xbf16>
      %c0_83 = arith.constant 0 : index
      %c0_84 = arith.constant 0 : index
      %c0_85 = arith.constant 0 : index
      %197 = vector.load %arg12[%c0_83, %c0_84, %c0_85] : memref<18x18x128xbf16, #tpu.memory_space<vmem>>, vector<1x18x128xbf16>
      tpu.vector_store %arg12[%c0_83, %c0_84, %c0_85], %196 {strides = array<i32>} : memref<18x18x128xbf16, #tpu.memory_space<vmem>>, vector<1x18x128xbf16>,
    } else {
    }
    %c1_i32_22 = arith.constant 1 : i32
    %59 = arith.muli %c1_i32_22, %0 : i32
    %c18_i32 = arith.constant 18 : i32
    %60 = arith.addi %59, %c18_i32 : i32
    %c17_i32 = arith.constant 17 : i32
    %61 = arith.cmpi sgt, %60, %c17_i32 : i32
    %62 = arith.extui %61 : i1 to i32
    %c0_i32_23 = arith.constant 0 : i32
    %63 = arith.cmpi ne, %62, %c0_i32_23 : i32
    scf.if %63 {
      %cst_82 = arith.constant 0.000000e+00 : bf16
      %196 = vector.broadcast %cst_82 : bf16 to vector<1x18x128xbf16>
      %c17_83 = arith.constant 17 : index
      %c0_84 = arith.constant 0 : index
      %c0_85 = arith.constant 0 : index
      %197 = vector.load %arg12[%c17_83, %c0_84, %c0_85] : memref<18x18x128xbf16, #tpu.memory_space<vmem>>, vector<1x18x128xbf16>
      tpu.vector_store %arg12[%c17_83, %c0_84, %c0_85], %196 {strides = array<i32>} : memref<18x18x128xbf16, #tpu.memory_space<vmem>>, vector<1x18x128xbf16>,
    } else {
    }
    %c0_24 = arith.constant 0 : index
    %c0_25 = arith.constant 0 : index
    %64 = vector.load %arg5[%c0_24, %c0_25] : memref<9x128xf32, #tpu.memory_space<vmem>>, vector<9x128xf32>
    %65 = vector.extract_strided_slice %64 {offsets = [0, 0], sizes = [1, 128], strides = [1, 1]} : vector<9x128xf32> to vector<1x128xf32>
    %66 = vector.extract_strided_slice %64 {offsets = [1, 0], sizes = [1, 128], strides = [1, 1]} : vector<9x128xf32> to vector<1x128xf32>
    %67 = vector.extract_strided_slice %64 {offsets = [2, 0], sizes = [1, 128], strides = [1, 1]} : vector<9x128xf32> to vector<1x128xf32>
    %68 = vector.extract_strided_slice %64 {offsets = [3, 0], sizes = [1, 128], strides = [1, 1]} : vector<9x128xf32> to vector<1x128xf32>
    %69 = vector.extract_strided_slice %64 {offsets = [4, 0], sizes = [1, 128], strides = [1, 1]} : vector<9x128xf32> to vector<1x128xf32>
    %70 = vector.extract_strided_slice %64 {offsets = [5, 0], sizes = [1, 128], strides = [1, 1]} : vector<9x128xf32> to vector<1x128xf32>
    %71 = vector.extract_strided_slice %64 {offsets = [6, 0], sizes = [1, 128], strides = [1, 1]} : vector<9x128xf32> to vector<1x128xf32>
    %72 = vector.extract_strided_slice %64 {offsets = [7, 0], sizes = [1, 128], strides = [1, 1]} : vector<9x128xf32> to vector<1x128xf32>
    %73 = vector.extract_strided_slice %64 {offsets = [8, 0], sizes = [1, 128], strides = [1, 1]} : vector<9x128xf32> to vector<1x128xf32>
    %cst_26 = arith.constant 0.000000e+00 : f32
    %74 = vector.broadcast %cst_26 : f32 to vector<16x16x128xf32>
    %c0_27 = arith.constant 0 : index
    %c0_28 = arith.constant 0 : index
    %c0_29 = arith.constant 0 : index
    %75 = vector.load %arg12[%c0_27, %c0_28, %c0_29] : memref<18x18x128xbf16, #tpu.memory_space<vmem>>, vector<16x16x128xbf16>
    %76 = arith.extf %75 : vector<16x16x128xbf16> to vector<16x16x128xf32>
    %77 = vector.shape_cast %65 : vector<1x128xf32> to vector<1x1x128xf32>
    %78 = vector.broadcast %77 : vector<1x1x128xf32> to vector<16x16x128xf32>
    %79 = arith.mulf %76, %78 : vector<16x16x128xf32>
    %80 = arith.addf %74, %79 : vector<16x16x128xf32>
    %c0_30 = arith.constant 0 : index
    %c1_31 = arith.constant 1 : index
    %c0_32 = arith.constant 0 : index
    %81 = vector.load %arg12[%c0_30, %c1_31, %c0_32] : memref<18x18x128xbf16, #tpu.memory_space<vmem>>, vector<16x16x128xbf16>
    %82 = arith.extf %81 : vector<16x16x128xbf16> to vector<16x16x128xf32>
    %83 = vector.shape_cast %66 : vector<1x128xf32> to vector<1x1x128xf32>
    %84 = vector.broadcast %83 : vector<1x1x128xf32> to vector<16x16x128xf32>
    %85 = arith.mulf %82, %84 : vector<16x16x128xf32>
    %86 = arith.addf %80, %85 : vector<16x16x128xf32>
    %c0_33 = arith.constant 0 : index
    %c2_34 = arith.constant 2 : index
    %c0_35 = arith.constant 0 : index
    %87 = vector.load %arg12[%c0_33, %c2_34, %c0_35] : memref<18x18x128xbf16, #tpu.memory_space<vmem>>, vector<16x16x128xbf16>
    %88 = arith.extf %87 : vector<16x16x128xbf16> to vector<16x16x128xf32>
    %89 = vector.shape_cast %67 : vector<1x128xf32> to vector<1x1x128xf32>
    %90 = vector.broadcast %89 : vector<1x1x128xf32> to vector<16x16x128xf32>
    %91 = arith.mulf %88, %90 : vector<16x16x128xf32>
    %92 = arith.addf %86, %91 : vector<16x16x128xf32>
    %c1_36 = arith.constant 1 : index
    %c0_37 = arith.constant 0 : index
    %c0_38 = arith.constant 0 : index
    %93 = vector.load %arg12[%c1_36, %c0_37, %c0_38] : memref<18x18x128xbf16, #tpu.memory_space<vmem>>, vector<16x16x128xbf16>
    %94 = arith.extf %93 : vector<16x16x128xbf16> to vector<16x16x128xf32>
    %95 = vector.shape_cast %68 : vector<1x128xf32> to vector<1x1x128xf32>
    %96 = vector.broadcast %95 : vector<1x1x128xf32> to vector<16x16x128xf32>
    %97 = arith.mulf %94, %96 : vector<16x16x128xf32>
    %98 = arith.addf %92, %97 : vector<16x16x128xf32>
    %c1_39 = arith.constant 1 : index
    %c1_40 = arith.constant 1 : index
    %c0_41 = arith.constant 0 : index
    %99 = vector.load %arg12[%c1_39, %c1_40, %c0_41] : memref<18x18x128xbf16, #tpu.memory_space<vmem>>, vector<16x16x128xbf16>
    %100 = arith.extf %99 : vector<16x16x128xbf16> to vector<16x16x128xf32>
    %101 = vector.shape_cast %69 : vector<1x128xf32> to vector<1x1x128xf32>
    %102 = vector.broadcast %101 : vector<1x1x128xf32> to vector<16x16x128xf32>
    %103 = arith.mulf %100, %102 : vector<16x16x128xf32>
    %104 = arith.addf %98, %103 : vector<16x16x128xf32>
    %c1_42 = arith.constant 1 : index
    %c2_43 = arith.constant 2 : index
    %c0_44 = arith.constant 0 : index
    %105 = vector.load %arg12[%c1_42, %c2_43, %c0_44] : memref<18x18x128xbf16, #tpu.memory_space<vmem>>, vector<16x16x128xbf16>
    %106 = arith.extf %105 : vector<16x16x128xbf16> to vector<16x16x128xf32>
    %107 = vector.shape_cast %70 : vector<1x128xf32> to vector<1x1x128xf32>
    %108 = vector.broadcast %107 : vector<1x1x128xf32> to vector<16x16x128xf32>
    %109 = arith.mulf %106, %108 : vector<16x16x128xf32>
    %110 = arith.addf %104, %109 : vector<16x16x128xf32>
    %c2_45 = arith.constant 2 : index
    %c0_46 = arith.constant 0 : index
    %c0_47 = arith.constant 0 : index
    %111 = vector.load %arg12[%c2_45, %c0_46, %c0_47] : memref<18x18x128xbf16, #tpu.memory_space<vmem>>, vector<16x16x128xbf16>
    %112 = arith.extf %111 : vector<16x16x128xbf16> to vector<16x16x128xf32>
    %113 = vector.shape_cast %71 : vector<1x128xf32> to vector<1x1x128xf32>
    %114 = vector.broadcast %113 : vector<1x1x128xf32> to vector<16x16x128xf32>
    %115 = arith.mulf %112, %114 : vector<16x16x128xf32>
    %116 = arith.addf %110, %115 : vector<16x16x128xf32>
    %c2_48 = arith.constant 2 : index
    %c1_49 = arith.constant 1 : index
    %c0_50 = arith.constant 0 : index
    %117 = vector.load %arg12[%c2_48, %c1_49, %c0_50] : memref<18x18x128xbf16, #tpu.memory_space<vmem>>, vector<16x16x128xbf16>
    %118 = arith.extf %117 : vector<16x16x128xbf16> to vector<16x16x128xf32>
    %119 = vector.shape_cast %72 : vector<1x128xf32> to vector<1x1x128xf32>
    %120 = vector.broadcast %119 : vector<1x1x128xf32> to vector<16x16x128xf32>
    %121 = arith.mulf %118, %120 : vector<16x16x128xf32>
    %122 = arith.addf %116, %121 : vector<16x16x128xf32>
    %c2_51 = arith.constant 2 : index
    %c2_52 = arith.constant 2 : index
    %c0_53 = arith.constant 0 : index
    %123 = vector.load %arg12[%c2_51, %c2_52, %c0_53] : memref<18x18x128xbf16, #tpu.memory_space<vmem>>, vector<16x16x128xbf16>
    %124 = arith.extf %123 : vector<16x16x128xbf16> to vector<16x16x128xf32>
    %125 = vector.shape_cast %73 : vector<1x128xf32> to vector<1x1x128xf32>
    %126 = vector.broadcast %125 : vector<1x1x128xf32> to vector<16x16x128xf32>
    %127 = arith.mulf %124, %126 : vector<16x16x128xf32>
    %128 = arith.addf %122, %127 : vector<16x16x128xf32>
    %c0_54 = arith.constant 0 : index
    %c0_55 = arith.constant 0 : index
    %129 = vector.load %arg6[%c0_54, %c0_55] : memref<1x128xf32, #tpu.memory_space<vmem>>, vector<1x128xf32>
    %130 = vector.shape_cast %129 : vector<1x128xf32> to vector<1x1x128xf32>
    %131 = vector.broadcast %130 : vector<1x1x128xf32> to vector<16x16x128xf32>
    %132 = arith.addf %128, %131 : vector<16x16x128xf32>
    %cst_56 = arith.constant 0.000000e+00 : f32
    %cst_57 = arith.constant 6.000000e+00 : f32
    %133 = vector.broadcast %cst_56 : f32 to vector<16x16x128xf32>
    %134 = arith.maximumf %133, %132 : vector<16x16x128xf32>
    %135 = vector.broadcast %cst_57 : f32 to vector<16x16x128xf32>
    %136 = arith.minimumf %135, %134 : vector<16x16x128xf32>
    %137 = arith.truncf %136 : vector<16x16x128xf32> to vector<16x16x128xbf16>
    %138 = vector.shape_cast %137 : vector<16x16x128xbf16> to vector<256x128xbf16>
    %c0_58 = arith.constant 0 : index
    %c0_59 = arith.constant 0 : index
    %139 = vector.load %arg7[%c0_58, %c0_59] : memref<128x128xbf16, #tpu.memory_space<vmem>>, vector<128x128xbf16>
    %cst_60 = arith.constant dense<0.000000e+00> : vector<256x128xf32>
    %140 = tpu.matmul %138, %139, %cst_60 {dimension_numbers = #tpu.dot_dimension_numbers<[1], [0], [0], [1], [0, 0, 1, 1], [], []>} : vector<256x128xbf16>, vector<128x128xbf16>, vector<256x128xf32> -> vector<256x128xf32>
    %141 = vector.shape_cast %140 : vector<256x128xf32> to vector<16x16x128xf32>
    %c0_61 = arith.constant 0 : index
    %c0_62 = arith.constant 0 : index
    %142 = vector.load %arg8[%c0_61, %c0_62] : memref<1x128xf32, #tpu.memory_space<vmem>>, vector<1x128xf32>
    %143 = vector.shape_cast %142 : vector<1x128xf32> to vector<1x1x128xf32>
    %144 = vector.broadcast %143 : vector<1x1x128xf32> to vector<16x16x128xf32>
    %145 = arith.addf %141, %144 : vector<16x16x128xf32>
    %c1_i32_63 = arith.constant 1 : i32
    %146 = arith.addi %0, %c1_i32_63 : i32
    %c0_64 = arith.constant 0 : index
    %147 = arith.index_cast %146 : i32 to index
    %c0_65 = arith.constant 0 : index
    %c0_66 = arith.constant 0 : index
    %148 = vector.load %arg2[%c0_64, %147, %c0_65, %c0_66] : memref<1x18x16x4xbf16, #tpu.memory_space<vmem>>, vector<1x16x16x4xbf16>
    %149 = vector.shape_cast %148 : vector<1x16x16x4xbf16> to vector<16x16x4xbf16>
    %cst_67 = arith.constant 0.000000e+00 : f32
    %150 = vector.broadcast %cst_67 : f32 to vector<16x16x128xf32>
    %151 = vector.extract_strided_slice %149 {offsets = [0, 0, 0], sizes = [16, 16, 1], strides = [1, 1, 1]} : vector<16x16x4xbf16> to vector<16x16x1xbf16>
    %152 = arith.extf %151 : vector<16x16x1xbf16> to vector<16x16x1xf32>
    %c0_68 = arith.constant 0 : index
    %c0_69 = arith.constant 0 : index
    %153 = vector.load %arg9[%c0_68, %c0_69] : memref<4x128xbf16, #tpu.memory_space<vmem>>, vector<1x128xbf16>
    %154 = arith.extf %153 : vector<1x128xbf16> to vector<1x128xf32>
    %155 = vector.shape_cast %154 : vector<1x128xf32> to vector<1x1x128xf32>
    %156 = vector.broadcast %152 : vector<16x16x1xf32> to vector<16x16x128xf32>
    %157 = vector.broadcast %155 : vector<1x1x128xf32> to vector<16x16x128xf32>
    %158 = arith.mulf %156, %157 : vector<16x16x128xf32>
    %159 = arith.addf %150, %158 : vector<16x16x128xf32>
    %160 = vector.extract_strided_slice %149 {offsets = [0, 0, 1], sizes = [16, 16, 1], strides = [1, 1, 1]} : vector<16x16x4xbf16> to vector<16x16x1xbf16>
    %161 = arith.extf %160 : vector<16x16x1xbf16> to vector<16x16x1xf32>
    %c1_70 = arith.constant 1 : index
    %c0_71 = arith.constant 0 : index
    %162 = vector.load %arg9[%c1_70, %c0_71] : memref<4x128xbf16, #tpu.memory_space<vmem>>, vector<1x128xbf16>
    %163 = arith.extf %162 : vector<1x128xbf16> to vector<1x128xf32>
    %164 = vector.shape_cast %163 : vector<1x128xf32> to vector<1x1x128xf32>
    %165 = vector.broadcast %161 : vector<16x16x1xf32> to vector<16x16x128xf32>
    %166 = vector.broadcast %164 : vector<1x1x128xf32> to vector<16x16x128xf32>
    %167 = arith.mulf %165, %166 : vector<16x16x128xf32>
    %168 = arith.addf %159, %167 : vector<16x16x128xf32>
    %169 = vector.extract_strided_slice %149 {offsets = [0, 0, 2], sizes = [16, 16, 1], strides = [1, 1, 1]} : vector<16x16x4xbf16> to vector<16x16x1xbf16>
    %170 = arith.extf %169 : vector<16x16x1xbf16> to vector<16x16x1xf32>
    %c2_72 = arith.constant 2 : index
    %c0_73 = arith.constant 0 : index
    %171 = vector.load %arg9[%c2_72, %c0_73] : memref<4x128xbf16, #tpu.memory_space<vmem>>, vector<1x128xbf16>
    %172 = arith.extf %171 : vector<1x128xbf16> to vector<1x128xf32>
    %173 = vector.shape_cast %172 : vector<1x128xf32> to vector<1x1x128xf32>
    %174 = vector.broadcast %170 : vector<16x16x1xf32> to vector<16x16x128xf32>
    %175 = vector.broadcast %173 : vector<1x1x128xf32> to vector<16x16x128xf32>
    %176 = arith.mulf %174, %175 : vector<16x16x128xf32>
    %177 = arith.addf %168, %176 : vector<16x16x128xf32>
    %178 = vector.extract_strided_slice %149 {offsets = [0, 0, 3], sizes = [16, 16, 1], strides = [1, 1, 1]} : vector<16x16x4xbf16> to vector<16x16x1xbf16>
    %179 = arith.extf %178 : vector<16x16x1xbf16> to vector<16x16x1xf32>
    %c3_74 = arith.constant 3 : index
    %c0_75 = arith.constant 0 : index
    %180 = vector.load %arg9[%c3_74, %c0_75] : memref<4x128xbf16, #tpu.memory_space<vmem>>, vector<1x128xbf16>
    %181 = arith.extf %180 : vector<1x128xbf16> to vector<1x128xf32>
    %182 = vector.shape_cast %181 : vector<1x128xf32> to vector<1x1x128xf32>
    %183 = vector.broadcast %179 : vector<16x16x1xf32> to vector<16x16x128xf32>
    %184 = vector.broadcast %182 : vector<1x1x128xf32> to vector<16x16x128xf32>
    %185 = arith.mulf %183, %184 : vector<16x16x128xf32>
    %186 = arith.addf %177, %185 : vector<16x16x128xf32>
    %187 = arith.addf %145, %186 : vector<16x16x128xf32>
    %c0_76 = arith.constant 0 : index
    %c0_77 = arith.constant 0 : index
    %188 = vector.load %arg10[%c0_76, %c0_77] : memref<1x128xf32, #tpu.memory_space<vmem>>, vector<1x128xf32>
    %189 = vector.shape_cast %188 : vector<1x128xf32> to vector<1x1x128xf32>
    %190 = vector.broadcast %189 : vector<1x1x128xf32> to vector<16x16x128xf32>
    %191 = arith.addf %187, %190 : vector<16x16x128xf32>
    %192 = vector.extract_strided_slice %191 {offsets = [0, 0, 0], sizes = [16, 16, 8], strides = [1, 1, 1]} : vector<16x16x128xf32> to vector<16x16x8xf32>
    %c0_78 = arith.constant 0 : index
    %c0_79 = arith.constant 0 : index
    %c0_80 = arith.constant 0 : index
    %c0_81 = arith.constant 0 : index
    %193 = vector.load %arg11[%c0_78, %c0_79, %c0_80, %c0_81] : memref<1x16x16x8xf32, #tpu.memory_space<vmem>>, vector<1x16x16x8xf32>
    %194 = vector.shape_cast %193 : vector<1x16x16x8xf32> to vector<16x16x8xf32>
    %195 = vector.shape_cast %192 : vector<16x16x8xf32> to vector<1x16x16x8xf32>
    tpu.vector_store %arg11[%c0_78, %c0_79, %c0_80, %c0_81], %195 {strides = array<i32>} : memref<1x16x16x8xf32, #tpu.memory_space<vmem>>, vector<1x16x16x8xf32>,
    return
  }
  func.func @transform_0(%arg0: i32, %arg1: i32) -> (i32, i32, i32, i32) {
    %c0_i32 = arith.constant 0 : i32
    %c0_i32_0 = arith.constant 0 : i32
    %c0_i32_1 = arith.constant 0 : i32
    %c0_i32_2 = arith.constant 0 : i32
    return %arg0, %c0_i32, %c0_i32_0, %c0_i32_1 : i32, i32, i32, i32
  }
  func.func @transform_1(%arg0: i32, %arg1: i32) -> (i32, i32) {
    %c0_i32 = arith.constant 0 : i32
    %c0_i32_0 = arith.constant 0 : i32
    %c0_i32_1 = arith.constant 0 : i32
    return %c0_i32, %c0_i32_0 : i32, i32
  }
  func.func @transform_2(%arg0: i32, %arg1: i32) -> (i32, i32) {
    %c0_i32 = arith.constant 0 : i32
    %c0_i32_0 = arith.constant 0 : i32
    %c0_i32_1 = arith.constant 0 : i32
    return %c0_i32, %c0_i32_0 : i32, i32
  }
  func.func @transform_3(%arg0: i32, %arg1: i32) -> (i32, i32) {
    %c0_i32 = arith.constant 0 : i32
    %c0_i32_0 = arith.constant 0 : i32
    %c0_i32_1 = arith.constant 0 : i32
    return %c0_i32, %c0_i32_0 : i32, i32
  }
  func.func @transform_4(%arg0: i32, %arg1: i32) -> (i32, i32) {
    %c0_i32 = arith.constant 0 : i32
    %c0_i32_0 = arith.constant 0 : i32
    %c0_i32_1 = arith.constant 0 : i32
    return %c0_i32, %c0_i32_0 : i32, i32
  }
  func.func @transform_5(%arg0: i32, %arg1: i32) -> (i32, i32) {
    %c0_i32 = arith.constant 0 : i32
    %c0_i32_0 = arith.constant 0 : i32
    %c0_i32_1 = arith.constant 0 : i32
    return %c0_i32, %c0_i32_0 : i32, i32
  }
  func.func @transform_6(%arg0: i32, %arg1: i32) -> (i32, i32) {
    %c0_i32 = arith.constant 0 : i32
    %c0_i32_0 = arith.constant 0 : i32
    %c0_i32_1 = arith.constant 0 : i32
    return %c0_i32, %c0_i32_0 : i32, i32
  }
  func.func @transform_7(%arg0: i32, %arg1: i32) -> (i32, i32) {
    %c0_i32 = arith.constant 0 : i32
    %c0_i32_0 = arith.constant 0 : i32
    %c0_i32_1 = arith.constant 0 : i32
    return %c0_i32, %c0_i32_0 : i32, i32
  }
  func.func @transform_8(%arg0: i32, %arg1: i32) -> (i32, i32) {
    %c0_i32 = arith.constant 0 : i32
    %c0_i32_0 = arith.constant 0 : i32
    %c0_i32_1 = arith.constant 0 : i32
    return %c0_i32, %c0_i32_0 : i32, i32
  }
  func.func @transform_9(%arg0: i32, %arg1: i32) -> (i32, i32, i32, i32) {
    %c0_i32 = arith.constant 0 : i32
    %c0_i32_0 = arith.constant 0 : i32
    %c0_i32_1 = arith.constant 0 : i32
    return %arg0, %arg1, %c0_i32, %c0_i32_0 : i32, i32, i32, i32
  }
}

</mosaic_0001>

<llo_original>
// kernel: tpu_custom_call.1
$region0: #{tpu_custom_call.1}
  #allocation0 [shape = 'u32[]', space=smem, size = 0x4, offset = 0x4, fixed_abs, tag = 'smem constant byte address 0x4 - core index']
  #allocation1 [shape = 'u32[144,128]{1,0:T(1,128)}', space=vmem, size = 0x12000, scoped, tag = 'internal scratch']
  #allocation2 [shape = 'bf16[18,18,128]{2,1,0:T(8,128)(2,1)}', space=vmem, size = 0x1b000, scoped, tag = 'scratch operand']
  %s0 = inlined_call_operand.vmem [shape: bf16[2,18,16,4], index: 0, kind: input, shape index: {}]
  %s1 = inlined_call_operand.vmem [shape: bf16[4,128], index: 1, kind: input, shape index: {}]
  %s2 = inlined_call_operand.vmem [shape: f32[1,128], index: 2, kind: input, shape index: {}]
  %s3 = inlined_call_operand.vmem [shape: f32[9,128], index: 3, kind: input, shape index: {}]
  %s4 = inlined_call_operand.vmem [shape: f32[1,128], index: 4, kind: input, shape index: {}]
  %s5 = inlined_call_operand.vmem [shape: bf16[128,128], index: 5, kind: input, shape index: {}]
  %s6 = inlined_call_operand.vmem [shape: f32[1,128], index: 6, kind: input, shape index: {}]
  %s7 = inlined_call_operand.vmem [shape: bf16[4,128], index: 7, kind: input, shape index: {}]
  %s8 = inlined_call_operand.vmem [shape: f32[1,128], index: 8, kind: input, shape index: {}]
  %s9 = inlined_call_operand.vmem [shape: f32[2,16,16,8], index: 9, kind: output, shape index: {}]
  %s10 = sld [smem:[#allocation0]]
  $region77: #{tpu_custom_call.1} parent=0
    _
  %s12 = ssub.s32 1, %s10
  %s13 = scalar_select 0, %s12, %s10
  loop: start=0, step=1, limit=4
  $region2: #{tpu_custom_call.1} parent=0 // loop_pre_header
    _
  $region3: #{tpu_custom_call.1} parent=0 // loop_header
    %s15 = sphi 0, %s19
    %p16 = scmp.ge.s32.totalorder %s15, 4
    %s22 = sphi 0, %s34
    %s23 = sphi 0, %s30
    %s24 = sphi 0, %s22
    %s25 = sphi 0, %s23
    %s26 = sphi 0, %s24
    %s27 = sphi 0, %s25
    %s37 = sphi 0, %s39
    %s40 = sphi 0, %s37
    %s41 = sphi 0, %s40
    %s57 = sphi 0, %s41
    %s61 = sphi 0, %s61
    %s63 = sphi 0, %s61
    %s64 = sphi 0, %s63
    %s78 = sphi 0, %s64
    %s82 = sphi 0, %s82
    %s84 = sphi 0, %s82
    %s85 = sphi 0, %s84
    %s99 = sphi 0, %s85
    %s103 = sphi 0, %s103
    %s105 = sphi 0, %s103
    %s106 = sphi 0, %s105
    %s120 = sphi 0, %s106
    %s124 = sphi 0, %s124
    %s126 = sphi 0, %s124
    %s127 = sphi 0, %s126
    %s141 = sphi 0, %s127
    %s145 = sphi 0, %s145
    %s147 = sphi 0, %s145
    %s148 = sphi 0, %s147
    %s162 = sphi 0, %s148
    %s166 = sphi 0, %s166
    %s168 = sphi 0, %s166
    %s169 = sphi 0, %s168
    %s183 = sphi 0, %s169
    %s187 = sphi 0, %s187
    %s189 = sphi 0, %s187
    %s190 = sphi 0, %s189
    %s204 = sphi 0, %s190
    %s208 = sphi 0, %s208
    %s210 = sphi 0, %s208
    %s211 = sphi 0, %s210
    %s225 = sphi 0, %s211
    %s233 = sphi 0, %s235
    %s236 = sphi 0, %s233
    %s237 = sphi 0, %s236
    %s253 = sphi 0, %s237
  $region4: #{tpu_custom_call.1} parent=0 // loop_header_branch
    %18 = sbr.rel (%p16) target = $region8
  $region5: #{tpu_custom_call.1} parent=0 // loop_body
    %s20 = ssub.s32 %s15, 1
    %s21 = ssub.s32 %s15, 2
    %s28 = sadd.s32 1, %s23
    %p29 = scmp.ge.s32.totalorder %s28, 1
    %s30 = scalar_select %p29, 0, %s28
    %s31 = sadd.s32 1, %s22
    %s32 = scalar_select %p29, %s31, %s22
    %p33 = scmp.ge.s32.totalorder %s32, 2
    %s34 = scalar_select %p33, 0, %s32
    %s35 = ssub.s32 %s22, %s34
    %p36 = scmp.eq.s32.totalorder %s35, 0
    %s38 = sadd.s32 %s37, 1
    %s39 = scalar_select %p36, %s37, %s38
    %p42 = pneg %p36
    %p43 = scmp.eq.s32.totalorder %s15, 1
    %p44 = por %p42, %p43
    %p45 = scmp.ne.s32.totalorder %s37, %s40
    %p46 = scmp.eq.s32.totalorder %s15, 0
    %p47 = por %p45, %p46
    %p48 = scmp.ne.s32.totalorder %s37, %s40
    %p49 = scmp.eq.s32.totalorder %s20, 1
    %p50 = por %p48, %p49
    %p51 = scmp.ne.s32.totalorder %s40, %s41
    %p52 = scmp.eq.s32.totalorder %s20, 0
    %p53 = por %p51, %p52
    %p54 = scmp.ne.s32.totalorder %s40, %s41
    %p55 = scmp.eq.s32.totalorder %s21, 1
    %p56 = por %p54, %p55
    %p58 = scmp.ne.s32.totalorder %s41, %s57
    %p59 = scmp.eq.s32.totalorder %s21, 0
    %p60 = por %p58, %p59
    %s62 = sadd.s32 %s61, 1
    %p65 = scmp.eq.s32.totalorder %s15, 1
    %p66 = scmp.ne.s32.totalorder %s61, %s63
    %p67 = scmp.eq.s32.totalorder %s15, 0
    %p68 = por %p66, %p67
    %p69 = scmp.ne.s32.totalorder %s61, %s63
    %p70 = scmp.eq.s32.totalorder %s20, 1
    %p71 = por %p69, %p70
    %p72 = scmp.ne.s32.totalorder %s63, %s64
    %p73 = scmp.eq.s32.totalorder %s20, 0
    %p74 = por %p72, %p73
    %p75 = scmp.ne.s32.totalorder %s63, %s64
    %p76 = scmp.eq.s32.totalorder %s21, 1
    %p77 = por %p75, %p76
    %p79 = scmp.ne.s32.totalorder %s64, %s78
    %p80 = scmp.eq.s32.totalorder %s21, 0
    %p81 = por %p79, %p80
    %s83 = sadd.s32 %s82, 1
    %p86 = scmp.eq.s32.totalorder %s15, 1
    %p87 = scmp.ne.s32.totalorder %s82, %s84
    %p88 = scmp.eq.s32.totalorder %s15, 0
    %p89 = por %p87, %p88
    %p90 = scmp.ne.s32.totalorder %s82, %s84
    %p91 = scmp.eq.s32.totalorder %s20, 1
    %p92 = por %p90, %p91
    %p93 = scmp.ne.s32.totalorder %s84, %s85
    %p94 = scmp.eq.s32.totalorder %s20, 0
    %p95 = por %p93, %p94
    %p96 = scmp.ne.s32.totalorder %s84, %s85
    %p97 = scmp.eq.s32.totalorder %s21, 1
    %p98 = por %p96, %p97
    %p100 = scmp.ne.s32.totalorder %s85, %s99
    %p101 = scmp.eq.s32.totalorder %s21, 0
    %p102 = por %p100, %p101
    %s104 = sadd.s32 %s103, 1
    %p107 = scmp.eq.s32.totalorder %s15, 1
    %p108 = scmp.ne.s32.totalorder %s103, %s105
    %p109 = scmp.eq.s32.totalorder %s15, 0
    %p110 = por %p108, %p109
    %p111 = scmp.ne.s32.totalorder %s103, %s105
    %p112 = scmp.eq.s32.totalorder %s20, 1
    %p113 = por %p111, %p112
    %p114 = scmp.ne.s32.totalorder %s105, %s106
    %p115 = scmp.eq.s32.totalorder %s20, 0
    %p116 = por %p114, %p115
    %p117 = scmp.ne.s32.totalorder %s105, %s106
    %p118 = scmp.eq.s32.totalorder %s21, 1
    %p119 = por %p117, %p118
    %p121 = scmp.ne.s32.totalorder %s106, %s120
    %p122 = scmp.eq.s32.totalorder %s21, 0
    %p123 = por %p121, %p122
    %s125 = sadd.s32 %s124, 1
    %p128 = scmp.eq.s32.totalorder %s15, 1
    %p129 = scmp.ne.s32.totalorder %s124, %s126
    %p130 = scmp.eq.s32.totalorder %s15, 0
    %p131 = por %p129, %p130
    %p132 = scmp.ne.s32.totalorder %s124, %s126
    %p133 = scmp.eq.s32.totalorder %s20, 1
    %p134 = por %p132, %p133
    %p135 = scmp.ne.s32.totalorder %s126, %s127
    %p136 = scmp.eq.s32.totalorder %s20, 0
    %p137 = por %p135, %p136
    %p138 = scmp.ne.s32.totalorder %s126, %s127
    %p139 = scmp.eq.s32.totalorder %s21, 1
    %p140 = por %p138, %p139
    %p142 = scmp.ne.s32.totalorder %s127, %s141
    %p143 = scmp.eq.s32.totalorder %s21, 0
    %p144 = por %p142, %p143
    %s146 = sadd.s32 %s145, 1
    %p149 = scmp.eq.s32.totalorder %s15, 1
    %p150 = scmp.ne.s32.totalorder %s145, %s147
    %p151 = scmp.eq.s32.totalorder %s15, 0
    %p152 = por %p150, %p151
    %p153 = scmp.ne.s32.totalorder %s145, %s147
    %p154 = scmp.eq.s32.totalorder %s20, 1
    %p155 = por %p153, %p154
    %p156 = scmp.ne.s32.totalorder %s147, %s148
    %p157 = scmp.eq.s32.totalorder %s20, 0
    %p158 = por %p156, %p157
    %p159 = scmp.ne.s32.totalorder %s147, %s148
    %p160 = scmp.eq.s32.totalorder %s21, 1
    %p161 = por %p159, %p160
    %p163 = scmp.ne.s32.totalorder %s148, %s162
    %p164 = scmp.eq.s32.totalorder %s21, 0
    %p165 = por %p163, %p164
    %s167 = sadd.s32 %s166, 1
    %p170 = scmp.eq.s32.totalorder %s15, 1
    %p171 = scmp.ne.s32.totalorder %s166, %s168
    %p172 = scmp.eq.s32.totalorder %s15, 0
    %p173 = por %p171, %p172
    %p174 = scmp.ne.s32.totalorder %s166, %s168
    %p175 = scmp.eq.s32.totalorder %s20, 1
    %p176 = por %p174, %p175
    %p177 = scmp.ne.s32.totalorder %s168, %s169
    %p178 = scmp.eq.s32.totalorder %s20, 0
    %p179 = por %p177, %p178
    %p180 = scmp.ne.s32.totalorder %s168, %s169
    %p181 = scmp.eq.s32.totalorder %s21, 1
    %p182 = por %p180, %p181
    %p184 = scmp.ne.s32.totalorder %s169, %s183
    %p185 = scmp.eq.s32.totalorder %s21, 0
    %p186 = por %p184, %p185
    %s188 = sadd.s32 %s187, 1
    %p191 = scmp.eq.s32.totalorder %s15, 1
    %p192 = scmp.ne.s32.totalorder %s187, %s189
    %p193 = scmp.eq.s32.totalorder %s15, 0
    %p194 = por %p192, %p193
    %p195 = scmp.ne.s32.totalorder %s187, %s189
    %p196 = scmp.eq.s32.totalorder %s20, 1
    %p197 = por %p195, %p196
    %p198 = scmp.ne.s32.totalorder %s189, %s190
    %p199 = scmp.eq.s32.totalorder %s20, 0
    %p200 = por %p198, %p199
    %p201 = scmp.ne.s32.totalorder %s189, %s190
    %p202 = scmp.eq.s32.totalorder %s21, 1
    %p203 = por %p201, %p202
    %p205 = scmp.ne.s32.totalorder %s190, %s204
    %p206 = scmp.eq.s32.totalorder %s21, 0
    %p207 = por %p205, %p206
    %s209 = sadd.s32 %s208, 1
    %p212 = scmp.eq.s32.totalorder %s15, 1
    %p213 = scmp.ne.s32.totalorder %s208, %s210
    %p214 = scmp.eq.s32.totalorder %s15, 0
    %p215 = por %p213, %p214
    %p216 = scmp.ne.s32.totalorder %s208, %s210
    %p217 = scmp.eq.s32.totalorder %s20, 1
    %p218 = por %p216, %p217
    %p219 = scmp.ne.s32.totalorder %s210, %s211
    %p220 = scmp.eq.s32.totalorder %s20, 0
    %p221 = por %p219, %p220
    %p222 = scmp.ne.s32.totalorder %s210, %s211
    %p223 = scmp.eq.s32.totalorder %s21, 1
    %p224 = por %p222, %p223
    %p226 = scmp.ne.s32.totalorder %s211, %s225
    %p227 = scmp.eq.s32.totalorder %s21, 0
    %p228 = por %p226, %p227
    %s229 = ssub.s32 %s22, %s34
    %s230 = ssub.s32 %s23, %s30
    %s231 = sor.u32 %s229, %s230
    %p232 = scmp.eq.s32.totalorder %s231, 0
    %s234 = sadd.s32 %s233, 1
    %s235 = scalar_select %p232, %s233, %s234
    %p238 = pneg %p232
    %p239 = scmp.eq.s32.totalorder %s15, 1
    %p240 = por %p238, %p239
    %p241 = scmp.ne.s32.totalorder %s233, %s236
    %p242 = scmp.eq.s32.totalorder %s15, 0
    %p243 = por %p241, %p242
    %p244 = scmp.ne.s32.totalorder %s233, %s236
    %p245 = scmp.eq.s32.totalorder %s20, 1
    %p246 = por %p244, %p245
    %p247 = scmp.ne.s32.totalorder %s236, %s237
    %p248 = scmp.eq.s32.totalorder %s20, 0
    %p249 = por %p247, %p248
    %p250 = scmp.ne.s32.totalorder %s236, %s237
    %p251 = scmp.eq.s32.totalorder %s21, 1
    %p252 = por %p250, %p251
    %p254 = scmp.ne.s32.totalorder %s237, %s253
    %p255 = scmp.eq.s32.totalorder %s21, 0
    %p256 = por %p254, %p255
    %p257 = scmp.le.s32.totalorder 1, %s15
    %p258 = scmp.lt.s32.totalorder %s15, 3
    %p259 = pnand %p257, %p258
    %p260 = pneg %p259
    // Predicated region
    $region9: #{tpu_custom_call.1} parent=5 // pred_check
      _
    $region10: #{tpu_custom_call.1} parent=5 // pred_check_branch
      %262 = sbr.rel (%p259) target = $region12
    $region11: #{tpu_custom_call.1} parent=5 // pred_region
      %s263 = ssub.s32 %s15, 1
      // Predicated region
      $region13: #{tpu_custom_call.1} parent=11 // pred_check
        %p264 = pneg %p74
      $region14: #{tpu_custom_call.1} parent=11 // pred_check_branch
        %266 = sbr.rel (%p264) target = $region16
      $region15: #{tpu_custom_call.1} parent=11 // pred_region
        _
      $region16: #{tpu_custom_call.1} parent=11 // pred_fallthru
        _
      // Predicated region
      $region17: #{tpu_custom_call.1} parent=11 // pred_check
        %p267 = pneg %p95
      $region18: #{tpu_custom_call.1} parent=11 // pred_check_branch
        %269 = sbr.rel (%p267) target = $region20
      $region19: #{tpu_custom_call.1} parent=11 // pred_region
        _
      $region20: #{tpu_custom_call.1} parent=11 // pred_fallthru
        _
      // Predicated region
      $region21: #{tpu_custom_call.1} parent=11 // pred_check
        %p270 = pneg %p116
      $region22: #{tpu_custom_call.1} parent=11 // pred_check_branch
        %272 = sbr.rel (%p270) target = $region24
      $region23: #{tpu_custom_call.1} parent=11 // pred_region
        _
      $region24: #{tpu_custom_call.1} parent=11 // pred_fallthru
        _
      // Predicated region
      $region25: #{tpu_custom_call.1} parent=11 // pred_check
        %p273 = pneg %p137
      $region26: #{tpu_custom_call.1} parent=11 // pred_check_branch
        %275 = sbr.rel (%p273) target = $region28
      $region27: #{tpu_custom_call.1} parent=11 // pred_region
        _
      $region28: #{tpu_custom_call.1} parent=11 // pred_fallthru
        _
      // Predicated region
      $region29: #{tpu_custom_call.1} parent=11 // pred_check
        %p276 = pneg %p158
      $region30: #{tpu_custom_call.1} parent=11 // pred_check_branch
        %278 = sbr.rel (%p276) target = $region32
      $region31: #{tpu_custom_call.1} parent=11 // pred_region
        _
      $region32: #{tpu_custom_call.1} parent=11 // pred_fallthru
        _
      // Predicated region
      $region33: #{tpu_custom_call.1} parent=11 // pred_check
        %p279 = pneg %p179
      $region34: #{tpu_custom_call.1} parent=11 // pred_check_branch
        %281 = sbr.rel (%p279) target = $region36
      $region35: #{tpu_custom_call.1} parent=11 // pred_region
        _
      $region36: #{tpu_custom_call.1} parent=11 // pred_fallthru
        _
      // Predicated region
      $region37: #{tpu_custom_call.1} parent=11 // pred_check
        %p282 = pneg %p200
      $region38: #{tpu_custom_call.1} parent=11 // pred_check_branch
        %284 = sbr.rel (%p282) target = $region40
      $region39: #{tpu_custom_call.1} parent=11 // pred_region
        _
      $region40: #{tpu_custom_call.1} parent=11 // pred_fallthru
        _
      // Predicated region
      $region41: #{tpu_custom_call.1} parent=11 // pred_check
        %p285 = pneg %p221
      $region42: #{tpu_custom_call.1} parent=11 // pred_check_branch
        %287 = sbr.rel (%p285) target = $region44
      $region43: #{tpu_custom_call.1} parent=11 // pred_region
        _
      $region44: #{tpu_custom_call.1} parent=11 // pred_fallthru
        _
    $region12: #{tpu_custom_call.1} parent=5 // pred_fallthru
      _
    %p288 = scmp.lt.s32.totalorder %s15, 2
    // Predicated region
    $region45: #{tpu_custom_call.1} parent=5 // pred_check
      %p289 = pneg %p288
    $region46: #{tpu_custom_call.1} parent=5 // pred_check_branch
      %291 = sbr.rel (%p289) target = $region48
    $region47: #{tpu_custom_call.1} parent=5 // pred_region
      // Predicated region
      $region49: #{tpu_custom_call.1} parent=47 // pred_check
        %p292 = pneg %p47
      $region50: #{tpu_custom_call.1} parent=47 // pred_check_branch
        %294 = sbr.rel (%p292) target = $region52
      $region51: #{tpu_custom_call.1} parent=47 // pred_region
        %p295 = scmp.lt.s32.totalorder %s22, 1
        %s296 = scalar_select %p295, %s22, 1
        %s297 = smul.addr %s296, 36
        %s298 = smul.addr %s297, 4
        %s299 = scalar_lea.vmem %s0, %s298
      $region52: #{tpu_custom_call.1} parent=47 // pred_fallthru
        _
    $region48: #{tpu_custom_call.1} parent=5 // pred_fallthru
      _
    %p300 = scmp.le.s32.totalorder 1, %s15
    %p301 = scmp.lt.s32.totalorder %s15, 3
    %p302 = pnand %p300, %p301
    %p303 = pneg %p302
    // Predicated region
    $region53: #{tpu_custom_call.1} parent=5 // pred_check
      _
    $region54: #{tpu_custom_call.1} parent=5 // pred_check_branch
      %305 = sbr.rel (%p302) target = $region56
    $region55: #{tpu_custom_call.1} parent=5 // pred_region
      %s306 = ssub.s32 %s15, 1
      %p307 = scmp.lt.s32.totalorder %s24, 1
      %s308 = scalar_select %p307, %s24, 1
      %s309 = smul.addr %s308, 36
      %s310 = smul.addr %s309, 4
      %s311 = scalar_lea.vmem %s0, %s310
      %p312 = pneg %p53
      %p313 = pneg %p50
      %p314 = pneg %p74
      %p315 = pneg %p71
      %p316 = pneg %p95
      %p317 = pneg %p92
      %p318 = pneg %p116
      %p319 = pneg %p113
      %p320 = pneg %p137
      %p321 = pneg %p134
      %p322 = pneg %p158
      %p323 = pneg %p155
      %p324 = pneg %p179
      %p325 = pneg %p176
      %p326 = pneg %p200
      %p327 = pneg %p197
      %p328 = pneg %p221
      %p329 = pneg %p218
      %p330 = pneg %p249
      %p331 = pneg %p246
      %s332 = smul.u32 16, %s25
      %p333 = scmp.lt.s32.totalorder %s24, 1
      %s334 = scalar_select %p333, %s24, 1
      %p335 = scmp.lt.s32.totalorder %s332, 15
      %s336 = scalar_select %p335, %s332, 15
      %s337 = smul.addr %s336, 2
      %s338 = smul.addr %s334, 32
      %s339 = sadd.s32 %s337, %s338
      %s340 = smul.addr %s339, 8
      %s341 = scalar_lea.vmem %s9, %s340
      %p342 = scmp.lt.s32.totalorder %s24, 1
      %s343 = scalar_select %p342, %s24, 1
      %s344 = smul.addr %s343, 36
      %s345 = smul.addr %s344, 4
      %s346 = scalar_lea.vmem %s0, %s345
      %s347 = smul.u32 16, %s25
      %p348 = scmp.lt.s32.totalorder %s24, 1
      %s349 = scalar_select %p348, %s24, 1
      %p350 = scmp.lt.s32.totalorder %s347, 15
      %s351 = scalar_select %p350, %s347, 15
      %s352 = smul.addr %s351, 2
      %s353 = smul.addr %s349, 32
      %s354 = sadd.s32 %s352, %s353
      %s355 = smul.addr %s354, 8
      %s356 = scalar_lea.vmem %s9, %s355
      %s357 = smul.u32 16, %s25
      %s359 = smul.u32 %s25, 16
      %s360 = smul.u32 %s359, 2
      %s361 = smul.addr %s360, 4
      %s362 = scalar_lea.vmem %s346, %s361
      %v363 = vld [vmem:[%s362] sm:$0xf]
      %v364 = vld [vmem:[%s362 + $0x4] sm:$0xf]
      %v365 = vld [vmem:[%s362 + $0x8] sm:$0xf]
      %v366 = vld [vmem:[%s362 + $0xc] sm:$0xf]
      %v367 = vld [vmem:[%s362 + $0x10] sm:$0xf]
      %v368 = vld [vmem:[%s362 + $0x14] sm:$0xf]
      %v369 = vld [vmem:[%s362 + $0x18] sm:$0xf]
      %v370 = vld [vmem:[%s362 + $0x1c] sm:$0xf]
      %v371 = vld [vmem:[%s362 + $0x20] sm:$0xf]
      %v372 = vld [vmem:[%s362 + $0x24] sm:$0xf]
      %v373 = vld [vmem:[%s362 + $0x28] sm:$0xf]
      %v374 = vld [vmem:[%s362 + $0x2c] sm:$0xf]
      %v375 = vld [vmem:[%s362 + $0x30] sm:$0xf]
      %v376 = vld [vmem:[%s362 + $0x34] sm:$0xf]
      %v377 = vld [vmem:[%s362 + $0x38] sm:$0xf]
      %v378 = vld [vmem:[%s362 + $0x3c] sm:$0xf]
      %v379 = vld [vmem:[%s362 + $0x40] sm:$0xf]
      %v380 = vld [vmem:[%s362 + $0x44] sm:$0xf]
      %v381 = vld [vmem:[%s362 + $0x48] sm:$0xf]
      %v382 = vld [vmem:[%s362 + $0x4c] sm:$0xf]
      %v383 = vld [vmem:[%s362 + $0x50] sm:$0xf]
      %v384 = vld [vmem:[%s362 + $0x54] sm:$0xf]
      %v385 = vld [vmem:[%s362 + $0x58] sm:$0xf]
      %v386 = vld [vmem:[%s362 + $0x5c] sm:$0xf]
      %v387 = vld [vmem:[%s362 + $0x60] sm:$0xf]
      %v388 = vld [vmem:[%s362 + $0x64] sm:$0xf]
      %v389 = vld [vmem:[%s362 + $0x68] sm:$0xf]
      %v390 = vld [vmem:[%s362 + $0x6c] sm:$0xf]
      %v391 = vld [vmem:[%s362 + $0x70] sm:$0xf]
      %v392 = vld [vmem:[%s362 + $0x74] sm:$0xf]
      %v393 = vld [vmem:[%s362 + $0x78] sm:$0xf]
      %v394 = vld [vmem:[%s362 + $0x7c] sm:$0xf]
      %v395 = vld [vmem:[%s362 + $0x80] sm:$0xf]
      %v396 = vld [vmem:[%s362 + $0x84] sm:$0xf]
      %v397 = vld [vmem:[%s362 + $0x88] sm:$0xf]
      %v398 = vld [vmem:[%s362 + $0x8c] sm:$0xf]
      %v399 = vunpack.c.l.bf16 %v363
      %v400 = vunpack.c.l.bf16 %v364
      %v401 = vunpack.c.l.bf16 %v365
      %v402 = vunpack.c.l.bf16 %v366
      %v403 = vunpack.c.l.bf16 %v367
      %v404 = vunpack.c.l.bf16 %v368
      %v405 = vunpack.c.l.bf16 %v369
      %v406 = vunpack.c.l.bf16 %v370
      %v407 = vunpack.c.l.bf16 %v371
      %v408 = vunpack.c.l.bf16 %v372
      %v409 = vunpack.c.l.bf16 %v373
      %v410 = vunpack.c.l.bf16 %v374
      %v411 = vunpack.c.l.bf16 %v375
      %v412 = vunpack.c.l.bf16 %v376
      %v413 = vunpack.c.l.bf16 %v377
      %v414 = vunpack.c.l.bf16 %v378
      %v415 = vunpack.c.l.bf16 %v379
      %v416 = vunpack.c.l.bf16 %v380
      %v417 = vunpack.c.l.bf16 %v381
      %v418 = vunpack.c.l.bf16 %v382
      %v419 = vunpack.c.l.bf16 %v383
      %v420 = vunpack.c.l.bf16 %v384
      %v421 = vunpack.c.l.bf16 %v385
      %v422 = vunpack.c.l.bf16 %v386
      %v423 = vunpack.c.l.bf16 %v387
      %v424 = vunpack.c.l.bf16 %v388
      %v425 = vunpack.c.l.bf16 %v389
      %v426 = vunpack.c.l.bf16 %v390
      %v427 = vunpack.c.l.bf16 %v391
      %v428 = vunpack.c.l.bf16 %v392
      %v429 = vunpack.c.l.bf16 %v393
      %v430 = vunpack.c.l.bf16 %v394
      %v431 = vunpack.c.l.bf16 %v395
      %v432 = vunpack.c.l.bf16 %v396
      %v433 = vunpack.c.l.bf16 %v397
      %v434 = vunpack.c.l.bf16 %v398
      %v435 = vld [vmem:[%s1] sm:$0x1]
      %v436 = vunpack.c.l.bf16 %v435
      %438 = vset.pattern.permute.xlu0 0
      %439 = vperm.xlu0 %438, %v399
      %v440 = vpop.permute.xlu0 %439
      %443 = vset.pattern.permute.xlu0 0
      %444 = vperm.xlu0 %443, %v400
      %v445 = vpop.permute.xlu0 %444
      %448 = vset.pattern.permute.xlu0 0
      %449 = vperm.xlu0 %448, %v401
      %v450 = vpop.permute.xlu0 %449
      %453 = vset.pattern.permute.xlu0 0
      %454 = vperm.xlu0 %453, %v402
      %v455 = vpop.permute.xlu0 %454
      %458 = vset.pattern.permute.xlu0 0
      %459 = vperm.xlu0 %458, %v403
      %v460 = vpop.permute.xlu0 %459
      %463 = vset.pattern.permute.xlu0 0
      %464 = vperm.xlu0 %463, %v404
      %v465 = vpop.permute.xlu0 %464
      %468 = vset.pattern.permute.xlu0 0
      %469 = vperm.xlu0 %468, %v405
      %v470 = vpop.permute.xlu0 %469
      %473 = vset.pattern.permute.xlu0 0
      %474 = vperm.xlu0 %473, %v406
      %v475 = vpop.permute.xlu0 %474
      %478 = vset.pattern.permute.xlu0 0
      %479 = vperm.xlu0 %478, %v407
      %v480 = vpop.permute.xlu0 %479
      %483 = vset.pattern.permute.xlu0 0
      %484 = vperm.xlu0 %483, %v408
      %v485 = vpop.permute.xlu0 %484
      %488 = vset.pattern.permute.xlu0 0
      %489 = vperm.xlu0 %488, %v409
      %v490 = vpop.permute.xlu0 %489
      %493 = vset.pattern.permute.xlu0 0
      %494 = vperm.xlu0 %493, %v410
      %v495 = vpop.permute.xlu0 %494
      %498 = vset.pattern.permute.xlu0 0
      %499 = vperm.xlu0 %498, %v411
      %v500 = vpop.permute.xlu0 %499
      %503 = vset.pattern.permute.xlu0 0
      %504 = vperm.xlu0 %503, %v412
      %v505 = vpop.permute.xlu0 %504
      %508 = vset.pattern.permute.xlu0 0
      %509 = vperm.xlu0 %508, %v413
      %v510 = vpop.permute.xlu0 %509
      %513 = vset.pattern.permute.xlu0 0
      %514 = vperm.xlu0 %513, %v414
      %v515 = vpop.permute.xlu0 %514
      %518 = vset.pattern.permute.xlu0 0
      %519 = vperm.xlu0 %518, %v415
      %v520 = vpop.permute.xlu0 %519
      %523 = vset.pattern.permute.xlu0 0
      %524 = vperm.xlu0 %523, %v416
      %v525 = vpop.permute.xlu0 %524
      %528 = vset.pattern.permute.xlu0 0
      %529 = vperm.xlu0 %528, %v417
      %v530 = vpop.permute.xlu0 %529
      %533 = vset.pattern.permute.xlu0 0
      %534 = vperm.xlu0 %533, %v418
      %v535 = vpop.permute.xlu0 %534
      %538 = vset.pattern.permute.xlu0 0
      %539 = vperm.xlu0 %538, %v419
      %v540 = vpop.permute.xlu0 %539
      %543 = vset.pattern.permute.xlu0 0
      %544 = vperm.xlu0 %543, %v420
      %v545 = vpop.permute.xlu0 %544
      %548 = vset.pattern.permute.xlu0 0
      %549 = vperm.xlu0 %548, %v421
      %v550 = vpop.permute.xlu0 %549
      %553 = vset.pattern.permute.xlu0 0
      %554 = vperm.xlu0 %553, %v422
      %v555 = vpop.permute.xlu0 %554
      %558 = vset.pattern.permute.xlu0 0
      %559 = vperm.xlu0 %558, %v423
      %v560 = vpop.permute.xlu0 %559
      %563 = vset.pattern.permute.xlu0 0
      %564 = vperm.xlu0 %563, %v424
      %v565 = vpop.permute.xlu0 %564
      %568 = vset.pattern.permute.xlu0 0
      %569 = vperm.xlu0 %568, %v425
      %v570 = vpop.permute.xlu0 %569
      %573 = vset.pattern.permute.xlu0 0
      %574 = vperm.xlu0 %573, %v426
      %v575 = vpop.permute.xlu0 %574
      %578 = vset.pattern.permute.xlu0 0
      %579 = vperm.xlu0 %578, %v427
      %v580 = vpop.permute.xlu0 %579
      %583 = vset.pattern.permute.xlu0 0
      %584 = vperm.xlu0 %583, %v428
      %v585 = vpop.permute.xlu0 %584
      %588 = vset.pattern.permute.xlu0 0
      %589 = vperm.xlu0 %588, %v429
      %v590 = vpop.permute.xlu0 %589
      %593 = vset.pattern.permute.xlu0 0
      %594 = vperm.xlu0 %593, %v430
      %v595 = vpop.permute.xlu0 %594
      %598 = vset.pattern.permute.xlu0 0
      %599 = vperm.xlu0 %598, %v431
      %v600 = vpop.permute.xlu0 %599
      %603 = vset.pattern.permute.xlu0 0
      %604 = vperm.xlu0 %603, %v432
      %v605 = vpop.permute.xlu0 %604
      %608 = vset.pattern.permute.xlu0 0
      %609 = vperm.xlu0 %608, %v433
      %v610 = vpop.permute.xlu0 %609
      %613 = vset.pattern.permute.xlu0 0
      %614 = vperm.xlu0 %613, %v434
      %v615 = vpop.permute.xlu0 %614
      %v617 = vlaneseq
      %v618 = vshrl.u32 %v617, 7
      %v619 = vsub.s32 0, %v618
      %v620 = vrot.slane %v436, %v619
      %v621 = vmul.f32 %v440, %v620
      %v622 = vmul.f32 %v445, %v620
      %v623 = vmul.f32 %v450, %v620
      %v624 = vmul.f32 %v455, %v620
      %v625 = vmul.f32 %v460, %v620
      %v626 = vmul.f32 %v465, %v620
      %v627 = vmul.f32 %v470, %v620
      %v628 = vmul.f32 %v475, %v620
      %v629 = vmul.f32 %v480, %v620
      %v630 = vmul.f32 %v485, %v620
      %v631 = vmul.f32 %v490, %v620
      %v632 = vmul.f32 %v495, %v620
      %v633 = vmul.f32 %v500, %v620
      %v634 = vmul.f32 %v505, %v620
      %v635 = vmul.f32 %v510, %v620
      %v636 = vmul.f32 %v515, %v620
      %v637 = vmul.f32 %v520, %v620
      %v638 = vmul.f32 %v525, %v620
      %v639 = vmul.f32 %v530, %v620
      %v640 = vmul.f32 %v535, %v620
      %v641 = vmul.f32 %v540, %v620
      %v642 = vmul.f32 %v545, %v620
      %v643 = vmul.f32 %v550, %v620
      %v644 = vmul.f32 %v555, %v620
      %v645 = vmul.f32 %v560, %v620
      %v646 = vmul.f32 %v565, %v620
      %v647 = vmul.f32 %v570, %v620
      %v648 = vmul.f32 %v575, %v620
      %v649 = vmul.f32 %v580, %v620
      %v650 = vmul.f32 %v585, %v620
      %v651 = vmul.f32 %v590, %v620
      %v652 = vmul.f32 %v595, %v620
      %v653 = vmul.f32 %v600, %v620
      %v654 = vmul.f32 %v605, %v620
      %v655 = vmul.f32 %v610, %v620
      %v656 = vmul.f32 %v615, %v620
      %v657 = vadd.f32 %v621, 0.0
      %v658 = vadd.f32 %v622, 0.0
      %v659 = vadd.f32 %v623, 0.0
      %v660 = vadd.f32 %v624, 0.0
      %v661 = vadd.f32 %v625, 0.0
      %v662 = vadd.f32 %v626, 0.0
      %v663 = vadd.f32 %v627, 0.0
      %v664 = vadd.f32 %v628, 0.0
      %v665 = vadd.f32 %v629, 0.0
      %v666 = vadd.f32 %v630, 0.0
      %v667 = vadd.f32 %v631, 0.0
      %v668 = vadd.f32 %v632, 0.0
      %v669 = vadd.f32 %v633, 0.0
      %v670 = vadd.f32 %v634, 0.0
      %v671 = vadd.f32 %v635, 0.0
      %v672 = vadd.f32 %v636, 0.0
      %v673 = vadd.f32 %v637, 0.0
      %v674 = vadd.f32 %v638, 0.0
      %v675 = vadd.f32 %v639, 0.0
      %v676 = vadd.f32 %v640, 0.0
      %v677 = vadd.f32 %v641, 0.0
      %v678 = vadd.f32 %v642, 0.0
      %v679 = vadd.f32 %v643, 0.0
      %v680 = vadd.f32 %v644, 0.0
      %v681 = vadd.f32 %v645, 0.0
      %v682 = vadd.f32 %v646, 0.0
      %v683 = vadd.f32 %v647, 0.0
      %v684 = vadd.f32 %v648, 0.0
      %v685 = vadd.f32 %v649, 0.0
      %v686 = vadd.f32 %v650, 0.0
      %v687 = vadd.f32 %v651, 0.0
      %v688 = vadd.f32 %v652, 0.0
      %v689 = vadd.f32 %v653, 0.0
      %v690 = vadd.f32 %v654, 0.0
      %v691 = vadd.f32 %v655, 0.0
      %v692 = vadd.f32 %v656, 0.0
      %693 = vset.pattern.permute.xlu0 1
      %694 = vperm.xlu0 %693, %v399
      %v695 = vpop.permute.xlu0 %694
      %697 = vset.pattern.permute.xlu0 1
      %698 = vperm.xlu0 %697, %v400
      %v699 = vpop.permute.xlu0 %698
      %701 = vset.pattern.permute.xlu0 1
      %702 = vperm.xlu0 %701, %v401
      %v703 = vpop.permute.xlu0 %702
      %705 = vset.pattern.permute.xlu0 1
      %706 = vperm.xlu0 %705, %v402
      %v707 = vpop.permute.xlu0 %706
      %709 = vset.pattern.permute.xlu0 1
      %710 = vperm.xlu0 %709, %v403
      %v711 = vpop.permute.xlu0 %710
      %713 = vset.pattern.permute.xlu0 1
      %714 = vperm.xlu0 %713, %v404
      %v715 = vpop.permute.xlu0 %714
      %717 = vset.pattern.permute.xlu0 1
      %718 = vperm.xlu0 %717, %v405
      %v719 = vpop.permute.xlu0 %718
      %721 = vset.pattern.permute.xlu0 1
      %722 = vperm.xlu0 %721, %v406
      %v723 = vpop.permute.xlu0 %722
      %725 = vset.pattern.permute.xlu0 1
      %726 = vperm.xlu0 %725, %v407
      %v727 = vpop.permute.xlu0 %726
      %729 = vset.pattern.permute.xlu0 1
      %730 = vperm.xlu0 %729, %v408
      %v731 = vpop.permute.xlu0 %730
      %733 = vset.pattern.permute.xlu0 1
      %734 = vperm.xlu0 %733, %v409
      %v735 = vpop.permute.xlu0 %734
      %737 = vset.pattern.permute.xlu0 1
      %738 = vperm.xlu0 %737, %v410
      %v739 = vpop.permute.xlu0 %738
      %741 = vset.pattern.permute.xlu0 1
      %742 = vperm.xlu0 %741, %v411
      %v743 = vpop.permute.xlu0 %742
      %745 = vset.pattern.permute.xlu0 1
      %746 = vperm.xlu0 %745, %v412
      %v747 = vpop.permute.xlu0 %746
      %749 = vset.pattern.permute.xlu0 1
      %750 = vperm.xlu0 %749, %v413
      %v751 = vpop.permute.xlu0 %750
      %753 = vset.pattern.permute.xlu0 1
      %754 = vperm.xlu0 %753, %v414
      %v755 = vpop.permute.xlu0 %754
      %757 = vset.pattern.permute.xlu0 1
      %758 = vperm.xlu0 %757, %v415
      %v759 = vpop.permute.xlu0 %758
      %761 = vset.pattern.permute.xlu0 1
      %762 = vperm.xlu0 %761, %v416
      %v763 = vpop.permute.xlu0 %762
      %765 = vset.pattern.permute.xlu0 1
      %766 = vperm.xlu0 %765, %v417
      %v767 = vpop.permute.xlu0 %766
      %769 = vset.pattern.permute.xlu0 1
      %770 = vperm.xlu0 %769, %v418
      %v771 = vpop.permute.xlu0 %770
      %773 = vset.pattern.permute.xlu0 1
      %774 = vperm.xlu0 %773, %v419
      %v775 = vpop.permute.xlu0 %774
      %777 = vset.pattern.permute.xlu0 1
      %778 = vperm.xlu0 %777, %v420
      %v779 = vpop.permute.xlu0 %778
      %781 = vset.pattern.permute.xlu0 1
      %782 = vperm.xlu0 %781, %v421
      %v783 = vpop.permute.xlu0 %782
      %785 = vset.pattern.permute.xlu0 1
      %786 = vperm.xlu0 %785, %v422
      %v787 = vpop.permute.xlu0 %786
      %789 = vset.pattern.permute.xlu0 1
      %790 = vperm.xlu0 %789, %v423
      %v791 = vpop.permute.xlu0 %790
      %793 = vset.pattern.permute.xlu0 1
      %794 = vperm.xlu0 %793, %v424
      %v795 = vpop.permute.xlu0 %794
      %797 = vset.pattern.permute.xlu0 1
      %798 = vperm.xlu0 %797, %v425
      %v799 = vpop.permute.xlu0 %798
      %801 = vset.pattern.permute.xlu0 1
      %802 = vperm.xlu0 %801, %v426
      %v803 = vpop.permute.xlu0 %802
      %805 = vset.pattern.permute.xlu0 1
      %806 = vperm.xlu0 %805, %v427
      %v807 = vpop.permute.xlu0 %806
      %809 = vset.pattern.permute.xlu0 1
      %810 = vperm.xlu0 %809, %v428
      %v811 = vpop.permute.xlu0 %810
      %813 = vset.pattern.permute.xlu0 1
      %814 = vperm.xlu0 %813, %v429
      %v815 = vpop.permute.xlu0 %814
      %817 = vset.pattern.permute.xlu0 1
      %818 = vperm.xlu0 %817, %v430
      %v819 = vpop.permute.xlu0 %818
      %821 = vset.pattern.permute.xlu0 1
      %822 = vperm.xlu0 %821, %v431
      %v823 = vpop.permute.xlu0 %822
      %825 = vset.pattern.permute.xlu0 1
      %826 = vperm.xlu0 %825, %v432
      %v827 = vpop.permute.xlu0 %826
      %829 = vset.pattern.permute.xlu0 1
      %830 = vperm.xlu0 %829, %v433
      %v831 = vpop.permute.xlu0 %830
      %833 = vset.pattern.permute.xlu0 1
      %834 = vperm.xlu0 %833, %v434
      %v835 = vpop.permute.xlu0 %834
      %v837 = vlaneseq
      %v838 = vshrl.u32 %v837, 7
      %v839 = vsub.s32 1, %v838
      %v840 = vrot.slane %v436, %v839
      %v841 = vmul.f32 %v695, %v840
      %v842 = vmul.f32 %v699, %v840
      %v843 = vmul.f32 %v703, %v840
      %v844 = vmul.f32 %v707, %v840
      %v845 = vmul.f32 %v711, %v840
      %v846 = vmul.f32 %v715, %v840
      %v847 = vmul.f32 %v719, %v840
      %v848 = vmul.f32 %v723, %v840
      %v849 = vmul.f32 %v727, %v840
      %v850 = vmul.f32 %v731, %v840
      %v851 = vmul.f32 %v735, %v840
      %v852 = vmul.f32 %v739, %v840
      %v853 = vmul.f32 %v743, %v840
      %v854 = vmul.f32 %v747, %v840
      %v855 = vmul.f32 %v751, %v840
      %v856 = vmul.f32 %v755, %v840
      %v857 = vmul.f32 %v759, %v840
      %v858 = vmul.f32 %v763, %v840
      %v859 = vmul.f32 %v767, %v840
      %v860 = vmul.f32 %v771, %v840
      %v861 = vmul.f32 %v775, %v840
      %v862 = vmul.f32 %v779, %v840
      %v863 = vmul.f32 %v783, %v840
      %v864 = vmul.f32 %v787, %v840
      %v865 = vmul.f32 %v791, %v840
      %v866 = vmul.f32 %v795, %v840
      %v867 = vmul.f32 %v799, %v840
      %v868 = vmul.f32 %v803, %v840
      %v869 = vmul.f32 %v807, %v840
      %v870 = vmul.f32 %v811, %v840
      %v871 = vmul.f32 %v815, %v840
      %v872 = vmul.f32 %v819, %v840
      %v873 = vmul.f32 %v823, %v840
      %v874 = vmul.f32 %v827, %v840
      %v875 = vmul.f32 %v831, %v840
      %v876 = vmul.f32 %v835, %v840
      %v877 = vadd.f32 %v657, %v841
      %v878 = vadd.f32 %v658, %v842
      %v879 = vadd.f32 %v659, %v843
      %v880 = vadd.f32 %v660, %v844
      %v881 = vadd.f32 %v661, %v845
      %v882 = vadd.f32 %v662, %v846
      %v883 = vadd.f32 %v663, %v847
      %v884 = vadd.f32 %v664, %v848
      %v885 = vadd.f32 %v665, %v849
      %v886 = vadd.f32 %v666, %v850
      %v887 = vadd.f32 %v667, %v851
      %v888 = vadd.f32 %v668, %v852
      %v889 = vadd.f32 %v669, %v853
      %v890 = vadd.f32 %v670, %v854
      %v891 = vadd.f32 %v671, %v855
      %v892 = vadd.f32 %v672, %v856
      %v893 = vadd.f32 %v673, %v857
      %v894 = vadd.f32 %v674, %v858
      %v895 = vadd.f32 %v675, %v859
      %v896 = vadd.f32 %v676, %v860
      %v897 = vadd.f32 %v677, %v861
      %v898 = vadd.f32 %v678, %v862
      %v899 = vadd.f32 %v679, %v863
      %v900 = vadd.f32 %v680, %v864
      %v901 = vadd.f32 %v681, %v865
      %v902 = vadd.f32 %v682, %v866
      %v903 = vadd.f32 %v683, %v867
      %v904 = vadd.f32 %v684, %v868
      %v905 = vadd.f32 %v685, %v869
      %v906 = vadd.f32 %v686, %v870
      %v907 = vadd.f32 %v687, %v871
      %v908 = vadd.f32 %v688, %v872
      %v909 = vadd.f32 %v689, %v873
      %v910 = vadd.f32 %v690, %v874
      %v911 = vadd.f32 %v691, %v875
      %v912 = vadd.f32 %v692, %v876
      %v913 = vld [vmem:[%s1] sm:$0x2]
      %v914 = vunpack.c.l.bf16 %v913
      %915 = vset.pattern.permute.xlu0 2
      %916 = vperm.xlu0 %915, %v399
      %v917 = vpop.permute.xlu0 %916
      %919 = vset.pattern.permute.xlu0 2
      %920 = vperm.xlu0 %919, %v400
      %v921 = vpop.permute.xlu0 %920
      %923 = vset.pattern.permute.xlu0 2
      %924 = vperm.xlu0 %923, %v401
      %v925 = vpop.permute.xlu0 %924
      %927 = vset.pattern.permute.xlu0 2
      %928 = vperm.xlu0 %927, %v402
      %v929 = vpop.permute.xlu0 %928
      %931 = vset.pattern.permute.xlu0 2
      %932 = vperm.xlu0 %931, %v403
      %v933 = vpop.permute.xlu0 %932
      %935 = vset.pattern.permute.xlu0 2
      %936 = vperm.xlu0 %935, %v404
      %v937 = vpop.permute.xlu0 %936
      %939 = vset.pattern.permute.xlu0 2
      %940 = vperm.xlu0 %939, %v405
      %v941 = vpop.permute.xlu0 %940
      %943 = vset.pattern.permute.xlu0 2
      %944 = vperm.xlu0 %943, %v406
      %v945 = vpop.permute.xlu0 %944
      %947 = vset.pattern.permute.xlu0 2
      %948 = vperm.xlu0 %947, %v407
      %v949 = vpop.permute.xlu0 %948
      %951 = vset.pattern.permute.xlu0 2
      %952 = vperm.xlu0 %951, %v408
      %v953 = vpop.permute.xlu0 %952
      %955 = vset.pattern.permute.xlu0 2
      %956 = vperm.xlu0 %955, %v409
      %v957 = vpop.permute.xlu0 %956
      %959 = vset.pattern.permute.xlu0 2
      %960 = vperm.xlu0 %959, %v410
      %v961 = vpop.permute.xlu0 %960
      %963 = vset.pattern.permute.xlu0 2
      %964 = vperm.xlu0 %963, %v411
      %v965 = vpop.permute.xlu0 %964
      %967 = vset.pattern.permute.xlu0 2
      %968 = vperm.xlu0 %967, %v412
      %v969 = vpop.permute.xlu0 %968
      %971 = vset.pattern.permute.xlu0 2
      %972 = vperm.xlu0 %971, %v413
      %v973 = vpop.permute.xlu0 %972
      %975 = vset.pattern.permute.xlu0 2
      %976 = vperm.xlu0 %975, %v414
      %v977 = vpop.permute.xlu0 %976
      %979 = vset.pattern.permute.xlu0 2
      %980 = vperm.xlu0 %979, %v415
      %v981 = vpop.permute.xlu0 %980
      %983 = vset.pattern.permute.xlu0 2
      %984 = vperm.xlu0 %983, %v416
      %v985 = vpop.permute.xlu0 %984
      %987 = vset.pattern.permute.xlu0 2
      %988 = vperm.xlu0 %987, %v417
      %v989 = vpop.permute.xlu0 %988
      %991 = vset.pattern.permute.xlu0 2
      %992 = vperm.xlu0 %991, %v418
      %v993 = vpop.permute.xlu0 %992
      %995 = vset.pattern.permute.xlu0 2
      %996 = vperm.xlu0 %995, %v419
      %v997 = vpop.permute.xlu0 %996
      %999 = vset.pattern.permute.xlu0 2
      %1000 = vperm.xlu0 %999, %v420
      %v1001 = vpop.permute.xlu0 %1000
      %1003 = vset.pattern.permute.xlu0 2
      %1004 = vperm.xlu0 %1003, %v421
      %v1005 = vpop.permute.xlu0 %1004
      %1007 = vset.pattern.permute.xlu0 2
      %1008 = vperm.xlu0 %1007, %v422
      %v1009 = vpop.permute.xlu0 %1008
      %1011 = vset.pattern.permute.xlu0 2
      %1012 = vperm.xlu0 %1011, %v423
      %v1013 = vpop.permute.xlu0 %1012
      %1015 = vset.pattern.permute.xlu0 2
      %1016 = vperm.xlu0 %1015, %v424
      %v1017 = vpop.permute.xlu0 %1016
      %1019 = vset.pattern.permute.xlu0 2
      %1020 = vperm.xlu0 %1019, %v425
      %v1021 = vpop.permute.xlu0 %1020
      %1023 = vset.pattern.permute.xlu0 2
      %1024 = vperm.xlu0 %1023, %v426
      %v1025 = vpop.permute.xlu0 %1024
      %1027 = vset.pattern.permute.xlu0 2
      %1028 = vperm.xlu0 %1027, %v427
      %v1029 = vpop.permute.xlu0 %1028
      %1031 = vset.pattern.permute.xlu0 2
      %1032 = vperm.xlu0 %1031, %v428
      %v1033 = vpop.permute.xlu0 %1032
      %1035 = vset.pattern.permute.xlu0 2
      %1036 = vperm.xlu0 %1035, %v429
      %v1037 = vpop.permute.xlu0 %1036
      %1039 = vset.pattern.permute.xlu0 2
      %1040 = vperm.xlu0 %1039, %v430
      %v1041 = vpop.permute.xlu0 %1040
      %1043 = vset.pattern.permute.xlu0 2
      %1044 = vperm.xlu0 %1043, %v431
      %v1045 = vpop.permute.xlu0 %1044
      %1047 = vset.pattern.permute.xlu0 2
      %1048 = vperm.xlu0 %1047, %v432
      %v1049 = vpop.permute.xlu0 %1048
      %1051 = vset.pattern.permute.xlu0 2
      %1052 = vperm.xlu0 %1051, %v433
      %v1053 = vpop.permute.xlu0 %1052
      %1055 = vset.pattern.permute.xlu0 2
      %1056 = vperm.xlu0 %1055, %v434
      %v1057 = vpop.permute.xlu0 %1056
      %v1059 = vlaneseq
      %v1060 = vshrl.u32 %v1059, 7
      %v1061 = vsub.s32 2, %v1060
      %v1062 = vrot.slane %v914, %v1061
      %v1063 = vmul.f32 %v917, %v1062
      %v1064 = vmul.f32 %v921, %v1062
      %v1065 = vmul.f32 %v925, %v1062
      %v1066 = vmul.f32 %v929, %v1062
      %v1067 = vmul.f32 %v933, %v1062
      %v1068 = vmul.f32 %v937, %v1062
      %v1069 = vmul.f32 %v941, %v1062
      %v1070 = vmul.f32 %v945, %v1062
      %v1071 = vmul.f32 %v949, %v1062
      %v1072 = vmul.f32 %v953, %v1062
      %v1073 = vmul.f32 %v957, %v1062
      %v1074 = vmul.f32 %v961, %v1062
      %v1075 = vmul.f32 %v965, %v1062
      %v1076 = vmul.f32 %v969, %v1062
      %v1077 = vmul.f32 %v973, %v1062
      %v1078 = vmul.f32 %v977, %v1062
      %v1079 = vmul.f32 %v981, %v1062
      %v1080 = vmul.f32 %v985, %v1062
      %v1081 = vmul.f32 %v989, %v1062
      %v1082 = vmul.f32 %v993, %v1062
      %v1083 = vmul.f32 %v997, %v1062
      %v1084 = vmul.f32 %v1001, %v1062
      %v1085 = vmul.f32 %v1005, %v1062
      %v1086 = vmul.f32 %v1009, %v1062
      %v1087 = vmul.f32 %v1013, %v1062
      %v1088 = vmul.f32 %v1017, %v1062
      %v1089 = vmul.f32 %v1021, %v1062
      %v1090 = vmul.f32 %v1025, %v1062
      %v1091 = vmul.f32 %v1029, %v1062
      %v1092 = vmul.f32 %v1033, %v1062
      %v1093 = vmul.f32 %v1037, %v1062
      %v1094 = vmul.f32 %v1041, %v1062
      %v1095 = vmul.f32 %v1045, %v1062
      %v1096 = vmul.f32 %v1049, %v1062
      %v1097 = vmul.f32 %v1053, %v1062
      %v1098 = vmul.f32 %v1057, %v1062
      %v1099 = vadd.f32 %v877, %v1063
      %v1100 = vadd.f32 %v878, %v1064
      %v1101 = vadd.f32 %v879, %v1065
      %v1102 = vadd.f32 %v880, %v1066
      %v1103 = vadd.f32 %v881, %v1067
      %v1104 = vadd.f32 %v882, %v1068
      %v1105 = vadd.f32 %v883, %v1069
      %v1106 = vadd.f32 %v884, %v1070
      %v1107 = vadd.f32 %v885, %v1071
      %v1108 = vadd.f32 %v886, %v1072
      %v1109 = vadd.f32 %v887, %v1073
      %v1110 = vadd.f32 %v888, %v1074
      %v1111 = vadd.f32 %v889, %v1075
      %v1112 = vadd.f32 %v890, %v1076
      %v1113 = vadd.f32 %v891, %v1077
      %v1114 = vadd.f32 %v892, %v1078
      %v1115 = vadd.f32 %v893, %v1079
      %v1116 = vadd.f32 %v894, %v1080
      %v1117 = vadd.f32 %v895, %v1081
      %v1118 = vadd.f32 %v896, %v1082
      %v1119 = vadd.f32 %v897, %v1083
      %v1120 = vadd.f32 %v898, %v1084
      %v1121 = vadd.f32 %v899, %v1085
      %v1122 = vadd.f32 %v900, %v1086
      %v1123 = vadd.f32 %v901, %v1087
      %v1124 = vadd.f32 %v902, %v1088
      %v1125 = vadd.f32 %v903, %v1089
      %v1126 = vadd.f32 %v904, %v1090
      %v1127 = vadd.f32 %v905, %v1091
      %v1128 = vadd.f32 %v906, %v1092
      %v1129 = vadd.f32 %v907, %v1093
      %v1130 = vadd.f32 %v908, %v1094
      %v1131 = vadd.f32 %v909, %v1095
      %v1132 = vadd.f32 %v910, %v1096
      %v1133 = vadd.f32 %v911, %v1097
      %v1134 = vadd.f32 %v912, %v1098
      %1135 = vset.pattern.permute.xlu0 3
      %1136 = vperm.xlu0 %1135, %v399
      %v1137 = vpop.permute.xlu0 %1136
      %1139 = vset.pattern.permute.xlu0 3
      %1140 = vperm.xlu0 %1139, %v400
      %v1141 = vpop.permute.xlu0 %1140
      %1143 = vset.pattern.permute.xlu0 3
      %1144 = vperm.xlu0 %1143, %v401
      %v1145 = vpop.permute.xlu0 %1144
      %1147 = vset.pattern.permute.xlu0 3
      %1148 = vperm.xlu0 %1147, %v402
      %v1149 = vpop.permute.xlu0 %1148
      %1151 = vset.pattern.permute.xlu0 3
      %1152 = vperm.xlu0 %1151, %v403
      %v1153 = vpop.permute.xlu0 %1152
      %1155 = vset.pattern.permute.xlu0 3
      %1156 = vperm.xlu0 %1155, %v404
      %v1157 = vpop.permute.xlu0 %1156
      %1159 = vset.pattern.permute.xlu0 3
      %1160 = vperm.xlu0 %1159, %v405
      %v1161 = vpop.permute.xlu0 %1160
      %1163 = vset.pattern.permute.xlu0 3
      %1164 = vperm.xlu0 %1163, %v406
      %v1165 = vpop.permute.xlu0 %1164
      %1167 = vset.pattern.permute.xlu0 3
      %1168 = vperm.xlu0 %1167, %v407
      %v1169 = vpop.permute.xlu0 %1168
      %1171 = vset.pattern.permute.xlu0 3
      %1172 = vperm.xlu0 %1171, %v408
      %v1173 = vpop.permute.xlu0 %1172
      %1175 = vset.pattern.permute.xlu0 3
      %1176 = vperm.xlu0 %1175, %v409
      %v1177 = vpop.permute.xlu0 %1176
      %1179 = vset.pattern.permute.xlu0 3
      %1180 = vperm.xlu0 %1179, %v410
      %v1181 = vpop.permute.xlu0 %1180
      %1183 = vset.pattern.permute.xlu0 3
      %1184 = vperm.xlu0 %1183, %v411
      %v1185 = vpop.permute.xlu0 %1184
      %1187 = vset.pattern.permute.xlu0 3
      %1188 = vperm.xlu0 %1187, %v412
      %v1189 = vpop.permute.xlu0 %1188
      %1191 = vset.pattern.permute.xlu0 3
      %1192 = vperm.xlu0 %1191, %v413
      %v1193 = vpop.permute.xlu0 %1192
      %1195 = vset.pattern.permute.xlu0 3
      %1196 = vperm.xlu0 %1195, %v414
      %v1197 = vpop.permute.xlu0 %1196
      %1199 = vset.pattern.permute.xlu0 3
      %1200 = vperm.xlu0 %1199, %v415
      %v1201 = vpop.permute.xlu0 %1200
      %1203 = vset.pattern.permute.xlu0 3
      %1204 = vperm.xlu0 %1203, %v416
      %v1205 = vpop.permute.xlu0 %1204
      %1207 = vset.pattern.permute.xlu0 3
      %1208 = vperm.xlu0 %1207, %v417
      %v1209 = vpop.permute.xlu0 %1208
      %1211 = vset.pattern.permute.xlu0 3
      %1212 = vperm.xlu0 %1211, %v418
      %v1213 = vpop.permute.xlu0 %1212
      %1215 = vset.pattern.permute.xlu0 3
      %1216 = vperm.xlu0 %1215, %v419
      %v1217 = vpop.permute.xlu0 %1216
      %1219 = vset.pattern.permute.xlu0 3
      %1220 = vperm.xlu0 %1219, %v420
      %v1221 = vpop.permute.xlu0 %1220
      %1223 = vset.pattern.permute.xlu0 3
      %1224 = vperm.xlu0 %1223, %v421
      %v1225 = vpop.permute.xlu0 %1224
      %1227 = vset.pattern.permute.xlu0 3
      %1228 = vperm.xlu0 %1227, %v422
      %v1229 = vpop.permute.xlu0 %1228
      %1231 = vset.pattern.permute.xlu0 3
      %1232 = vperm.xlu0 %1231, %v423
      %v1233 = vpop.permute.xlu0 %1232
      %1235 = vset.pattern.permute.xlu0 3
      %1236 = vperm.xlu0 %1235, %v424
      %v1237 = vpop.permute.xlu0 %1236
      %1239 = vset.pattern.permute.xlu0 3
      %1240 = vperm.xlu0 %1239, %v425
      %v1241 = vpop.permute.xlu0 %1240
      %1243 = vset.pattern.permute.xlu0 3
      %1244 = vperm.xlu0 %1243, %v426
      %v1245 = vpop.permute.xlu0 %1244
      %1247 = vset.pattern.permute.xlu0 3
      %1248 = vperm.xlu0 %1247, %v427
      %v1249 = vpop.permute.xlu0 %1248
      %1251 = vset.pattern.permute.xlu0 3
      %1252 = vperm.xlu0 %1251, %v428
      %v1253 = vpop.permute.xlu0 %1252
      %1255 = vset.pattern.permute.xlu0 3
      %1256 = vperm.xlu0 %1255, %v429
      %v1257 = vpop.permute.xlu0 %1256
      %1259 = vset.pattern.permute.xlu0 3
      %1260 = vperm.xlu0 %1259, %v430
      %v1261 = vpop.permute.xlu0 %1260
      %1263 = vset.pattern.permute.xlu0 3
      %1264 = vperm.xlu0 %1263, %v431
      %v1265 = vpop.permute.xlu0 %1264
      %1267 = vset.pattern.permute.xlu0 3
      %1268 = vperm.xlu0 %1267, %v432
      %v1269 = vpop.permute.xlu0 %1268
      %1271 = vset.pattern.permute.xlu0 3
      %1272 = vperm.xlu0 %1271, %v433
      %v1273 = vpop.permute.xlu0 %1272
      %1275 = vset.pattern.permute.xlu0 3
      %1276 = vperm.xlu0 %1275, %v434
      %v1277 = vpop.permute.xlu0 %1276
      %v1279 = vlaneseq
      %v1280 = vshrl.u32 %v1279, 7
      %v1281 = vsub.s32 3, %v1280
      %v1282 = vrot.slane %v914, %v1281
      %v1283 = vmul.f32 %v1137, %v1282
      %v1284 = vmul.f32 %v1141, %v1282
      %v1285 = vmul.f32 %v1145, %v1282
      %v1286 = vmul.f32 %v1149, %v1282
      %v1287 = vmul.f32 %v1153, %v1282
      %v1288 = vmul.f32 %v1157, %v1282
      %v1289 = vmul.f32 %v1161, %v1282
      %v1290 = vmul.f32 %v1165, %v1282
      %v1291 = vmul.f32 %v1169, %v1282
      %v1292 = vmul.f32 %v1173, %v1282
      %v1293 = vmul.f32 %v1177, %v1282
      %v1294 = vmul.f32 %v1181, %v1282
      %v1295 = vmul.f32 %v1185, %v1282
      %v1296 = vmul.f32 %v1189, %v1282
      %v1297 = vmul.f32 %v1193, %v1282
      %v1298 = vmul.f32 %v1197, %v1282
      %v1299 = vmul.f32 %v1201, %v1282
      %v1300 = vmul.f32 %v1205, %v1282
      %v1301 = vmul.f32 %v1209, %v1282
      %v1302 = vmul.f32 %v1213, %v1282
      %v1303 = vmul.f32 %v1217, %v1282
      %v1304 = vmul.f32 %v1221, %v1282
      %v1305 = vmul.f32 %v1225, %v1282
      %v1306 = vmul.f32 %v1229, %v1282
      %v1307 = vmul.f32 %v1233, %v1282
      %v1308 = vmul.f32 %v1237, %v1282
      %v1309 = vmul.f32 %v1241, %v1282
      %v1310 = vmul.f32 %v1245, %v1282
      %v1311 = vmul.f32 %v1249, %v1282
      %v1312 = vmul.f32 %v1253, %v1282
      %v1313 = vmul.f32 %v1257, %v1282
      %v1314 = vmul.f32 %v1261, %v1282
      %v1315 = vmul.f32 %v1265, %v1282
      %v1316 = vmul.f32 %v1269, %v1282
      %v1317 = vmul.f32 %v1273, %v1282
      %v1318 = vmul.f32 %v1277, %v1282
      %v1319 = vadd.f32 %v1099, %v1283
      %v1320 = vadd.f32 %v1100, %v1284
      %v1321 = vadd.f32 %v1101, %v1285
      %v1322 = vadd.f32 %v1102, %v1286
      %v1323 = vadd.f32 %v1103, %v1287
      %v1324 = vadd.f32 %v1104, %v1288
      %v1325 = vadd.f32 %v1105, %v1289
      %v1326 = vadd.f32 %v1106, %v1290
      %v1327 = vadd.f32 %v1107, %v1291
      %v1328 = vadd.f32 %v1108, %v1292
      %v1329 = vadd.f32 %v1109, %v1293
      %v1330 = vadd.f32 %v1110, %v1294
      %v1331 = vadd.f32 %v1111, %v1295
      %v1332 = vadd.f32 %v1112, %v1296
      %v1333 = vadd.f32 %v1113, %v1297
      %v1334 = vadd.f32 %v1114, %v1298
      %v1335 = vadd.f32 %v1115, %v1299
      %v1336 = vadd.f32 %v1116, %v1300
      %v1337 = vadd.f32 %v1117, %v1301
      %v1338 = vadd.f32 %v1118, %v1302
      %v1339 = vadd.f32 %v1119, %v1303
      %v1340 = vadd.f32 %v1120, %v1304
      %v1341 = vadd.f32 %v1121, %v1305
      %v1342 = vadd.f32 %v1122, %v1306
      %v1343 = vadd.f32 %v1123, %v1307
      %v1344 = vadd.f32 %v1124, %v1308
      %v1345 = vadd.f32 %v1125, %v1309
      %v1346 = vadd.f32 %v1126, %v1310
      %v1347 = vadd.f32 %v1127, %v1311
      %v1348 = vadd.f32 %v1128, %v1312
      %v1349 = vadd.f32 %v1129, %v1313
      %v1350 = vadd.f32 %v1130, %v1314
      %v1351 = vadd.f32 %v1131, %v1315
      %v1352 = vadd.f32 %v1132, %v1316
      %v1353 = vadd.f32 %v1133, %v1317
      %v1354 = vadd.f32 %v1134, %v1318
      %v1355 = vld [vmem:[%s2] sm:$0x1]
      %v1357 = vlaneseq
      %v1358 = vshrl.u32 %v1357, 7
      %v1359 = vsub.s32 0, %v1358
      %v1360 = vrot.slane %v1355, %v1359
      %v1362 = vadd.f32 %v1319, %v1360
      %v1363 = vadd.f32 %v1320, %v1360
      %v1364 = vadd.f32 %v1321, %v1360
      %v1365 = vadd.f32 %v1322, %v1360
      %v1366 = vadd.f32 %v1323, %v1360
      %v1367 = vadd.f32 %v1324, %v1360
      %v1368 = vadd.f32 %v1325, %v1360
      %v1369 = vadd.f32 %v1326, %v1360
      %v1370 = vadd.f32 %v1327, %v1360
      %v1371 = vadd.f32 %v1328, %v1360
      %v1372 = vadd.f32 %v1329, %v1360
      %v1373 = vadd.f32 %v1330, %v1360
      %v1374 = vadd.f32 %v1331, %v1360
      %v1375 = vadd.f32 %v1332, %v1360
      %v1376 = vadd.f32 %v1333, %v1360
      %v1377 = vadd.f32 %v1334, %v1360
      %v1378 = vadd.f32 %v1335, %v1360
      %v1379 = vadd.f32 %v1336, %v1360
      %v1380 = vadd.f32 %v1337, %v1360
      %v1381 = vadd.f32 %v1338, %v1360
      %v1382 = vadd.f32 %v1339, %v1360
      %v1383 = vadd.f32 %v1340, %v1360
      %v1384 = vadd.f32 %v1341, %v1360
      %v1385 = vadd.f32 %v1342, %v1360
      %v1386 = vadd.f32 %v1343, %v1360
      %v1387 = vadd.f32 %v1344, %v1360
      %v1388 = vadd.f32 %v1345, %v1360
      %v1389 = vadd.f32 %v1346, %v1360
      %v1390 = vadd.f32 %v1347, %v1360
      %v1391 = vadd.f32 %v1348, %v1360
      %v1392 = vadd.f32 %v1349, %v1360
      %v1393 = vadd.f32 %v1350, %v1360
      %v1394 = vadd.f32 %v1351, %v1360
      %v1395 = vadd.f32 %v1352, %v1360
      %v1396 = vadd.f32 %v1353, %v1360
      %v1397 = vadd.f32 %v1354, %v1360
      %v1398 = vmax.f32 %v1362, 0.0
      %v1399 = vmax.f32 %v1363, 0.0
      %v1400 = vmax.f32 %v1364, 0.0
      %v1401 = vmax.f32 %v1365, 0.0
      %v1402 = vmax.f32 %v1366, 0.0
      %v1403 = vmax.f32 %v1367, 0.0
      %v1404 = vmax.f32 %v1368, 0.0
      %v1405 = vmax.f32 %v1369, 0.0
      %v1406 = vmax.f32 %v1370, 0.0
      %v1407 = vmax.f32 %v1371, 0.0
      %v1408 = vmax.f32 %v1372, 0.0
      %v1409 = vmax.f32 %v1373, 0.0
      %v1410 = vmax.f32 %v1374, 0.0
      %v1411 = vmax.f32 %v1375, 0.0
      %v1412 = vmax.f32 %v1376, 0.0
      %v1413 = vmax.f32 %v1377, 0.0
      %v1414 = vmax.f32 %v1378, 0.0
      %v1415 = vmax.f32 %v1379, 0.0
      %v1416 = vmax.f32 %v1380, 0.0
      %v1417 = vmax.f32 %v1381, 0.0
      %v1418 = vmax.f32 %v1382, 0.0
      %v1419 = vmax.f32 %v1383, 0.0
      %v1420 = vmax.f32 %v1384, 0.0
      %v1421 = vmax.f32 %v1385, 0.0
      %v1422 = vmax.f32 %v1386, 0.0
      %v1423 = vmax.f32 %v1387, 0.0
      %v1424 = vmax.f32 %v1388, 0.0
      %v1425 = vmax.f32 %v1389, 0.0
      %v1426 = vmax.f32 %v1390, 0.0
      %v1427 = vmax.f32 %v1391, 0.0
      %v1428 = vmax.f32 %v1392, 0.0
      %v1429 = vmax.f32 %v1393, 0.0
      %v1430 = vmax.f32 %v1394, 0.0
      %v1431 = vmax.f32 %v1395, 0.0
      %v1432 = vmax.f32 %v1396, 0.0
      %v1433 = vmax.f32 %v1397, 0.0
      %v1434 = vmin.f32 %v1398, 6.0
      %v1435 = vmin.f32 %v1399, 6.0
      %v1436 = vmin.f32 %v1400, 6.0
      %v1437 = vmin.f32 %v1401, 6.0
      %v1438 = vmin.f32 %v1402, 6.0
      %v1439 = vmin.f32 %v1403, 6.0
      %v1440 = vmin.f32 %v1404, 6.0
      %v1441 = vmin.f32 %v1405, 6.0
      %v1442 = vmin.f32 %v1406, 6.0
      %v1443 = vmin.f32 %v1407, 6.0
      %v1444 = vmin.f32 %v1408, 6.0
      %v1445 = vmin.f32 %v1409, 6.0
      %v1446 = vmin.f32 %v1410, 6.0
      %v1447 = vmin.f32 %v1411, 6.0
      %v1448 = vmin.f32 %v1412, 6.0
      %v1449 = vmin.f32 %v1413, 6.0
      %v1450 = vmin.f32 %v1414, 6.0
      %v1451 = vmin.f32 %v1415, 6.0
      %v1452 = vmin.f32 %v1416, 6.0
      %v1453 = vmin.f32 %v1417, 6.0
      %v1454 = vmin.f32 %v1418, 6.0
      %v1455 = vmin.f32 %v1419, 6.0
      %v1456 = vmin.f32 %v1420, 6.0
      %v1457 = vmin.f32 %v1421, 6.0
      %v1458 = vmin.f32 %v1422, 6.0
      %v1459 = vmin.f32 %v1423, 6.0
      %v1460 = vmin.f32 %v1424, 6.0
      %v1461 = vmin.f32 %v1425, 6.0
      %v1462 = vmin.f32 %v1426, 6.0
      %v1463 = vmin.f32 %v1427, 6.0
      %v1464 = vmin.f32 %v1428, 6.0
      %v1465 = vmin.f32 %v1429, 6.0
      %v1466 = vmin.f32 %v1430, 6.0
      %v1467 = vmin.f32 %v1431, 6.0
      %v1468 = vmin.f32 %v1432, 6.0
      %v1469 = vmin.f32 %v1433, 6.0
      %v1470 = vpack.c.bf16 %v1435, %v1434
      %v1471 = vpack.c.bf16 %v1437, %v1436
      %v1472 = vpack.c.bf16 %v1439, %v1438
      %v1473 = vpack.c.bf16 %v1441, %v1440
      %v1474 = vpack.c.bf16 %v1443, %v1442
      %v1475 = vpack.c.bf16 %v1445, %v1444
      %v1476 = vpack.c.bf16 %v1447, %v1446
      %v1477 = vpack.c.bf16 %v1449, %v1448
      %v1478 = vpack.c.bf16 %v1451, %v1450
      %v1479 = vpack.c.bf16 %v1453, %v1452
      %v1480 = vpack.c.bf16 %v1455, %v1454
      %v1481 = vpack.c.bf16 %v1457, %v1456
      %v1482 = vpack.c.bf16 %v1459, %v1458
      %v1483 = vpack.c.bf16 %v1461, %v1460
      %v1484 = vpack.c.bf16 %v1463, %v1462
      %v1485 = vpack.c.bf16 %v1465, %v1464
      %v1486 = vpack.c.bf16 %v1467, %v1466
      %v1487 = vpack.c.bf16 %v1469, %v1468
      %v1506 = vunpack.c.l.b16 %v1470
      %v1507 = vunpack.c.h.b16 %v1470
      %v1508 = vunpack.c.l.b16 %v1471
      %v1509 = vunpack.c.h.b16 %v1471
      %v1510 = vunpack.c.l.b16 %v1472
      %v1511 = vunpack.c.h.b16 %v1472
      %v1512 = vunpack.c.l.b16 %v1473
      %v1513 = vunpack.c.h.b16 %v1473
      %v1514 = vunpack.c.l.b16 %v1474
      %v1515 = vunpack.c.h.b16 %v1474
      %v1516 = vunpack.c.l.b16 %v1475
      %v1517 = vunpack.c.h.b16 %v1475
      %v1518 = vunpack.c.l.b16 %v1476
      %v1519 = vunpack.c.h.b16 %v1476
      %v1520 = vunpack.c.l.b16 %v1477
      %v1521 = vunpack.c.h.b16 %v1477
      %v1522 = vunpack.c.l.b16 %v1478
      %v1523 = vunpack.c.h.b16 %v1478
      %v1524 = vunpack.c.l.b16 %v1479
      %v1525 = vunpack.c.h.b16 %v1479
      %v1526 = vunpack.c.l.b16 %v1480
      %v1527 = vunpack.c.h.b16 %v1480
      %v1528 = vunpack.c.l.b16 %v1481
      %v1529 = vunpack.c.h.b16 %v1481
      %v1530 = vunpack.c.l.b16 %v1482
      %v1531 = vunpack.c.h.b16 %v1482
      %v1532 = vunpack.c.l.b16 %v1483
      %v1533 = vunpack.c.h.b16 %v1483
      %v1534 = vunpack.c.l.b16 %v1484
      %v1535 = vunpack.c.h.b16 %v1484
      %v1536 = vunpack.c.l.b16 %v1485
      %v1537 = vunpack.c.h.b16 %v1485
      %v1538 = vunpack.c.l.b16 %v1486
      %v1539 = vunpack.c.h.b16 %v1486
      %v1540 = vunpack.c.l.b16 %v1487
      %v1541 = vunpack.c.h.b16 %v1487
      %v1542 = vpack.c.b16 %v1506, %v1506
      %v1543 = vpack.c.b16 %v1507, %v1507
      %v1544 = vpack.c.b16 %v1508, %v1508
      %v1545 = vpack.c.b16 %v1509, %v1509
      %v1546 = vpack.c.b16 %v1510, %v1510
      %v1547 = vpack.c.b16 %v1511, %v1511
      %v1548 = vpack.c.b16 %v1512, %v1512
      %v1549 = vpack.c.b16 %v1513, %v1513
      %v1550 = vpack.c.b16 %v1514, %v1514
      %v1551 = vpack.c.b16 %v1515, %v1515
      %v1552 = vpack.c.b16 %v1516, %v1516
      %v1553 = vpack.c.b16 %v1517, %v1517
      %v1554 = vpack.c.b16 %v1518, %v1518
      %v1555 = vpack.c.b16 %v1519, %v1519
      %v1556 = vpack.c.b16 %v1520, %v1520
      %v1557 = vpack.c.b16 %v1521, %v1521
      %v1558 = vpack.c.b16 %v1522, %v1522
      %v1559 = vpack.c.b16 %v1523, %v1523
      %v1560 = vpack.c.b16 %v1524, %v1524
      %v1561 = vpack.c.b16 %v1525, %v1525
      %v1562 = vpack.c.b16 %v1526, %v1526
      %v1563 = vpack.c.b16 %v1527, %v1527
      %v1564 = vpack.c.b16 %v1528, %v1528
      %v1565 = vpack.c.b16 %v1529, %v1529
      %v1566 = vpack.c.b16 %v1530, %v1530
      %v1567 = vpack.c.b16 %v1531, %v1531
      %v1568 = vpack.c.b16 %v1532, %v1532
      %v1569 = vpack.c.b16 %v1533, %v1533
      %v1570 = vpack.c.b16 %v1534, %v1534
      %v1571 = vpack.c.b16 %v1535, %v1535
      %v1572 = vpack.c.b16 %v1536, %v1536
      %v1573 = vpack.c.b16 %v1537, %v1537
      %v1574 = vpack.c.b16 %v1538, %v1538
      %v1575 = vpack.c.b16 %v1539, %v1539
      %v1576 = vpack.c.b16 %v1540, %v1540
      %v1577 = vpack.c.b16 %v1541, %v1541
      %vm1578 = vsmask.f32 256
      %vm1579 = vsmask.f32 4368
      %vm1580 = vmor %vm1578, %vm1579
      %v1582 = vshrl.u32 %v1542, 16
      %v1584 = vrot.slane %v1582, 7
      %v1585 = vshll.u32 %v1542, 16
      %v1587 = vor.u32 %v1584, %v1585
      %v1588 = vrot.slane %v1584, 4
      %v1590 = vshrl.u32 %v1543, 16
      %v1592 = vrot.slane %v1590, 7
      %v1593 = vshll.u32 %v1543, 16
      %v1595 = vor.u32 %v1592, %v1593
      %v1596 = vsel %vm1580, %v1588, %v1595
      %v1597 = vrot.slane %v1592, 4
      %v1599 = vshrl.u32 %v1544, 16
      %v1601 = vrot.slane %v1599, 7
      %v1602 = vshll.u32 %v1544, 16
      %v1604 = vor.u32 %v1601, %v1602
      %v1605 = vrot.slane %v1601, 4
      %v1607 = vshrl.u32 %v1545, 16
      %v1609 = vrot.slane %v1607, 7
      %v1610 = vshll.u32 %v1545, 16
      %v1612 = vor.u32 %v1609, %v1610
      %v1613 = vsel %vm1580, %v1605, %v1612
      %v1614 = vrot.slane %v1609, 4
      %v1616 = vshrl.u32 %v1546, 16
      %v1618 = vrot.slane %v1616, 7
      %v1619 = vshll.u32 %v1546, 16
      %v1621 = vor.u32 %v1618, %v1619
      %v1622 = vrot.slane %v1618, 4
      %v1624 = vshrl.u32 %v1547, 16
      %v1626 = vrot.slane %v1624, 7
      %v1627 = vshll.u32 %v1547, 16
      %v1629 = vor.u32 %v1626, %v1627
      %v1630 = vsel %vm1580, %v1622, %v1629
      %v1631 = vrot.slane %v1626, 4
      %v1633 = vshrl.u32 %v1548, 16
      %v1635 = vrot.slane %v1633, 7
      %v1636 = vshll.u32 %v1548, 16
      %v1638 = vor.u32 %v1635, %v1636
      %v1639 = vrot.slane %v1635, 4
      %v1641 = vshrl.u32 %v1549, 16
      %v1643 = vrot.slane %v1641, 7
      %v1644 = vshll.u32 %v1549, 16
      %v1646 = vor.u32 %v1643, %v1644
      %v1647 = vsel %vm1580, %v1639, %v1646
      %v1648 = vrot.slane %v1643, 4
      %v1650 = vshrl.u32 %v1550, 16
      %v1652 = vrot.slane %v1650, 7
      %v1653 = vshll.u32 %v1550, 16
      %v1655 = vor.u32 %v1652, %v1653
      %v1656 = vrot.slane %v1652, 4
      %v1658 = vshrl.u32 %v1551, 16
      %v1660 = vrot.slane %v1658, 7
      %v1661 = vshll.u32 %v1551, 16
      %v1663 = vor.u32 %v1660, %v1661
      %v1664 = vsel %vm1580, %v1656, %v1663
      %v1665 = vrot.slane %v1660, 4
      %v1667 = vshrl.u32 %v1552, 16
      %v1669 = vrot.slane %v1667, 7
      %v1670 = vshll.u32 %v1552, 16
      %v1672 = vor.u32 %v1669, %v1670
      %v1673 = vrot.slane %v1669, 4
      %v1675 = vshrl.u32 %v1553, 16
      %v1677 = vrot.slane %v1675, 7
      %v1678 = vshll.u32 %v1553, 16
      %v1680 = vor.u32 %v1677, %v1678
      %v1681 = vsel %vm1580, %v1673, %v1680
      %v1682 = vrot.slane %v1677, 4
      %v1684 = vshrl.u32 %v1554, 16
      %v1686 = vrot.slane %v1684, 7
      %v1687 = vshll.u32 %v1554, 16
      %v1689 = vor.u32 %v1686, %v1687
      %v1690 = vrot.slane %v1686, 4
      %v1692 = vshrl.u32 %v1555, 16
      %v1694 = vrot.slane %v1692, 7
      %v1695 = vshll.u32 %v1555, 16
      %v1697 = vor.u32 %v1694, %v1695
      %v1698 = vsel %vm1580, %v1690, %v1697
      %v1699 = vrot.slane %v1694, 4
      %v1701 = vshrl.u32 %v1556, 16
      %v1703 = vrot.slane %v1701, 7
      %v1704 = vshll.u32 %v1556, 16
      %v1706 = vor.u32 %v1703, %v1704
      %v1707 = vrot.slane %v1703, 4
      %v1709 = vshrl.u32 %v1557, 16
      %v1711 = vrot.slane %v1709, 7
      %v1712 = vshll.u32 %v1557, 16
      %v1714 = vor.u32 %v1711, %v1712
      %v1715 = vsel %vm1580, %v1707, %v1714
      %v1716 = vrot.slane %v1711, 4
      %v1718 = vshrl.u32 %v1558, 16
      %v1720 = vrot.slane %v1718, 7
      %v1721 = vshll.u32 %v1558, 16
      %v1723 = vor.u32 %v1720, %v1721
      %v1724 = vrot.slane %v1720, 4
      %v1726 = vshrl.u32 %v1559, 16
      %v1728 = vrot.slane %v1726, 7
      %v1729 = vshll.u32 %v1559, 16
      %v1731 = vor.u32 %v1728, %v1729
      %v1732 = vsel %vm1580, %v1724, %v1731
      %v1733 = vrot.slane %v1728, 4
      %v1735 = vshrl.u32 %v1560, 16
      %v1737 = vrot.slane %v1735, 7
      %v1738 = vshll.u32 %v1560, 16
      %v1740 = vor.u32 %v1737, %v1738
      %v1741 = vrot.slane %v1737, 4
      %v1743 = vshrl.u32 %v1561, 16
      %v1745 = vrot.slane %v1743, 7
      %v1746 = vshll.u32 %v1561, 16
      %v1748 = vor.u32 %v1745, %v1746
      %v1749 = vsel %vm1580, %v1741, %v1748
      %v1750 = vrot.slane %v1745, 4
      %v1752 = vshrl.u32 %v1562, 16
      %v1754 = vrot.slane %v1752, 7
      %v1755 = vshll.u32 %v1562, 16
      %v1757 = vor.u32 %v1754, %v1755
      %v1758 = vrot.slane %v1754, 4
      %v1760 = vshrl.u32 %v1563, 16
      %v1762 = vrot.slane %v1760, 7
      %v1763 = vshll.u32 %v1563, 16
      %v1765 = vor.u32 %v1762, %v1763
      %v1766 = vsel %vm1580, %v1758, %v1765
      %v1767 = vrot.slane %v1762, 4
      %v1769 = vshrl.u32 %v1564, 16
      %v1771 = vrot.slane %v1769, 7
      %v1772 = vshll.u32 %v1564, 16
      %v1774 = vor.u32 %v1771, %v1772
      %v1775 = vrot.slane %v1771, 4
      %v1777 = vshrl.u32 %v1565, 16
      %v1779 = vrot.slane %v1777, 7
      %v1780 = vshll.u32 %v1565, 16
      %v1782 = vor.u32 %v1779, %v1780
      %v1783 = vsel %vm1580, %v1775, %v1782
      %v1784 = vrot.slane %v1779, 4
      %v1786 = vshrl.u32 %v1566, 16
      %v1788 = vrot.slane %v1786, 7
      %v1789 = vshll.u32 %v1566, 16
      %v1791 = vor.u32 %v1788, %v1789
      %v1792 = vrot.slane %v1788, 4
      %v1794 = vshrl.u32 %v1567, 16
      %v1796 = vrot.slane %v1794, 7
      %v1797 = vshll.u32 %v1567, 16
      %v1799 = vor.u32 %v1796, %v1797
      %v1800 = vsel %vm1580, %v1792, %v1799
      %v1801 = vrot.slane %v1796, 4
      %v1803 = vshrl.u32 %v1568, 16
      %v1805 = vrot.slane %v1803, 7
      %v1806 = vshll.u32 %v1568, 16
      %v1808 = vor.u32 %v1805, %v1806
      %v1809 = vrot.slane %v1805, 4
      %v1811 = vshrl.u32 %v1569, 16
      %v1813 = vrot.slane %v1811, 7
      %v1814 = vshll.u32 %v1569, 16
      %v1816 = vor.u32 %v1813, %v1814
      %v1817 = vsel %vm1580, %v1809, %v1816
      %v1818 = vrot.slane %v1813, 4
      %v1820 = vshrl.u32 %v1570, 16
      %v1822 = vrot.slane %v1820, 7
      %v1823 = vshll.u32 %v1570, 16
      %v1825 = vor.u32 %v1822, %v1823
      %v1826 = vrot.slane %v1822, 4
      %v1828 = vshrl.u32 %v1571, 16
      %v1830 = vrot.slane %v1828, 7
      %v1831 = vshll.u32 %v1571, 16
      %v1833 = vor.u32 %v1830, %v1831
      %v1834 = vsel %vm1580, %v1826, %v1833
      %v1835 = vrot.slane %v1830, 4
      %v1837 = vshrl.u32 %v1572, 16
      %v1839 = vrot.slane %v1837, 7
      %v1840 = vshll.u32 %v1572, 16
      %v1842 = vor.u32 %v1839, %v1840
      %v1843 = vrot.slane %v1839, 4
      %v1845 = vshrl.u32 %v1573, 16
      %v1847 = vrot.slane %v1845, 7
      %v1848 = vshll.u32 %v1573, 16
      %v1850 = vor.u32 %v1847, %v1848
      %v1851 = vsel %vm1580, %v1843, %v1850
      %v1852 = vrot.slane %v1847, 4
      %v1854 = vshrl.u32 %v1574, 16
      %v1856 = vrot.slane %v1854, 7
      %v1857 = vshll.u32 %v1574, 16
      %v1859 = vor.u32 %v1856, %v1857
      %v1860 = vrot.slane %v1856, 4
      %v1862 = vshrl.u32 %v1575, 16
      %v1864 = vrot.slane %v1862, 7
      %v1865 = vshll.u32 %v1575, 16
      %v1867 = vor.u32 %v1864, %v1865
      %v1868 = vsel %vm1580, %v1860, %v1867
      %v1869 = vrot.slane %v1864, 4
      %v1871 = vshrl.u32 %v1576, 16
      %v1873 = vrot.slane %v1871, 7
      %v1874 = vshll.u32 %v1576, 16
      %v1876 = vor.u32 %v1873, %v1874
      %v1877 = vrot.slane %v1873, 4
      %v1879 = vshrl.u32 %v1577, 16
      %v1881 = vrot.slane %v1879, 7
      %v1882 = vshll.u32 %v1577, 16
      %v1884 = vor.u32 %v1881, %v1882
      %v1885 = vsel %vm1580, %v1877, %v1884
      %v1886 = vrot.slane %v1881, 4
      %vm1941 = vcmask 1043456
      %vm1942 = vsmask.f32 7938
      %vm1943 = vmand %vm1941, %vm1942
      %v1944 = vld [vmem:[#allocation2] sm:$0xf]
      %v1945 = vsel %vm1943, %v1587, %v1944
      %1946 = vst [vmem:[#allocation2] sm:$0xf] %v1945
      %1947 = vst [vmem:[#allocation2 + $0x4] sm:$0xf] %v1596
      %vm1948 = vcmask 1040384
      %vm1949 = vmand %vm1948, %vm1578
      %v1950 = vld [vmem:[#allocation2 + $0x8] sm:$0x1]
      %v1951 = vsel %vm1949, %v1597, %v1950
      %1952 = vst [vmem:[#allocation2 + $0x8] sm:$0x1] %v1951
      %v1953 = vld [vmem:[#allocation2 + $0xc] sm:$0xf]
      %v1954 = vsel %vm1943, %v1604, %v1953
      %1955 = vst [vmem:[#allocation2 + $0xc] sm:$0xf] %v1954
      %1956 = vst [vmem:[#allocation2 + $0x10] sm:$0xf] %v1613
      %v1957 = vld [vmem:[#allocation2 + $0x14] sm:$0x1]
      %v1958 = vsel %vm1949, %v1614, %v1957
      %1959 = vst [vmem:[#allocation2 + $0x14] sm:$0x1] %v1958
      %v1960 = vld [vmem:[#allocation2 + $0x18] sm:$0xf]
      %v1961 = vsel %vm1943, %v1621, %v1960
      %1962 = vst [vmem:[#allocation2 + $0x18] sm:$0xf] %v1961
      %1963 = vst [vmem:[#allocation2 + $0x1c] sm:$0xf] %v1630
      %v1964 = vld [vmem:[#allocation2 + $0x20] sm:$0x1]
      %v1965 = vsel %vm1949, %v1631, %v1964
      %1966 = vst [vmem:[#allocation2 + $0x20] sm:$0x1] %v1965
      %v1967 = vld [vmem:[#allocation2 + $0x24] sm:$0xf]
      %v1968 = vsel %vm1943, %v1638, %v1967
      %1969 = vst [vmem:[#allocation2 + $0x24] sm:$0xf] %v1968
      %1970 = vst [vmem:[#allocation2 + $0x28] sm:$0xf] %v1647
      %v1971 = vld [vmem:[#allocation2 + $0x2c] sm:$0x1]
      %v1972 = vsel %vm1949, %v1648, %v1971
      %1973 = vst [vmem:[#allocation2 + $0x2c] sm:$0x1] %v1972
      %v1974 = vld [vmem:[#allocation2 + $0x30] sm:$0xf]
      %v1975 = vsel %vm1943, %v1655, %v1974
      %1976 = vst [vmem:[#allocation2 + $0x30] sm:$0xf] %v1975
      %1977 = vst [vmem:[#allocation2 + $0x34] sm:$0xf] %v1664
      %v1978 = vld [vmem:[#allocation2 + $0x38] sm:$0x1]
      %v1979 = vsel %vm1949, %v1665, %v1978
      %1980 = vst [vmem:[#allocation2 + $0x38] sm:$0x1] %v1979
      %v1981 = vld [vmem:[#allocation2 + $0x3c] sm:$0xf]
      %v1982 = vsel %vm1943, %v1672, %v1981
      %1983 = vst [vmem:[#allocation2 + $0x3c] sm:$0xf] %v1982
      %1984 = vst [vmem:[#allocation2 + $0x40] sm:$0xf] %v1681
      %v1985 = vld [vmem:[#allocation2 + $0x44] sm:$0x1]
      %v1986 = vsel %vm1949, %v1682, %v1985
      %1987 = vst [vmem:[#allocation2 + $0x44] sm:$0x1] %v1986
      %v1988 = vld [vmem:[#allocation2 + $0x48] sm:$0xf]
      %v1989 = vsel %vm1943, %v1689, %v1988
      %1990 = vst [vmem:[#allocation2 + $0x48] sm:$0xf] %v1989
      %1991 = vst [vmem:[#allocation2 + $0x4c] sm:$0xf] %v1698
      %v1992 = vld [vmem:[#allocation2 + $0x50] sm:$0x1]
      %v1993 = vsel %vm1949, %v1699, %v1992
      %1994 = vst [vmem:[#allocation2 + $0x50] sm:$0x1] %v1993
      %v1995 = vld [vmem:[#allocation2 + $0x54] sm:$0xf]
      %v1996 = vsel %vm1943, %v1706, %v1995
      %1997 = vst [vmem:[#allocation2 + $0x54] sm:$0xf] %v1996
      %1998 = vst [vmem:[#allocation2 + $0x58] sm:$0xf] %v1715
      %v1999 = vld [vmem:[#allocation2 + $0x5c] sm:$0x1]
      %v2000 = vsel %vm1949, %v1716, %v1999
      %2001 = vst [vmem:[#allocation2 + $0x5c] sm:$0x1] %v2000
      %v2002 = vld [vmem:[#allocation2 + $0x60] sm:$0xf]
      %v2003 = vsel %vm1943, %v1723, %v2002
      %2004 = vst [vmem:[#allocation2 + $0x60] sm:$0xf] %v2003
      %2005 = vst [vmem:[#allocation2 + $0x64] sm:$0xf] %v1732
      %v2006 = vld [vmem:[#allocation2 + $0x68] sm:$0x1]
      %v2007 = vsel %vm1949, %v1733, %v2006
      %2008 = vst [vmem:[#allocation2 + $0x68] sm:$0x1] %v2007
      %v2009 = vld [vmem:[#allocation2 + $0x6c] sm:$0xf]
      %v2010 = vsel %vm1943, %v1740, %v2009
      %2011 = vst [vmem:[#allocation2 + $0x6c] sm:$0xf] %v2010
      %2012 = vst [vmem:[#allocation2 + $0x70] sm:$0xf] %v1749
      %v2013 = vld [vmem:[#allocation2 + $0x74] sm:$0x1]
      %v2014 = vsel %vm1949, %v1750, %v2013
      %2015 = vst [vmem:[#allocation2 + $0x74] sm:$0x1] %v2014
      %v2016 = vld [vmem:[#allocation2 + $0x78] sm:$0xf]
      %v2017 = vsel %vm1943, %v1757, %v2016
      %2018 = vst [vmem:[#allocation2 + $0x78] sm:$0xf] %v2017
      %2019 = vst [vmem:[#allocation2 + $0x7c] sm:$0xf] %v1766
      %v2020 = vld [vmem:[#allocation2 + $0x80] sm:$0x1]
      %v2021 = vsel %vm1949, %v1767, %v2020
      %2022 = vst [vmem:[#allocation2 + $0x80] sm:$0x1] %v2021
      %v2023 = vld [vmem:[#allocation2 + $0x84] sm:$0xf]
      %v2024 = vsel %vm1943, %v1774, %v2023
      %2025 = vst [vmem:[#allocation2 + $0x84] sm:$0xf] %v2024
      %2026 = vst [vmem:[#allocation2 + $0x88] sm:$0xf] %v1783
      %v2027 = vld [vmem:[#allocation2 + $0x8c] sm:$0x1]
      %v2028 = vsel %vm1949, %v1784, %v2027
      %2029 = vst [vmem:[#allocation2 + $0x8c] sm:$0x1] %v2028
      %v2030 = vld [vmem:[#allocation2 + $0x90] sm:$0xf]
      %v2031 = vsel %vm1943, %v1791, %v2030
      %2032 = vst [vmem:[#allocation2 + $0x90] sm:$0xf] %v2031
      %2033 = vst [vmem:[#allocation2 + $0x94] sm:$0xf] %v1800
      %v2034 = vld [vmem:[#allocation2 + $0x98] sm:$0x1]
      %v2035 = vsel %vm1949, %v1801, %v2034
      %2036 = vst [vmem:[#allocation2 + $0x98] sm:$0x1] %v2035
      %v2037 = vld [vmem:[#allocation2 + $0x9c] sm:$0xf]
      %v2038 = vsel %vm1943, %v1808, %v2037
      %2039 = vst [vmem:[#allocation2 + $0x9c] sm:$0xf] %v2038
      %2040 = vst [vmem:[#allocation2 + $0xa0] sm:$0xf] %v1817
      %v2041 = vld [vmem:[#allocation2 + $0xa4] sm:$0x1]
      %v2042 = vsel %vm1949, %v1818, %v2041
      %2043 = vst [vmem:[#allocation2 + $0xa4] sm:$0x1] %v2042
      %v2044 = vld [vmem:[#allocation2 + $0xa8] sm:$0xf]
      %v2045 = vsel %vm1943, %v1825, %v2044
      %2046 = vst [vmem:[#allocation2 + $0xa8] sm:$0xf] %v2045
      %2047 = vst [vmem:[#allocation2 + $0xac] sm:$0xf] %v1834
      %v2048 = vld [vmem:[#allocation2 + $0xb0] sm:$0x1]
      %v2049 = vsel %vm1949, %v1835, %v2048
      %2050 = vst [vmem:[#allocation2 + $0xb0] sm:$0x1] %v2049
      %v2051 = vld [vmem:[#allocation2 + $0xb4] sm:$0xf]
      %v2052 = vsel %vm1943, %v1842, %v2051
      %2053 = vst [vmem:[#allocation2 + $0xb4] sm:$0xf] %v2052
      %2054 = vst [vmem:[#allocation2 + $0xb8] sm:$0xf] %v1851
      %v2055 = vld [vmem:[#allocation2 + $0xbc] sm:$0x1]
      %v2056 = vsel %vm1949, %v1852, %v2055
      %2057 = vst [vmem:[#allocation2 + $0xbc] sm:$0x1] %v2056
      %v2058 = vld [vmem:[#allocation2 + $0xc0] sm:$0xf]
      %v2059 = vsel %vm1943, %v1859, %v2058
      %2060 = vst [vmem:[#allocation2 + $0xc0] sm:$0xf] %v2059
      %2061 = vst [vmem:[#allocation2 + $0xc4] sm:$0xf] %v1868
      %v2062 = vld [vmem:[#allocation2 + $0xc8] sm:$0x1]
      %v2063 = vsel %vm1949, %v1869, %v2062
      %2064 = vst [vmem:[#allocation2 + $0xc8] sm:$0x1] %v2063
      %v2065 = vld [vmem:[#allocation2 + $0xcc] sm:$0xf]
      %v2066 = vsel %vm1943, %v1876, %v2065
      %2067 = vst [vmem:[#allocation2 + $0xcc] sm:$0xf] %v2066
      %2068 = vst [vmem:[#allocation2 + $0xd0] sm:$0xf] %v1885
      %v2069 = vld [vmem:[#allocation2 + $0xd4] sm:$0x1]
      %v2070 = vsel %vm1949, %v1886, %v2069
      %2071 = vst [vmem:[#allocation2 + $0xd4] sm:$0x1] %v2070
      %v2072 = vld [vmem:[#allocation2] sm:$0x1]
      %v2073 = vsel %vm1949, 0, %v2072
      %2074 = vst [vmem:[#allocation2] sm:$0x1] %v2073
      %v2075 = vld [vmem:[#allocation2 + $0xc] sm:$0x1]
      %v2076 = vsel %vm1949, 0, %v2075
      %2077 = vst [vmem:[#allocation2 + $0xc] sm:$0x1] %v2076
      %v2078 = vld [vmem:[#allocation2 + $0x18] sm:$0x1]
      %v2079 = vsel %vm1949, 0, %v2078
      %2080 = vst [vmem:[#allocation2 + $0x18] sm:$0x1] %v2079
      %v2081 = vld [vmem:[#allocation2 + $0x24] sm:$0x1]
      %v2082 = vsel %vm1949, 0, %v2081
      %2083 = vst [vmem:[#allocation2 + $0x24] sm:$0x1] %v2082
      %v2084 = vld [vmem:[#allocation2 + $0x30] sm:$0x1]
      %v2085 = vsel %vm1949, 0, %v2084
      %2086 = vst [vmem:[#allocation2 + $0x30] sm:$0x1] %v2085
      %v2087 = vld [vmem:[#allocation2 + $0x3c] sm:$0x1]
      %v2088 = vsel %vm1949, 0, %v2087
      %2089 = vst [vmem:[#allocation2 + $0x3c] sm:$0x1] %v2088
      %v2090 = vld [vmem:[#allocation2 + $0x48] sm:$0x1]
      %v2091 = vsel %vm1949, 0, %v2090
      %2092 = vst [vmem:[#allocation2 + $0x48] sm:$0x1] %v2091
      %v2093 = vld [vmem:[#allocation2 + $0x54] sm:$0x1]
      %v2094 = vsel %vm1949, 0, %v2093
      %2095 = vst [vmem:[#allocation2 + $0x54] sm:$0x1] %v2094
      %v2096 = vld [vmem:[#allocation2 + $0x60] sm:$0x1]
      %v2097 = vsel %vm1949, 0, %v2096
      %2098 = vst [vmem:[#allocation2 + $0x60] sm:$0x1] %v2097
      %v2099 = vld [vmem:[#allocation2 + $0x6c] sm:$0x1]
      %v2100 = vsel %vm1949, 0, %v2099
      %2101 = vst [vmem:[#allocation2 + $0x6c] sm:$0x1] %v2100
      %v2102 = vld [vmem:[#allocation2 + $0x78] sm:$0x1]
      %v2103 = vsel %vm1949, 0, %v2102
      %2104 = vst [vmem:[#allocation2 + $0x78] sm:$0x1] %v2103
      %v2105 = vld [vmem:[#allocation2 + $0x84] sm:$0x1]
      %v2106 = vsel %vm1949, 0, %v2105
      %2107 = vst [vmem:[#allocation2 + $0x84] sm:$0x1] %v2106
      %v2108 = vld [vmem:[#allocation2 + $0x90] sm:$0x1]
      %v2109 = vsel %vm1949, 0, %v2108
      %2110 = vst [vmem:[#allocation2 + $0x90] sm:$0x1] %v2109
      %v2111 = vld [vmem:[#allocation2 + $0x9c] sm:$0x1]
      %v2112 = vsel %vm1949, 0, %v2111
      %2113 = vst [vmem:[#allocation2 + $0x9c] sm:$0x1] %v2112
      %v2114 = vld [vmem:[#allocation2 + $0xa8] sm:$0x1]
      %v2115 = vsel %vm1949, 0, %v2114
      %2116 = vst [vmem:[#allocation2 + $0xa8] sm:$0x1] %v2115
      %v2117 = vld [vmem:[#allocation2 + $0xb4] sm:$0x1]
      %v2118 = vsel %vm1949, 0, %v2117
      %2119 = vst [vmem:[#allocation2 + $0xb4] sm:$0x1] %v2118
      %v2120 = vld [vmem:[#allocation2 + $0xc0] sm:$0x1]
      %v2121 = vsel %vm1949, 0, %v2120
      %2122 = vst [vmem:[#allocation2 + $0xc0] sm:$0x1] %v2121
      %v2123 = vld [vmem:[#allocation2 + $0xcc] sm:$0x1]
      %v2124 = vsel %vm1949, 0, %v2123
      %2125 = vst [vmem:[#allocation2 + $0xcc] sm:$0x1] %v2124
      %vm2126 = vmand %vm1948, %vm1942
      %v2127 = vld [vmem:[#allocation2 + $0x8] sm:$0x1]
      %v2128 = vsel %vm2126, 0, %v2127
      %2129 = vst [vmem:[#allocation2 + $0x8] sm:$0x1] %v2128
      %v2130 = vld [vmem:[#allocation2 + $0x14] sm:$0x1]
      %v2131 = vsel %vm2126, 0, %v2130
      %2132 = vst [vmem:[#allocation2 + $0x14] sm:$0x1] %v2131
      %v2133 = vld [vmem:[#allocation2 + $0x20] sm:$0x1]
      %v2134 = vsel %vm2126, 0, %v2133
      %2135 = vst [vmem:[#allocation2 + $0x20] sm:$0x1] %v2134
      %v2136 = vld [vmem:[#allocation2 + $0x2c] sm:$0x1]
      %v2137 = vsel %vm2126, 0, %v2136
      %2138 = vst [vmem:[#allocation2 + $0x2c] sm:$0x1] %v2137
      %v2139 = vld [vmem:[#allocation2 + $0x38] sm:$0x1]
      %v2140 = vsel %vm2126, 0, %v2139
      %2141 = vst [vmem:[#allocation2 + $0x38] sm:$0x1] %v2140
      %v2142 = vld [vmem:[#allocation2 + $0x44] sm:$0x1]
      %v2143 = vsel %vm2126, 0, %v2142
      %2144 = vst [vmem:[#allocation2 + $0x44] sm:$0x1] %v2143
      %v2145 = vld [vmem:[#allocation2 + $0x50] sm:$0x1]
      %v2146 = vsel %vm2126, 0, %v2145
      %2147 = vst [vmem:[#allocation2 + $0x50] sm:$0x1] %v2146
      %v2148 = vld [vmem:[#allocation2 + $0x5c] sm:$0x1]
      %v2149 = vsel %vm2126, 0, %v2148
      %2150 = vst [vmem:[#allocation2 + $0x5c] sm:$0x1] %v2149
      %v2151 = vld [vmem:[#allocation2 + $0x68] sm:$0x1]
      %v2152 = vsel %vm2126, 0, %v2151
      %2153 = vst [vmem:[#allocation2 + $0x68] sm:$0x1] %v2152
      %v2154 = vld [vmem:[#allocation2 + $0x74] sm:$0x1]
      %v2155 = vsel %vm2126, 0, %v2154
      %2156 = vst [vmem:[#allocation2 + $0x74] sm:$0x1] %v2155
      %v2157 = vld [vmem:[#allocation2 + $0x80] sm:$0x1]
      %v2158 = vsel %vm2126, 0, %v2157
      %2159 = vst [vmem:[#allocation2 + $0x80] sm:$0x1] %v2158
      %v2160 = vld [vmem:[#allocation2 + $0x8c] sm:$0x1]
      %v2161 = vsel %vm2126, 0, %v2160
      %2162 = vst [vmem:[#allocation2 + $0x8c] sm:$0x1] %v2161
      %v2163 = vld [vmem:[#allocation2 + $0x98] sm:$0x1]
      %v2164 = vsel %vm2126, 0, %v2163
      %2165 = vst [vmem:[#allocation2 + $0x98] sm:$0x1] %v2164
      %v2166 = vld [vmem:[#allocation2 + $0xa4] sm:$0x1]
      %v2167 = vsel %vm2126, 0, %v2166
      %2168 = vst [vmem:[#allocation2 + $0xa4] sm:$0x1] %v2167
      %v2169 = vld [vmem:[#allocation2 + $0xb0] sm:$0x1]
      %v2170 = vsel %vm2126, 0, %v2169
      %2171 = vst [vmem:[#allocation2 + $0xb0] sm:$0x1] %v2170
      %v2172 = vld [vmem:[#allocation2 + $0xbc] sm:$0x1]
      %v2173 = vsel %vm2126, 0, %v2172
      %2174 = vst [vmem:[#allocation2 + $0xbc] sm:$0x1] %v2173
      %v2175 = vld [vmem:[#allocation2 + $0xc8] sm:$0x1]
      %v2176 = vsel %vm2126, 0, %v2175
      %2177 = vst [vmem:[#allocation2 + $0xc8] sm:$0x1] %v2176
      %v2178 = vld [vmem:[#allocation2 + $0xd4] sm:$0x1]
      %v2179 = vsel %vm2126, 0, %v2178
      %2180 = vst [vmem:[#allocation2 + $0xd4] sm:$0x1] %v2179
      %p2181 = scmp.eq.s32.totalorder %s359, 0
      // Predicated region
      $region57: #{tpu_custom_call.1} parent=55 // pred_check
        %p2182 = pneg %p2181
      $region58: #{tpu_custom_call.1} parent=55 // pred_check_branch
        %2184 = sbr.rel (%p2182) target = $region60
      $region59: #{tpu_custom_call.1} parent=55 // pred_region
        %2185 = vst [vmem:[#allocation2] sm:$0xf] 0
        %2186 = vst [vmem:[#allocation2 + $0x4] sm:$0xf] 0
        %2187 = vst [vmem:[#allocation2 + $0x8] sm:$0x1] 0
      $region60: #{tpu_custom_call.1} parent=55 // pred_fallthru
        _
      %s2188 = sadd.s32 %s359, 18
      %p2189 = scmp.gt.s32.totalorder %s2188, 17
      // Predicated region
      $region61: #{tpu_custom_call.1} parent=55 // pred_check
        %p2190 = pneg %p2189
      $region62: #{tpu_custom_call.1} parent=55 // pred_check_branch
        %2192 = sbr.rel (%p2190) target = $region64
      $region63: #{tpu_custom_call.1} parent=55 // pred_region
        %s2193 = scalar_lea.vmem [#allocation2], 204
        %2194 = vst [vmem:[%s2193] sm:$0xf] 0
        %2195 = vst [vmem:[%s2193 + $0x4] sm:$0xf] 0
        %2196 = vst [vmem:[%s2193 + $0x8] sm:$0x1] 0
      $region64: #{tpu_custom_call.1} parent=55 // pred_fallthru
        _
      %v2197 = vld [vmem:[%s3] sm:$0xff]
      %v2198 = vld [vmem:[%s3 + $0x8] sm:$0x1]
      %v2199 = vld [vmem:[#allocation2] sm:$0xf]
      %v2200 = vld [vmem:[#allocation2 + $0x4] sm:$0xf]
      %v2201 = vld [vmem:[#allocation2 + $0xc] sm:$0xf]
      %v2202 = vld [vmem:[#allocation2 + $0x10] sm:$0xf]
      %v2203 = vld [vmem:[#allocation2 + $0x18] sm:$0xf]
      %v2204 = vld [vmem:[#allocation2 + $0x1c] sm:$0xf]
      %v2205 = vld [vmem:[#allocation2 + $0x24] sm:$0xf]
      %v2206 = vld [vmem:[#allocation2 + $0x28] sm:$0xf]
      %v2207 = vld [vmem:[#allocation2 + $0x30] sm:$0xf]
      %v2208 = vld [vmem:[#allocation2 + $0x34] sm:$0xf]
      %v2209 = vld [vmem:[#allocation2 + $0x3c] sm:$0xf]
      %v2210 = vld [vmem:[#allocation2 + $0x40] sm:$0xf]
      %v2211 = vld [vmem:[#allocation2 + $0x48] sm:$0xf]
      %v2212 = vld [vmem:[#allocation2 + $0x4c] sm:$0xf]
      %v2213 = vld [vmem:[#allocation2 + $0x54] sm:$0xf]
      %v2214 = vld [vmem:[#allocation2 + $0x58] sm:$0xf]
      %v2215 = vld [vmem:[#allocation2 + $0x60] sm:$0xf]
      %v2216 = vld [vmem:[#allocation2 + $0x64] sm:$0xf]
      %v2217 = vld [vmem:[#allocation2 + $0x6c] sm:$0xf]
      %v2218 = vld [vmem:[#allocation2 + $0x70] sm:$0xf]
      %v2219 = vld [vmem:[#allocation2 + $0x78] sm:$0xf]
      %v2220 = vld [vmem:[#allocation2 + $0x7c] sm:$0xf]
      %v2221 = vld [vmem:[#allocation2 + $0x84] sm:$0xf]
      %v2222 = vld [vmem:[#allocation2 + $0x88] sm:$0xf]
      %v2223 = vld [vmem:[#allocation2 + $0x90] sm:$0xf]
      %v2224 = vld [vmem:[#allocation2 + $0x94] sm:$0xf]
      %v2225 = vld [vmem:[#allocation2 + $0x9c] sm:$0xf]
      %v2226 = vld [vmem:[#allocation2 + $0xa0] sm:$0xf]
      %v2227 = vld [vmem:[#allocation2 + $0xa8] sm:$0xf]
      %v2228 = vld [vmem:[#allocation2 + $0xac] sm:$0xf]
      %v2229 = vld [vmem:[#allocation2 + $0xb4] sm:$0xf]
      %v2230 = vld [vmem:[#allocation2 + $0xb8] sm:$0xf]
      %v2231 = vunpack.c.l.bf16 %v2199
      %v2232 = vunpack.c.l.bf16 %v2200
      %v2233 = vunpack.c.l.bf16 %v2201
      %v2234 = vunpack.c.l.bf16 %v2202
      %v2235 = vunpack.c.l.bf16 %v2203
      %v2236 = vunpack.c.l.bf16 %v2204
      %v2237 = vunpack.c.l.bf16 %v2205
      %v2238 = vunpack.c.l.bf16 %v2206
      %v2239 = vunpack.c.l.bf16 %v2207
      %v2240 = vunpack.c.l.bf16 %v2208
      %v2241 = vunpack.c.l.bf16 %v2209
      %v2242 = vunpack.c.l.bf16 %v2210
      %v2243 = vunpack.c.l.bf16 %v2211
      %v2244 = vunpack.c.l.bf16 %v2212
      %v2245 = vunpack.c.l.bf16 %v2213
      %v2246 = vunpack.c.l.bf16 %v2214
      %v2247 = vunpack.c.l.bf16 %v2215
      %v2248 = vunpack.c.l.bf16 %v2216
      %v2249 = vunpack.c.l.bf16 %v2217
      %v2250 = vunpack.c.l.bf16 %v2218
      %v2251 = vunpack.c.l.bf16 %v2219
      %v2252 = vunpack.c.l.bf16 %v2220
      %v2253 = vunpack.c.l.bf16 %v2221
      %v2254 = vunpack.c.l.bf16 %v2222
      %v2255 = vunpack.c.l.bf16 %v2223
      %v2256 = vunpack.c.l.bf16 %v2224
      %v2257 = vunpack.c.l.bf16 %v2225
      %v2258 = vunpack.c.l.bf16 %v2226
      %v2259 = vunpack.c.l.bf16 %v2227
      %v2260 = vunpack.c.l.bf16 %v2228
      %v2261 = vunpack.c.l.bf16 %v2229
      %v2262 = vunpack.c.l.bf16 %v2230
      %v2263 = vlaneseq
      %v2264 = vshrl.u32 %v2263, 7
      %v2265 = vsub.s32 0, %v2264
      %v2266 = vrot.slane %v2197, %v2265
      %v2267 = vmul.f32 %v2231, %v2266
      %v2268 = vmul.f32 %v2232, %v2266
      %v2269 = vmul.f32 %v2233, %v2266
      %v2270 = vmul.f32 %v2234, %v2266
      %v2271 = vmul.f32 %v2235, %v2266
      %v2272 = vmul.f32 %v2236, %v2266
      %v2273 = vmul.f32 %v2237, %v2266
      %v2274 = vmul.f32 %v2238, %v2266
      %v2275 = vmul.f32 %v2239, %v2266
      %v2276 = vmul.f32 %v2240, %v2266
      %v2277 = vmul.f32 %v2241, %v2266
      %v2278 = vmul.f32 %v2242, %v2266
      %v2279 = vmul.f32 %v2243, %v2266
      %v2280 = vmul.f32 %v2244, %v2266
      %v2281 = vmul.f32 %v2245, %v2266
      %v2282 = vmul.f32 %v2246, %v2266
      %v2283 = vmul.f32 %v2247, %v2266
      %v2284 = vmul.f32 %v2248, %v2266
      %v2285 = vmul.f32 %v2249, %v2266
      %v2286 = vmul.f32 %v2250, %v2266
      %v2287 = vmul.f32 %v2251, %v2266
      %v2288 = vmul.f32 %v2252, %v2266
      %v2289 = vmul.f32 %v2253, %v2266
      %v2290 = vmul.f32 %v2254, %v2266
      %v2291 = vmul.f32 %v2255, %v2266
      %v2292 = vmul.f32 %v2256, %v2266
      %v2293 = vmul.f32 %v2257, %v2266
      %v2294 = vmul.f32 %v2258, %v2266
      %v2295 = vmul.f32 %v2259, %v2266
      %v2296 = vmul.f32 %v2260, %v2266
      %v2297 = vmul.f32 %v2261, %v2266
      %v2298 = vmul.f32 %v2262, %v2266
      %v2299 = vadd.f32 %v2267, 0.0
      %v2300 = vadd.f32 %v2268, 0.0
      %v2301 = vadd.f32 %v2269, 0.0
      %v2302 = vadd.f32 %v2270, 0.0
      %v2303 = vadd.f32 %v2271, 0.0
      %v2304 = vadd.f32 %v2272, 0.0
      %v2305 = vadd.f32 %v2273, 0.0
      %v2306 = vadd.f32 %v2274, 0.0
      %v2307 = vadd.f32 %v2275, 0.0
      %v2308 = vadd.f32 %v2276, 0.0
      %v2309 = vadd.f32 %v2277, 0.0
      %v2310 = vadd.f32 %v2278, 0.0
      %v2311 = vadd.f32 %v2279, 0.0
      %v2312 = vadd.f32 %v2280, 0.0
      %v2313 = vadd.f32 %v2281, 0.0
      %v2314 = vadd.f32 %v2282, 0.0
      %v2315 = vadd.f32 %v2283, 0.0
      %v2316 = vadd.f32 %v2284, 0.0
      %v2317 = vadd.f32 %v2285, 0.0
      %v2318 = vadd.f32 %v2286, 0.0
      %v2319 = vadd.f32 %v2287, 0.0
      %v2320 = vadd.f32 %v2288, 0.0
      %v2321 = vadd.f32 %v2289, 0.0
      %v2322 = vadd.f32 %v2290, 0.0
      %v2323 = vadd.f32 %v2291, 0.0
      %v2324 = vadd.f32 %v2292, 0.0
      %v2325 = vadd.f32 %v2293, 0.0
      %v2326 = vadd.f32 %v2294, 0.0
      %v2327 = vadd.f32 %v2295, 0.0
      %v2328 = vadd.f32 %v2296, 0.0
      %v2329 = vadd.f32 %v2297, 0.0
      %v2330 = vadd.f32 %v2298, 0.0
      %v2331 = vld [vmem:[#allocation2 + $0x8] sm:$0x1]
      %v2332 = vld [vmem:[#allocation2 + $0x14] sm:$0x1]
      %v2333 = vld [vmem:[#allocation2 + $0x20] sm:$0x1]
      %v2334 = vld [vmem:[#allocation2 + $0x2c] sm:$0x1]
      %v2335 = vld [vmem:[#allocation2 + $0x38] sm:$0x1]
      %v2336 = vld [vmem:[#allocation2 + $0x44] sm:$0x1]
      %v2337 = vld [vmem:[#allocation2 + $0x50] sm:$0x1]
      %v2338 = vld [vmem:[#allocation2 + $0x5c] sm:$0x1]
      %v2339 = vld [vmem:[#allocation2 + $0x68] sm:$0x1]
      %v2340 = vld [vmem:[#allocation2 + $0x74] sm:$0x1]
      %v2341 = vld [vmem:[#allocation2 + $0x80] sm:$0x1]
      %v2342 = vld [vmem:[#allocation2 + $0x8c] sm:$0x1]
      %v2343 = vld [vmem:[#allocation2 + $0x98] sm:$0x1]
      %v2344 = vld [vmem:[#allocation2 + $0xa4] sm:$0x1]
      %v2345 = vld [vmem:[#allocation2 + $0xb0] sm:$0x1]
      %v2346 = vld [vmem:[#allocation2 + $0xbc] sm:$0x1]
      %v2347 = vunpack.c.l.bf16 %v2331
      %v2348 = vunpack.c.l.bf16 %v2332
      %v2349 = vunpack.c.l.bf16 %v2333
      %v2350 = vunpack.c.l.bf16 %v2334
      %v2351 = vunpack.c.l.bf16 %v2335
      %v2352 = vunpack.c.l.bf16 %v2336
      %v2353 = vunpack.c.l.bf16 %v2337
      %v2354 = vunpack.c.l.bf16 %v2338
      %v2355 = vunpack.c.l.bf16 %v2339
      %v2356 = vunpack.c.l.bf16 %v2340
      %v2357 = vunpack.c.l.bf16 %v2341
      %v2358 = vunpack.c.l.bf16 %v2342
      %v2359 = vunpack.c.l.bf16 %v2343
      %v2360 = vunpack.c.l.bf16 %v2344
      %v2361 = vunpack.c.l.bf16 %v2345
      %v2362 = vunpack.c.l.bf16 %v2346
      %v2363 = vlaneseq
      %v2364 = vshrl.u32 %v2363, 7
      %v2365 = vsub.s32 1, %v2364
      %v2366 = vrot.slane %v2197, %v2365
      %v2367 = vmul.f32 %v2231, %v2366
      %v2368 = vmul.f32 %v2232, %v2366
      %v2369 = vmul.f32 %v2347, %v2366
      %v2370 = vmul.f32 %v2233, %v2366
      %v2371 = vmul.f32 %v2234, %v2366
      %v2372 = vmul.f32 %v2348, %v2366
      %v2373 = vmul.f32 %v2235, %v2366
      %v2374 = vmul.f32 %v2236, %v2366
      %v2375 = vmul.f32 %v2349, %v2366
      %v2376 = vmul.f32 %v2237, %v2366
      %v2377 = vmul.f32 %v2238, %v2366
      %v2378 = vmul.f32 %v2350, %v2366
      %v2379 = vmul.f32 %v2239, %v2366
      %v2380 = vmul.f32 %v2240, %v2366
      %v2381 = vmul.f32 %v2351, %v2366
      %v2382 = vmul.f32 %v2241, %v2366
      %v2383 = vmul.f32 %v2242, %v2366
      %v2384 = vmul.f32 %v2352, %v2366
      %v2385 = vmul.f32 %v2243, %v2366
      %v2386 = vmul.f32 %v2244, %v2366
      %v2387 = vmul.f32 %v2353, %v2366
      %v2388 = vmul.f32 %v2245, %v2366
      %v2389 = vmul.f32 %v2246, %v2366
      %v2390 = vmul.f32 %v2354, %v2366
      %v2391 = vmul.f32 %v2247, %v2366
      %v2392 = vmul.f32 %v2248, %v2366
      %v2393 = vmul.f32 %v2355, %v2366
      %v2394 = vmul.f32 %v2249, %v2366
      %v2395 = vmul.f32 %v2250, %v2366
      %v2396 = vmul.f32 %v2356, %v2366
      %v2397 = vmul.f32 %v2251, %v2366
      %v2398 = vmul.f32 %v2252, %v2366
      %v2399 = vmul.f32 %v2357, %v2366
      %v2400 = vmul.f32 %v2253, %v2366
      %v2401 = vmul.f32 %v2254, %v2366
      %v2402 = vmul.f32 %v2358, %v2366
      %v2403 = vmul.f32 %v2255, %v2366
      %v2404 = vmul.f32 %v2256, %v2366
      %v2405 = vmul.f32 %v2359, %v2366
      %v2406 = vmul.f32 %v2257, %v2366
      %v2407 = vmul.f32 %v2258, %v2366
      %v2408 = vmul.f32 %v2360, %v2366
      %v2409 = vmul.f32 %v2259, %v2366
      %v2410 = vmul.f32 %v2260, %v2366
      %v2411 = vmul.f32 %v2361, %v2366
      %v2412 = vmul.f32 %v2261, %v2366
      %v2413 = vmul.f32 %v2262, %v2366
      %v2414 = vmul.f32 %v2362, %v2366
      %vm2463 = vcmask 1046528
      %v2464 = vrot.slane %v2367, 1
      %v2465 = vrot.slane %v2368, 1
      %v2466 = vsel %vm2463, %v2464, %v2465
      %v2467 = vrot.slane %v2369, 1
      %v2468 = vsel %vm2463, %v2465, %v2467
      %v2469 = vrot.slane %v2370, 1
      %v2470 = vrot.slane %v2371, 1
      %v2471 = vsel %vm2463, %v2469, %v2470
      %v2472 = vrot.slane %v2372, 1
      %v2473 = vsel %vm2463, %v2470, %v2472
      %v2474 = vrot.slane %v2373, 1
      %v2475 = vrot.slane %v2374, 1
      %v2476 = vsel %vm2463, %v2474, %v2475
      %v2477 = vrot.slane %v2375, 1
      %v2478 = vsel %vm2463, %v2475, %v2477
      %v2479 = vrot.slane %v2376, 1
      %v2480 = vrot.slane %v2377, 1
      %v2481 = vsel %vm2463, %v2479, %v2480
      %v2482 = vrot.slane %v2378, 1
      %v2483 = vsel %vm2463, %v2480, %v2482
      %v2484 = vrot.slane %v2379, 1
      %v2485 = vrot.slane %v2380, 1
      %v2486 = vsel %vm2463, %v2484, %v2485
      %v2487 = vrot.slane %v2381, 1
      %v2488 = vsel %vm2463, %v2485, %v2487
      %v2489 = vrot.slane %v2382, 1
      %v2490 = vrot.slane %v2383, 1
      %v2491 = vsel %vm2463, %v2489, %v2490
      %v2492 = vrot.slane %v2384, 1
      %v2493 = vsel %vm2463, %v2490, %v2492
      %v2494 = vrot.slane %v2385, 1
      %v2495 = vrot.slane %v2386, 1
      %v2496 = vsel %vm2463, %v2494, %v2495
      %v2497 = vrot.slane %v2387, 1
      %v2498 = vsel %vm2463, %v2495, %v2497
      %v2499 = vrot.slane %v2388, 1
      %v2500 = vrot.slane %v2389, 1
      %v2501 = vsel %vm2463, %v2499, %v2500
      %v2502 = vrot.slane %v2390, 1
      %v2503 = vsel %vm2463, %v2500, %v2502
      %v2504 = vrot.slane %v2391, 1
      %v2505 = vrot.slane %v2392, 1
      %v2506 = vsel %vm2463, %v2504, %v2505
      %v2507 = vrot.slane %v2393, 1
      %v2508 = vsel %vm2463, %v2505, %v2507
      %v2509 = vrot.slane %v2394, 1
      %v2510 = vrot.slane %v2395, 1
      %v2511 = vsel %vm2463, %v2509, %v2510
      %v2512 = vrot.slane %v2396, 1
      %v2513 = vsel %vm2463, %v2510, %v2512
      %v2514 = vrot.slane %v2397, 1
      %v2515 = vrot.slane %v2398, 1
      %v2516 = vsel %vm2463, %v2514, %v2515
      %v2517 = vrot.slane %v2399, 1
      %v2518 = vsel %vm2463, %v2515, %v2517
      %v2519 = vrot.slane %v2400, 1
      %v2520 = vrot.slane %v2401, 1
      %v2521 = vsel %vm2463, %v2519, %v2520
      %v2522 = vrot.slane %v2402, 1
      %v2523 = vsel %vm2463, %v2520, %v2522
      %v2524 = vrot.slane %v2403, 1
      %v2525 = vrot.slane %v2404, 1
      %v2526 = vsel %vm2463, %v2524, %v2525
      %v2527 = vrot.slane %v2405, 1
      %v2528 = vsel %vm2463, %v2525, %v2527
      %v2529 = vrot.slane %v2406, 1
      %v2530 = vrot.slane %v2407, 1
      %v2531 = vsel %vm2463, %v2529, %v2530
      %v2532 = vrot.slane %v2408, 1
      %v2533 = vsel %vm2463, %v2530, %v2532
      %v2534 = vrot.slane %v2409, 1
      %v2535 = vrot.slane %v2410, 1
      %v2536 = vsel %vm2463, %v2534, %v2535
      %v2537 = vrot.slane %v2411, 1
      %v2538 = vsel %vm2463, %v2535, %v2537
      %v2539 = vrot.slane %v2412, 1
      %v2540 = vrot.slane %v2413, 1
      %v2541 = vsel %vm2463, %v2539, %v2540
      %v2542 = vrot.slane %v2414, 1
      %v2543 = vsel %vm2463, %v2540, %v2542
      %v2576 = vadd.f32 %v2299, %v2466
      %v2577 = vadd.f32 %v2300, %v2468
      %v2578 = vadd.f32 %v2301, %v2471
      %v2579 = vadd.f32 %v2302, %v2473
      %v2580 = vadd.f32 %v2303, %v2476
      %v2581 = vadd.f32 %v2304, %v2478
      %v2582 = vadd.f32 %v2305, %v2481
      %v2583 = vadd.f32 %v2306, %v2483
      %v2584 = vadd.f32 %v2307, %v2486
      %v2585 = vadd.f32 %v2308, %v2488
      %v2586 = vadd.f32 %v2309, %v2491
      %v2587 = vadd.f32 %v2310, %v2493
      %v2588 = vadd.f32 %v2311, %v2496
      %v2589 = vadd.f32 %v2312, %v2498
      %v2590 = vadd.f32 %v2313, %v2501
      %v2591 = vadd.f32 %v2314, %v2503
      %v2592 = vadd.f32 %v2315, %v2506
      %v2593 = vadd.f32 %v2316, %v2508
      %v2594 = vadd.f32 %v2317, %v2511
      %v2595 = vadd.f32 %v2318, %v2513
      %v2596 = vadd.f32 %v2319, %v2516
      %v2597 = vadd.f32 %v2320, %v2518
      %v2598 = vadd.f32 %v2321, %v2521
      %v2599 = vadd.f32 %v2322, %v2523
      %v2600 = vadd.f32 %v2323, %v2526
      %v2601 = vadd.f32 %v2324, %v2528
      %v2602 = vadd.f32 %v2325, %v2531
      %v2603 = vadd.f32 %v2326, %v2533
      %v2604 = vadd.f32 %v2327, %v2536
      %v2605 = vadd.f32 %v2328, %v2538
      %v2606 = vadd.f32 %v2329, %v2541
      %v2607 = vadd.f32 %v2330, %v2543
      %v2608 = vld [vmem:[#allocation2] sm:$0xe]
      %v2609 = vld [vmem:[#allocation2 + $0xc] sm:$0xe]
      %v2610 = vld [vmem:[#allocation2 + $0x18] sm:$0xe]
      %v2611 = vld [vmem:[#allocation2 + $0x24] sm:$0xe]
      %v2612 = vld [vmem:[#allocation2 + $0x30] sm:$0xe]
      %v2613 = vld [vmem:[#allocation2 + $0x3c] sm:$0xe]
      %v2614 = vld [vmem:[#allocation2 + $0x48] sm:$0xe]
      %v2615 = vld [vmem:[#allocation2 + $0x54] sm:$0xe]
      %v2616 = vld [vmem:[#allocation2 + $0x60] sm:$0xe]
      %v2617 = vld [vmem:[#allocation2 + $0x6c] sm:$0xe]
      %v2618 = vld [vmem:[#allocation2 + $0x78] sm:$0xe]
      %v2619 = vld [vmem:[#allocation2 + $0x84] sm:$0xe]
      %v2620 = vld [vmem:[#allocation2 + $0x90] sm:$0xe]
      %v2621 = vld [vmem:[#allocation2 + $0x9c] sm:$0xe]
      %v2622 = vld [vmem:[#allocation2 + $0xa8] sm:$0xe]
      %v2623 = vld [vmem:[#allocation2 + $0xb4] sm:$0xe]
      %v2624 = vunpack.c.l.bf16 %v2608
      %v2625 = vunpack.c.l.bf16 %v2609
      %v2626 = vunpack.c.l.bf16 %v2610
      %v2627 = vunpack.c.l.bf16 %v2611
      %v2628 = vunpack.c.l.bf16 %v2612
      %v2629 = vunpack.c.l.bf16 %v2613
      %v2630 = vunpack.c.l.bf16 %v2614
      %v2631 = vunpack.c.l.bf16 %v2615
      %v2632 = vunpack.c.l.bf16 %v2616
      %v2633 = vunpack.c.l.bf16 %v2617
      %v2634 = vunpack.c.l.bf16 %v2618
      %v2635 = vunpack.c.l.bf16 %v2619
      %v2636 = vunpack.c.l.bf16 %v2620
      %v2637 = vunpack.c.l.bf16 %v2621
      %v2638 = vunpack.c.l.bf16 %v2622
      %v2639 = vunpack.c.l.bf16 %v2623
      %v2640 = vlaneseq
      %v2641 = vshrl.u32 %v2640, 7
      %v2642 = vsub.s32 2, %v2641
      %v2643 = vrot.slane %v2197, %v2642
      %v2644 = vmul.f32 %v2624, %v2643
      %v2645 = vmul.f32 %v2232, %v2643
      %v2646 = vmul.f32 %v2347, %v2643
      %v2647 = vmul.f32 %v2625, %v2643
      %v2648 = vmul.f32 %v2234, %v2643
      %v2649 = vmul.f32 %v2348, %v2643
      %v2650 = vmul.f32 %v2626, %v2643
      %v2651 = vmul.f32 %v2236, %v2643
      %v2652 = vmul.f32 %v2349, %v2643
      %v2653 = vmul.f32 %v2627, %v2643
      %v2654 = vmul.f32 %v2238, %v2643
      %v2655 = vmul.f32 %v2350, %v2643
      %v2656 = vmul.f32 %v2628, %v2643
      %v2657 = vmul.f32 %v2240, %v2643
      %v2658 = vmul.f32 %v2351, %v2643
      %v2659 = vmul.f32 %v2629, %v2643
      %v2660 = vmul.f32 %v2242, %v2643
      %v2661 = vmul.f32 %v2352, %v2643
      %v2662 = vmul.f32 %v2630, %v2643
      %v2663 = vmul.f32 %v2244, %v2643
      %v2664 = vmul.f32 %v2353, %v2643
      %v2665 = vmul.f32 %v2631, %v2643
      %v2666 = vmul.f32 %v2246, %v2643
      %v2667 = vmul.f32 %v2354, %v2643
      %v2668 = vmul.f32 %v2632, %v2643
      %v2669 = vmul.f32 %v2248, %v2643
      %v2670 = vmul.f32 %v2355, %v2643
      %v2671 = vmul.f32 %v2633, %v2643
      %v2672 = vmul.f32 %v2250, %v2643
      %v2673 = vmul.f32 %v2356, %v2643
      %v2674 = vmul.f32 %v2634, %v2643
      %v2675 = vmul.f32 %v2252, %v2643
      %v2676 = vmul.f32 %v2357, %v2643
      %v2677 = vmul.f32 %v2635, %v2643
      %v2678 = vmul.f32 %v2254, %v2643
      %v2679 = vmul.f32 %v2358, %v2643
      %v2680 = vmul.f32 %v2636, %v2643
      %v2681 = vmul.f32 %v2256, %v2643
      %v2682 = vmul.f32 %v2359, %v2643
      %v2683 = vmul.f32 %v2637, %v2643
      %v2684 = vmul.f32 %v2258, %v2643
      %v2685 = vmul.f32 %v2360, %v2643
      %v2686 = vmul.f32 %v2638, %v2643
      %v2687 = vmul.f32 %v2260, %v2643
      %v2688 = vmul.f32 %v2361, %v2643
      %v2689 = vmul.f32 %v2639, %v2643
      %v2690 = vmul.f32 %v2262, %v2643
      %v2691 = vmul.f32 %v2362, %v2643
      %vm2740 = vcmask 1045504
      %v2741 = vrot.slane %v2644, 2
      %v2742 = vrot.slane %v2645, 2
      %v2743 = vsel %vm2740, %v2741, %v2742
      %v2744 = vrot.slane %v2646, 2
      %v2745 = vsel %vm2740, %v2742, %v2744
      %v2746 = vrot.slane %v2647, 2
      %v2747 = vrot.slane %v2648, 2
      %v2748 = vsel %vm2740, %v2746, %v2747
      %v2749 = vrot.slane %v2649, 2
      %v2750 = vsel %vm2740, %v2747, %v2749
      %v2751 = vrot.slane %v2650, 2
      %v2752 = vrot.slane %v2651, 2
      %v2753 = vsel %vm2740, %v2751, %v2752
      %v2754 = vrot.slane %v2652, 2
      %v2755 = vsel %vm2740, %v2752, %v2754
      %v2756 = vrot.slane %v2653, 2
      %v2757 = vrot.slane %v2654, 2
      %v2758 = vsel %vm2740, %v2756, %v2757
      %v2759 = vrot.slane %v2655, 2
      %v2760 = vsel %vm2740, %v2757, %v2759
      %v2761 = vrot.slane %v2656, 2
      %v2762 = vrot.slane %v2657, 2
      %v2763 = vsel %vm2740, %v2761, %v2762
      %v2764 = vrot.slane %v2658, 2
      %v2765 = vsel %vm2740, %v2762, %v2764
      %v2766 = vrot.slane %v2659, 2
      %v2767 = vrot.slane %v2660, 2
      %v2768 = vsel %vm2740, %v2766, %v2767
      %v2769 = vrot.slane %v2661, 2
      %v2770 = vsel %vm2740, %v2767, %v2769
      %v2771 = vrot.slane %v2662, 2
      %v2772 = vrot.slane %v2663, 2
      %v2773 = vsel %vm2740, %v2771, %v2772
      %v2774 = vrot.slane %v2664, 2
      %v2775 = vsel %vm2740, %v2772, %v2774
      %v2776 = vrot.slane %v2665, 2
      %v2777 = vrot.slane %v2666, 2
      %v2778 = vsel %vm2740, %v2776, %v2777
      %v2779 = vrot.slane %v2667, 2
      %v2780 = vsel %vm2740, %v2777, %v2779
      %v2781 = vrot.slane %v2668, 2
      %v2782 = vrot.slane %v2669, 2
      %v2783 = vsel %vm2740, %v2781, %v2782
      %v2784 = vrot.slane %v2670, 2
      %v2785 = vsel %vm2740, %v2782, %v2784
      %v2786 = vrot.slane %v2671, 2
      %v2787 = vrot.slane %v2672, 2
      %v2788 = vsel %vm2740, %v2786, %v2787
      %v2789 = vrot.slane %v2673, 2
      %v2790 = vsel %vm2740, %v2787, %v2789
      %v2791 = vrot.slane %v2674, 2
      %v2792 = vrot.slane %v2675, 2
      %v2793 = vsel %vm2740, %v2791, %v2792
      %v2794 = vrot.slane %v2676, 2
      %v2795 = vsel %vm2740, %v2792, %v2794
      %v2796 = vrot.slane %v2677, 2
      %v2797 = vrot.slane %v2678, 2
      %v2798 = vsel %vm2740, %v2796, %v2797
      %v2799 = vrot.slane %v2679, 2
      %v2800 = vsel %vm2740, %v2797, %v2799
      %v2801 = vrot.slane %v2680, 2
      %v2802 = vrot.slane %v2681, 2
      %v2803 = vsel %vm2740, %v2801, %v2802
      %v2804 = vrot.slane %v2682, 2
      %v2805 = vsel %vm2740, %v2802, %v2804
      %v2806 = vrot.slane %v2683, 2
      %v2807 = vrot.slane %v2684, 2
      %v2808 = vsel %vm2740, %v2806, %v2807
      %v2809 = vrot.slane %v2685, 2
      %v2810 = vsel %vm2740, %v2807, %v2809
      %v2811 = vrot.slane %v2686, 2
      %v2812 = vrot.slane %v2687, 2
      %v2813 = vsel %vm2740, %v2811, %v2812
      %v2814 = vrot.slane %v2688, 2
      %v2815 = vsel %vm2740, %v2812, %v2814
      %v2816 = vrot.slane %v2689, 2
      %v2817 = vrot.slane %v2690, 2
      %v2818 = vsel %vm2740, %v2816, %v2817
      %v2819 = vrot.slane %v2691, 2
      %v2820 = vsel %vm2740, %v2817, %v2819
      %v2853 = vadd.f32 %v2576, %v2743
      %v2854 = vadd.f32 %v2577, %v2745
      %v2855 = vadd.f32 %v2578, %v2748
      %v2856 = vadd.f32 %v2579, %v2750
      %v2857 = vadd.f32 %v2580, %v2753
      %v2858 = vadd.f32 %v2581, %v2755
      %v2859 = vadd.f32 %v2582, %v2758
      %v2860 = vadd.f32 %v2583, %v2760
      %v2861 = vadd.f32 %v2584, %v2763
      %v2862 = vadd.f32 %v2585, %v2765
      %v2863 = vadd.f32 %v2586, %v2768
      %v2864 = vadd.f32 %v2587, %v2770
      %v2865 = vadd.f32 %v2588, %v2773
      %v2866 = vadd.f32 %v2589, %v2775
      %v2867 = vadd.f32 %v2590, %v2778
      %v2868 = vadd.f32 %v2591, %v2780
      %v2869 = vadd.f32 %v2592, %v2783
      %v2870 = vadd.f32 %v2593, %v2785
      %v2871 = vadd.f32 %v2594, %v2788
      %v2872 = vadd.f32 %v2595, %v2790
      %v2873 = vadd.f32 %v2596, %v2793
      %v2874 = vadd.f32 %v2597, %v2795
      %v2875 = vadd.f32 %v2598, %v2798
      %v2876 = vadd.f32 %v2599, %v2800
      %v2877 = vadd.f32 %v2600, %v2803
      %v2878 = vadd.f32 %v2601, %v2805
      %v2879 = vadd.f32 %v2602, %v2808
      %v2880 = vadd.f32 %v2603, %v2810
      %v2881 = vadd.f32 %v2604, %v2813
      %v2882 = vadd.f32 %v2605, %v2815
      %v2883 = vadd.f32 %v2606, %v2818
      %v2884 = vadd.f32 %v2607, %v2820
      %s2885 = scalar_lea.vmem [#allocation2], 12
      %v2886 = vld [vmem:[%s2885] sm:$0xf]
      %v2887 = vld [vmem:[%s2885 + $0x4] sm:$0xf]
      %v2888 = vld [vmem:[%s2885 + $0xc] sm:$0xf]
      %v2889 = vld [vmem:[%s2885 + $0x10] sm:$0xf]
      %v2890 = vld [vmem:[%s2885 + $0x18] sm:$0xf]
      %v2891 = vld [vmem:[%s2885 + $0x1c] sm:$0xf]
      %v2892 = vld [vmem:[%s2885 + $0x24] sm:$0xf]
      %v2893 = vld [vmem:[%s2885 + $0x28] sm:$0xf]
      %v2894 = vld [vmem:[%s2885 + $0x30] sm:$0xf]
      %v2895 = vld [vmem:[%s2885 + $0x34] sm:$0xf]
      %v2896 = vld [vmem:[%s2885 + $0x3c] sm:$0xf]
      %v2897 = vld [vmem:[%s2885 + $0x40] sm:$0xf]
      %v2898 = vld [vmem:[%s2885 + $0x48] sm:$0xf]
      %v2899 = vld [vmem:[%s2885 + $0x4c] sm:$0xf]
      %v2900 = vld [vmem:[%s2885 + $0x54] sm:$0xf]
      %v2901 = vld [vmem:[%s2885 + $0x58] sm:$0xf]
      %v2902 = vld [vmem:[%s2885 + $0x60] sm:$0xf]
      %v2903 = vld [vmem:[%s2885 + $0x64] sm:$0xf]
      %v2904 = vld [vmem:[%s2885 + $0x6c] sm:$0xf]
      %v2905 = vld [vmem:[%s2885 + $0x70] sm:$0xf]
      %v2906 = vld [vmem:[%s2885 + $0x78] sm:$0xf]
      %v2907 = vld [vmem:[%s2885 + $0x7c] sm:$0xf]
      %v2908 = vld [vmem:[%s2885 + $0x84] sm:$0xf]
      %v2909 = vld [vmem:[%s2885 + $0x88] sm:$0xf]
      %v2910 = vld [vmem:[%s2885 + $0x90] sm:$0xf]
      %v2911 = vld [vmem:[%s2885 + $0x94] sm:$0xf]
      %v2912 = vld [vmem:[%s2885 + $0x9c] sm:$0xf]
      %v2913 = vld [vmem:[%s2885 + $0xa0] sm:$0xf]
      %v2914 = vld [vmem:[%s2885 + $0xa8] sm:$0xf]
      %v2915 = vld [vmem:[%s2885 + $0xac] sm:$0xf]
      %v2916 = vld [vmem:[%s2885 + $0xb4] sm:$0xf]
      %v2917 = vld [vmem:[%s2885 + $0xb8] sm:$0xf]
      %v2918 = vunpack.c.l.bf16 %v2886
      %v2919 = vunpack.c.l.bf16 %v2887
      %v2920 = vunpack.c.l.bf16 %v2888
      %v2921 = vunpack.c.l.bf16 %v2889
      %v2922 = vunpack.c.l.bf16 %v2890
      %v2923 = vunpack.c.l.bf16 %v2891
      %v2924 = vunpack.c.l.bf16 %v2892
      %v2925 = vunpack.c.l.bf16 %v2893
      %v2926 = vunpack.c.l.bf16 %v2894
      %v2927 = vunpack.c.l.bf16 %v2895
      %v2928 = vunpack.c.l.bf16 %v2896
      %v2929 = vunpack.c.l.bf16 %v2897
      %v2930 = vunpack.c.l.bf16 %v2898
      %v2931 = vunpack.c.l.bf16 %v2899
      %v2932 = vunpack.c.l.bf16 %v2900
      %v2933 = vunpack.c.l.bf16 %v2901
      %v2934 = vunpack.c.l.bf16 %v2902
      %v2935 = vunpack.c.l.bf16 %v2903
      %v2936 = vunpack.c.l.bf16 %v2904
      %v2937 = vunpack.c.l.bf16 %v2905
      %v2938 = vunpack.c.l.bf16 %v2906
      %v2939 = vunpack.c.l.bf16 %v2907
      %v2940 = vunpack.c.l.bf16 %v2908
      %v2941 = vunpack.c.l.bf16 %v2909
      %v2942 = vunpack.c.l.bf16 %v2910
      %v2943 = vunpack.c.l.bf16 %v2911
      %v2944 = vunpack.c.l.bf16 %v2912
      %v2945 = vunpack.c.l.bf16 %v2913
      %v2946 = vunpack.c.l.bf16 %v2914
      %v2947 = vunpack.c.l.bf16 %v2915
      %v2948 = vunpack.c.l.bf16 %v2916
      %v2949 = vunpack.c.l.bf16 %v2917
      %v2950 = vlaneseq
      %v2951 = vshrl.u32 %v2950, 7
      %v2952 = vsub.s32 3, %v2951
      %v2953 = vrot.slane %v2197, %v2952
      %v2954 = vmul.f32 %v2918, %v2953
      %v2955 = vmul.f32 %v2919, %v2953
      %v2956 = vmul.f32 %v2920, %v2953
      %v2957 = vmul.f32 %v2921, %v2953
      %v2958 = vmul.f32 %v2922, %v2953
      %v2959 = vmul.f32 %v2923, %v2953
      %v2960 = vmul.f32 %v2924, %v2953
      %v2961 = vmul.f32 %v2925, %v2953
      %v2962 = vmul.f32 %v2926, %v2953
      %v2963 = vmul.f32 %v2927, %v2953
      %v2964 = vmul.f32 %v2928, %v2953
      %v2965 = vmul.f32 %v2929, %v2953
      %v2966 = vmul.f32 %v2930, %v2953
      %v2967 = vmul.f32 %v2931, %v2953
      %v2968 = vmul.f32 %v2932, %v2953
      %v2969 = vmul.f32 %v2933, %v2953
      %v2970 = vmul.f32 %v2934, %v2953
      %v2971 = vmul.f32 %v2935, %v2953
      %v2972 = vmul.f32 %v2936, %v2953
      %v2973 = vmul.f32 %v2937, %v2953
      %v2974 = vmul.f32 %v2938, %v2953
      %v2975 = vmul.f32 %v2939, %v2953
      %v2976 = vmul.f32 %v2940, %v2953
      %v2977 = vmul.f32 %v2941, %v2953
      %v2978 = vmul.f32 %v2942, %v2953
      %v2979 = vmul.f32 %v2943, %v2953
      %v2980 = vmul.f32 %v2944, %v2953
      %v2981 = vmul.f32 %v2945, %v2953
      %v2982 = vmul.f32 %v2946, %v2953
      %v2983 = vmul.f32 %v2947, %v2953
      %v2984 = vmul.f32 %v2948, %v2953
      %v2985 = vmul.f32 %v2949, %v2953
      %v2986 = vadd.f32 %v2853, %v2954
      %v2987 = vadd.f32 %v2854, %v2955
      %v2988 = vadd.f32 %v2855, %v2956
      %v2989 = vadd.f32 %v2856, %v2957
      %v2990 = vadd.f32 %v2857, %v2958
      %v2991 = vadd.f32 %v2858, %v2959
      %v2992 = vadd.f32 %v2859, %v2960
      %v2993 = vadd.f32 %v2860, %v2961
      %v2994 = vadd.f32 %v2861, %v2962
      %v2995 = vadd.f32 %v2862, %v2963
      %v2996 = vadd.f32 %v2863, %v2964
      %v2997 = vadd.f32 %v2864, %v2965
      %v2998 = vadd.f32 %v2865, %v2966
      %v2999 = vadd.f32 %v2866, %v2967
      %v3000 = vadd.f32 %v2867, %v2968
      %v3001 = vadd.f32 %v2868, %v2969
      %v3002 = vadd.f32 %v2869, %v2970
      %v3003 = vadd.f32 %v2870, %v2971
      %v3004 = vadd.f32 %v2871, %v2972
      %v3005 = vadd.f32 %v2872, %v2973
      %v3006 = vadd.f32 %v2873, %v2974
      %v3007 = vadd.f32 %v2874, %v2975
      %v3008 = vadd.f32 %v2875, %v2976
      %v3009 = vadd.f32 %v2876, %v2977
      %v3010 = vadd.f32 %v2877, %v2978
      %v3011 = vadd.f32 %v2878, %v2979
      %v3012 = vadd.f32 %v2879, %v2980
      %v3013 = vadd.f32 %v2880, %v2981
      %v3014 = vadd.f32 %v2881, %v2982
      %v3015 = vadd.f32 %v2882, %v2983
      %v3016 = vadd.f32 %v2883, %v2984
      %v3017 = vadd.f32 %v2884, %v2985
      %v3018 = vld [vmem:[%s2885 + $0x8] sm:$0x1]
      %v3019 = vld [vmem:[%s2885 + $0x14] sm:$0x1]
      %v3020 = vld [vmem:[%s2885 + $0x20] sm:$0x1]
      %v3021 = vld [vmem:[%s2885 + $0x2c] sm:$0x1]
      %v3022 = vld [vmem:[%s2885 + $0x38] sm:$0x1]
      %v3023 = vld [vmem:[%s2885 + $0x44] sm:$0x1]
      %v3024 = vld [vmem:[%s2885 + $0x50] sm:$0x1]
      %v3025 = vld [vmem:[%s2885 + $0x5c] sm:$0x1]
      %v3026 = vld [vmem:[%s2885 + $0x68] sm:$0x1]
      %v3027 = vld [vmem:[%s2885 + $0x74] sm:$0x1]
      %v3028 = vld [vmem:[%s2885 + $0x80] sm:$0x1]
      %v3029 = vld [vmem:[%s2885 + $0x8c] sm:$0x1]
      %v3030 = vld [vmem:[%s2885 + $0x98] sm:$0x1]
      %v3031 = vld [vmem:[%s2885 + $0xa4] sm:$0x1]
      %v3032 = vld [vmem:[%s2885 + $0xb0] sm:$0x1]
      %v3033 = vld [vmem:[%s2885 + $0xbc] sm:$0x1]
      %v3034 = vunpack.c.l.bf16 %v3018
      %v3035 = vunpack.c.l.bf16 %v3019
      %v3036 = vunpack.c.l.bf16 %v3020
      %v3037 = vunpack.c.l.bf16 %v3021
      %v3038 = vunpack.c.l.bf16 %v3022
      %v3039 = vunpack.c.l.bf16 %v3023
      %v3040 = vunpack.c.l.bf16 %v3024
      %v3041 = vunpack.c.l.bf16 %v3025
      %v3042 = vunpack.c.l.bf16 %v3026
      %v3043 = vunpack.c.l.bf16 %v3027
      %v3044 = vunpack.c.l.bf16 %v3028
      %v3045 = vunpack.c.l.bf16 %v3029
      %v3046 = vunpack.c.l.bf16 %v3030
      %v3047 = vunpack.c.l.bf16 %v3031
      %v3048 = vunpack.c.l.bf16 %v3032
      %v3049 = vunpack.c.l.bf16 %v3033
      %v3050 = vlaneseq
      %v3051 = vshrl.u32 %v3050, 7
      %v3052 = vsub.s32 4, %v3051
      %v3053 = vrot.slane %v2197, %v3052
      %v3054 = vmul.f32 %v2918, %v3053
      %v3055 = vmul.f32 %v2919, %v3053
      %v3056 = vmul.f32 %v3034, %v3053
      %v3057 = vmul.f32 %v2920, %v3053
      %v3058 = vmul.f32 %v2921, %v3053
      %v3059 = vmul.f32 %v3035, %v3053
      %v3060 = vmul.f32 %v2922, %v3053
      %v3061 = vmul.f32 %v2923, %v3053
      %v3062 = vmul.f32 %v3036, %v3053
      %v3063 = vmul.f32 %v2924, %v3053
      %v3064 = vmul.f32 %v2925, %v3053
      %v3065 = vmul.f32 %v3037, %v3053
      %v3066 = vmul.f32 %v2926, %v3053
      %v3067 = vmul.f32 %v2927, %v3053
      %v3068 = vmul.f32 %v3038, %v3053
      %v3069 = vmul.f32 %v2928, %v3053
      %v3070 = vmul.f32 %v2929, %v3053
      %v3071 = vmul.f32 %v3039, %v3053
      %v3072 = vmul.f32 %v2930, %v3053
      %v3073 = vmul.f32 %v2931, %v3053
      %v3074 = vmul.f32 %v3040, %v3053
      %v3075 = vmul.f32 %v2932, %v3053
      %v3076 = vmul.f32 %v2933, %v3053
      %v3077 = vmul.f32 %v3041, %v3053
      %v3078 = vmul.f32 %v2934, %v3053
      %v3079 = vmul.f32 %v2935, %v3053
      %v3080 = vmul.f32 %v3042, %v3053
      %v3081 = vmul.f32 %v2936, %v3053
      %v3082 = vmul.f32 %v2937, %v3053
      %v3083 = vmul.f32 %v3043, %v3053
      %v3084 = vmul.f32 %v2938, %v3053
      %v3085 = vmul.f32 %v2939, %v3053
      %v3086 = vmul.f32 %v3044, %v3053
      %v3087 = vmul.f32 %v2940, %v3053
      %v3088 = vmul.f32 %v2941, %v3053
      %v3089 = vmul.f32 %v3045, %v3053
      %v3090 = vmul.f32 %v2942, %v3053
      %v3091 = vmul.f32 %v2943, %v3053
      %v3092 = vmul.f32 %v3046, %v3053
      %v3093 = vmul.f32 %v2944, %v3053
      %v3094 = vmul.f32 %v2945, %v3053
      %v3095 = vmul.f32 %v3047, %v3053
      %v3096 = vmul.f32 %v2946, %v3053
      %v3097 = vmul.f32 %v2947, %v3053
      %v3098 = vmul.f32 %v3048, %v3053
      %v3099 = vmul.f32 %v2948, %v3053
      %v3100 = vmul.f32 %v2949, %v3053
      %v3101 = vmul.f32 %v3049, %v3053
      %v3150 = vrot.slane %v3054, 1
      %v3151 = vrot.slane %v3055, 1
      %v3152 = vsel %vm2463, %v3150, %v3151
      %v3153 = vrot.slane %v3056, 1
      %v3154 = vsel %vm2463, %v3151, %v3153
      %v3155 = vrot.slane %v3057, 1
      %v3156 = vrot.slane %v3058, 1
      %v3157 = vsel %vm2463, %v3155, %v3156
      %v3158 = vrot.slane %v3059, 1
      %v3159 = vsel %vm2463, %v3156, %v3158
      %v3160 = vrot.slane %v3060, 1
      %v3161 = vrot.slane %v3061, 1
      %v3162 = vsel %vm2463, %v3160, %v3161
      %v3163 = vrot.slane %v3062, 1
      %v3164 = vsel %vm2463, %v3161, %v3163
      %v3165 = vrot.slane %v3063, 1
      %v3166 = vrot.slane %v3064, 1
      %v3167 = vsel %vm2463, %v3165, %v3166
      %v3168 = vrot.slane %v3065, 1
      %v3169 = vsel %vm2463, %v3166, %v3168
      %v3170 = vrot.slane %v3066, 1
      %v3171 = vrot.slane %v3067, 1
      %v3172 = vsel %vm2463, %v3170, %v3171
      %v3173 = vrot.slane %v3068, 1
      %v3174 = vsel %vm2463, %v3171, %v3173
      %v3175 = vrot.slane %v3069, 1
      %v3176 = vrot.slane %v3070, 1
      %v3177 = vsel %vm2463, %v3175, %v3176
      %v3178 = vrot.slane %v3071, 1
      %v3179 = vsel %vm2463, %v3176, %v3178
      %v3180 = vrot.slane %v3072, 1
      %v3181 = vrot.slane %v3073, 1
      %v3182 = vsel %vm2463, %v3180, %v3181
      %v3183 = vrot.slane %v3074, 1
      %v3184 = vsel %vm2463, %v3181, %v3183
      %v3185 = vrot.slane %v3075, 1
      %v3186 = vrot.slane %v3076, 1
      %v3187 = vsel %vm2463, %v3185, %v3186
      %v3188 = vrot.slane %v3077, 1
      %v3189 = vsel %vm2463, %v3186, %v3188
      %v3190 = vrot.slane %v3078, 1
      %v3191 = vrot.slane %v3079, 1
      %v3192 = vsel %vm2463, %v3190, %v3191
      %v3193 = vrot.slane %v3080, 1
      %v3194 = vsel %vm2463, %v3191, %v3193
      %v3195 = vrot.slane %v3081, 1
      %v3196 = vrot.slane %v3082, 1
      %v3197 = vsel %vm2463, %v3195, %v3196
      %v3198 = vrot.slane %v3083, 1
      %v3199 = vsel %vm2463, %v3196, %v3198
      %v3200 = vrot.slane %v3084, 1
      %v3201 = vrot.slane %v3085, 1
      %v3202 = vsel %vm2463, %v3200, %v3201
      %v3203 = vrot.slane %v3086, 1
      %v3204 = vsel %vm2463, %v3201, %v3203
      %v3205 = vrot.slane %v3087, 1
      %v3206 = vrot.slane %v3088, 1
      %v3207 = vsel %vm2463, %v3205, %v3206
      %v3208 = vrot.slane %v3089, 1
      %v3209 = vsel %vm2463, %v3206, %v3208
      %v3210 = vrot.slane %v3090, 1
      %v3211 = vrot.slane %v3091, 1
      %v3212 = vsel %vm2463, %v3210, %v3211
      %v3213 = vrot.slane %v3092, 1
      %v3214 = vsel %vm2463, %v3211, %v3213
      %v3215 = vrot.slane %v3093, 1
      %v3216 = vrot.slane %v3094, 1
      %v3217 = vsel %vm2463, %v3215, %v3216
      %v3218 = vrot.slane %v3095, 1
      %v3219 = vsel %vm2463, %v3216, %v3218
      %v3220 = vrot.slane %v3096, 1
      %v3221 = vrot.slane %v3097, 1
      %v3222 = vsel %vm2463, %v3220, %v3221
      %v3223 = vrot.slane %v3098, 1
      %v3224 = vsel %vm2463, %v3221, %v3223
      %v3225 = vrot.slane %v3099, 1
      %v3226 = vrot.slane %v3100, 1
      %v3227 = vsel %vm2463, %v3225, %v3226
      %v3228 = vrot.slane %v3101, 1
      %v3229 = vsel %vm2463, %v3226, %v3228
      %v3262 = vadd.f32 %v2986, %v3152
      %v3263 = vadd.f32 %v2987, %v3154
      %v3264 = vadd.f32 %v2988, %v3157
      %v3265 = vadd.f32 %v2989, %v3159
      %v3266 = vadd.f32 %v2990, %v3162
      %v3267 = vadd.f32 %v2991, %v3164
      %v3268 = vadd.f32 %v2992, %v3167
      %v3269 = vadd.f32 %v2993, %v3169
      %v3270 = vadd.f32 %v2994, %v3172
      %v3271 = vadd.f32 %v2995, %v3174
      %v3272 = vadd.f32 %v2996, %v3177
      %v3273 = vadd.f32 %v2997, %v3179
      %v3274 = vadd.f32 %v2998, %v3182
      %v3275 = vadd.f32 %v2999, %v3184
      %v3276 = vadd.f32 %v3000, %v3187
      %v3277 = vadd.f32 %v3001, %v3189
      %v3278 = vadd.f32 %v3002, %v3192
      %v3279 = vadd.f32 %v3003, %v3194
      %v3280 = vadd.f32 %v3004, %v3197
      %v3281 = vadd.f32 %v3005, %v3199
      %v3282 = vadd.f32 %v3006, %v3202
      %v3283 = vadd.f32 %v3007, %v3204
      %v3284 = vadd.f32 %v3008, %v3207
      %v3285 = vadd.f32 %v3009, %v3209
      %v3286 = vadd.f32 %v3010, %v3212
      %v3287 = vadd.f32 %v3011, %v3214
      %v3288 = vadd.f32 %v3012, %v3217
      %v3289 = vadd.f32 %v3013, %v3219
      %v3290 = vadd.f32 %v3014, %v3222
      %v3291 = vadd.f32 %v3015, %v3224
      %v3292 = vadd.f32 %v3016, %v3227
      %v3293 = vadd.f32 %v3017, %v3229
      %v3294 = vld [vmem:[%s2885] sm:$0xe]
      %v3295 = vld [vmem:[%s2885 + $0xc] sm:$0xe]
      %v3296 = vld [vmem:[%s2885 + $0x18] sm:$0xe]
      %v3297 = vld [vmem:[%s2885 + $0x24] sm:$0xe]
      %v3298 = vld [vmem:[%s2885 + $0x30] sm:$0xe]
      %v3299 = vld [vmem:[%s2885 + $0x3c] sm:$0xe]
      %v3300 = vld [vmem:[%s2885 + $0x48] sm:$0xe]
      %v3301 = vld [vmem:[%s2885 + $0x54] sm:$0xe]
      %v3302 = vld [vmem:[%s2885 + $0x60] sm:$0xe]
      %v3303 = vld [vmem:[%s2885 + $0x6c] sm:$0xe]
      %v3304 = vld [vmem:[%s2885 + $0x78] sm:$0xe]
      %v3305 = vld [vmem:[%s2885 + $0x84] sm:$0xe]
      %v3306 = vld [vmem:[%s2885 + $0x90] sm:$0xe]
      %v3307 = vld [vmem:[%s2885 + $0x9c] sm:$0xe]
      %v3308 = vld [vmem:[%s2885 + $0xa8] sm:$0xe]
      %v3309 = vld [vmem:[%s2885 + $0xb4] sm:$0xe]
      %v3310 = vunpack.c.l.bf16 %v3294
      %v3311 = vunpack.c.l.bf16 %v3295
      %v3312 = vunpack.c.l.bf16 %v3296
      %v3313 = vunpack.c.l.bf16 %v3297
      %v3314 = vunpack.c.l.bf16 %v3298
      %v3315 = vunpack.c.l.bf16 %v3299
      %v3316 = vunpack.c.l.bf16 %v3300
      %v3317 = vunpack.c.l.bf16 %v3301
      %v3318 = vunpack.c.l.bf16 %v3302
      %v3319 = vunpack.c.l.bf16 %v3303
      %v3320 = vunpack.c.l.bf16 %v3304
      %v3321 = vunpack.c.l.bf16 %v3305
      %v3322 = vunpack.c.l.bf16 %v3306
      %v3323 = vunpack.c.l.bf16 %v3307
      %v3324 = vunpack.c.l.bf16 %v3308
      %v3325 = vunpack.c.l.bf16 %v3309
      %v3326 = vlaneseq
      %v3327 = vshrl.u32 %v3326, 7
      %v3328 = vsub.s32 5, %v3327
      %v3329 = vrot.slane %v2197, %v3328
      %v3330 = vmul.f32 %v3310, %v3329
      %v3331 = vmul.f32 %v2919, %v3329
      %v3332 = vmul.f32 %v3034, %v3329
      %v3333 = vmul.f32 %v3311, %v3329
      %v3334 = vmul.f32 %v2921, %v3329
      %v3335 = vmul.f32 %v3035, %v3329
      %v3336 = vmul.f32 %v3312, %v3329
      %v3337 = vmul.f32 %v2923, %v3329
      %v3338 = vmul.f32 %v3036, %v3329
      %v3339 = vmul.f32 %v3313, %v3329
      %v3340 = vmul.f32 %v2925, %v3329
      %v3341 = vmul.f32 %v3037, %v3329
      %v3342 = vmul.f32 %v3314, %v3329
      %v3343 = vmul.f32 %v2927, %v3329
      %v3344 = vmul.f32 %v3038, %v3329
      %v3345 = vmul.f32 %v3315, %v3329
      %v3346 = vmul.f32 %v2929, %v3329
      %v3347 = vmul.f32 %v3039, %v3329
      %v3348 = vmul.f32 %v3316, %v3329
      %v3349 = vmul.f32 %v2931, %v3329
      %v3350 = vmul.f32 %v3040, %v3329
      %v3351 = vmul.f32 %v3317, %v3329
      %v3352 = vmul.f32 %v2933, %v3329
      %v3353 = vmul.f32 %v3041, %v3329
      %v3354 = vmul.f32 %v3318, %v3329
      %v3355 = vmul.f32 %v2935, %v3329
      %v3356 = vmul.f32 %v3042, %v3329
      %v3357 = vmul.f32 %v3319, %v3329
      %v3358 = vmul.f32 %v2937, %v3329
      %v3359 = vmul.f32 %v3043, %v3329
      %v3360 = vmul.f32 %v3320, %v3329
      %v3361 = vmul.f32 %v2939, %v3329
      %v3362 = vmul.f32 %v3044, %v3329
      %v3363 = vmul.f32 %v3321, %v3329
      %v3364 = vmul.f32 %v2941, %v3329
      %v3365 = vmul.f32 %v3045, %v3329
      %v3366 = vmul.f32 %v3322, %v3329
      %v3367 = vmul.f32 %v2943, %v3329
      %v3368 = vmul.f32 %v3046, %v3329
      %v3369 = vmul.f32 %v3323, %v3329
      %v3370 = vmul.f32 %v2945, %v3329
      %v3371 = vmul.f32 %v3047, %v3329
      %v3372 = vmul.f32 %v3324, %v3329
      %v3373 = vmul.f32 %v2947, %v3329
      %v3374 = vmul.f32 %v3048, %v3329
      %v3375 = vmul.f32 %v3325, %v3329
      %v3376 = vmul.f32 %v2949, %v3329
      %v3377 = vmul.f32 %v3049, %v3329
      %v3426 = vrot.slane %v3330, 2
      %v3427 = vrot.slane %v3331, 2
      %v3428 = vsel %vm2740, %v3426, %v3427
      %v3429 = vrot.slane %v3332, 2
      %v3430 = vsel %vm2740, %v3427, %v3429
      %v3431 = vrot.slane %v3333, 2
      %v3432 = vrot.slane %v3334, 2
      %v3433 = vsel %vm2740, %v3431, %v3432
      %v3434 = vrot.slane %v3335, 2
      %v3435 = vsel %vm2740, %v3432, %v3434
      %v3436 = vrot.slane %v3336, 2
      %v3437 = vrot.slane %v3337, 2
      %v3438 = vsel %vm2740, %v3436, %v3437
      %v3439 = vrot.slane %v3338, 2
      %v3440 = vsel %vm2740, %v3437, %v3439
      %v3441 = vrot.slane %v3339, 2
      %v3442 = vrot.slane %v3340, 2
      %v3443 = vsel %vm2740, %v3441, %v3442
      %v3444 = vrot.slane %v3341, 2
      %v3445 = vsel %vm2740, %v3442, %v3444
      %v3446 = vrot.slane %v3342, 2
      %v3447 = vrot.slane %v3343, 2
      %v3448 = vsel %vm2740, %v3446, %v3447
      %v3449 = vrot.slane %v3344, 2
      %v3450 = vsel %vm2740, %v3447, %v3449
      %v3451 = vrot.slane %v3345, 2
      %v3452 = vrot.slane %v3346, 2
      %v3453 = vsel %vm2740, %v3451, %v3452
      %v3454 = vrot.slane %v3347, 2
      %v3455 = vsel %vm2740, %v3452, %v3454
      %v3456 = vrot.slane %v3348, 2
      %v3457 = vrot.slane %v3349, 2
      %v3458 = vsel %vm2740, %v3456, %v3457
      %v3459 = vrot.slane %v3350, 2
      %v3460 = vsel %vm2740, %v3457, %v3459
      %v3461 = vrot.slane %v3351, 2
      %v3462 = vrot.slane %v3352, 2
      %v3463 = vsel %vm2740, %v3461, %v3462
      %v3464 = vrot.slane %v3353, 2
      %v3465 = vsel %vm2740, %v3462, %v3464
      %v3466 = vrot.slane %v3354, 2
      %v3467 = vrot.slane %v3355, 2
      %v3468 = vsel %vm2740, %v3466, %v3467
      %v3469 = vrot.slane %v3356, 2
      %v3470 = vsel %vm2740, %v3467, %v3469
      %v3471 = vrot.slane %v3357, 2
      %v3472 = vrot.slane %v3358, 2
      %v3473 = vsel %vm2740, %v3471, %v3472
      %v3474 = vrot.slane %v3359, 2
      %v3475 = vsel %vm2740, %v3472, %v3474
      %v3476 = vrot.slane %v3360, 2
      %v3477 = vrot.slane %v3361, 2
      %v3478 = vsel %vm2740, %v3476, %v3477
      %v3479 = vrot.slane %v3362, 2
      %v3480 = vsel %vm2740, %v3477, %v3479
      %v3481 = vrot.slane %v3363, 2
      %v3482 = vrot.slane %v3364, 2
      %v3483 = vsel %vm2740, %v3481, %v3482
      %v3484 = vrot.slane %v3365, 2
      %v3485 = vsel %vm2740, %v3482, %v3484
      %v3486 = vrot.slane %v3366, 2
      %v3487 = vrot.slane %v3367, 2
      %v3488 = vsel %vm2740, %v3486, %v3487
      %v3489 = vrot.slane %v3368, 2
      %v3490 = vsel %vm2740, %v3487, %v3489
      %v3491 = vrot.slane %v3369, 2
      %v3492 = vrot.slane %v3370, 2
      %v3493 = vsel %vm2740, %v3491, %v3492
      %v3494 = vrot.slane %v3371, 2
      %v3495 = vsel %vm2740, %v3492, %v3494
      %v3496 = vrot.slane %v3372, 2
      %v3497 = vrot.slane %v3373, 2
      %v3498 = vsel %vm2740, %v3496, %v3497
      %v3499 = vrot.slane %v3374, 2
      %v3500 = vsel %vm2740, %v3497, %v3499
      %v3501 = vrot.slane %v3375, 2
      %v3502 = vrot.slane %v3376, 2
      %v3503 = vsel %vm2740, %v3501, %v3502
      %v3504 = vrot.slane %v3377, 2
      %v3505 = vsel %vm2740, %v3502, %v3504
      %v3538 = vadd.f32 %v3262, %v3428
      %v3539 = vadd.f32 %v3263, %v3430
      %v3540 = vadd.f32 %v3264, %v3433
      %v3541 = vadd.f32 %v3265, %v3435
      %v3542 = vadd.f32 %v3266, %v3438
      %v3543 = vadd.f32 %v3267, %v3440
      %v3544 = vadd.f32 %v3268, %v3443
      %v3545 = vadd.f32 %v3269, %v3445
      %v3546 = vadd.f32 %v3270, %v3448
      %v3547 = vadd.f32 %v3271, %v3450
      %v3548 = vadd.f32 %v3272, %v3453
      %v3549 = vadd.f32 %v3273, %v3455
      %v3550 = vadd.f32 %v3274, %v3458
      %v3551 = vadd.f32 %v3275, %v3460
      %v3552 = vadd.f32 %v3276, %v3463
      %v3553 = vadd.f32 %v3277, %v3465
      %v3554 = vadd.f32 %v3278, %v3468
      %v3555 = vadd.f32 %v3279, %v3470
      %v3556 = vadd.f32 %v3280, %v3473
      %v3557 = vadd.f32 %v3281, %v3475
      %v3558 = vadd.f32 %v3282, %v3478
      %v3559 = vadd.f32 %v3283, %v3480
      %v3560 = vadd.f32 %v3284, %v3483
      %v3561 = vadd.f32 %v3285, %v3485
      %v3562 = vadd.f32 %v3286, %v3488
      %v3563 = vadd.f32 %v3287, %v3490
      %v3564 = vadd.f32 %v3288, %v3493
      %v3565 = vadd.f32 %v3289, %v3495
      %v3566 = vadd.f32 %v3290, %v3498
      %v3567 = vadd.f32 %v3291, %v3500
      %v3568 = vadd.f32 %v3292, %v3503
      %v3569 = vadd.f32 %v3293, %v3505
      %s3570 = scalar_lea.vmem [#allocation2], 24
      %v3571 = vld [vmem:[%s3570] sm:$0xf]
      %v3572 = vld [vmem:[%s3570 + $0x4] sm:$0xf]
      %v3573 = vld [vmem:[%s3570 + $0xc] sm:$0xf]
      %v3574 = vld [vmem:[%s3570 + $0x10] sm:$0xf]
      %v3575 = vld [vmem:[%s3570 + $0x18] sm:$0xf]
      %v3576 = vld [vmem:[%s3570 + $0x1c] sm:$0xf]
      %v3577 = vld [vmem:[%s3570 + $0x24] sm:$0xf]
      %v3578 = vld [vmem:[%s3570 + $0x28] sm:$0xf]
      %v3579 = vld [vmem:[%s3570 + $0x30] sm:$0xf]
      %v3580 = vld [vmem:[%s3570 + $0x34] sm:$0xf]
      %v3581 = vld [vmem:[%s3570 + $0x3c] sm:$0xf]
      %v3582 = vld [vmem:[%s3570 + $0x40] sm:$0xf]
      %v3583 = vld [vmem:[%s3570 + $0x48] sm:$0xf]
      %v3584 = vld [vmem:[%s3570 + $0x4c] sm:$0xf]
      %v3585 = vld [vmem:[%s3570 + $0x54] sm:$0xf]
      %v3586 = vld [vmem:[%s3570 + $0x58] sm:$0xf]
      %v3587 = vld [vmem:[%s3570 + $0x60] sm:$0xf]
      %v3588 = vld [vmem:[%s3570 + $0x64] sm:$0xf]
      %v3589 = vld [vmem:[%s3570 + $0x6c] sm:$0xf]
      %v3590 = vld [vmem:[%s3570 + $0x70] sm:$0xf]
      %v3591 = vld [vmem:[%s3570 + $0x78] sm:$0xf]
      %v3592 = vld [vmem:[%s3570 + $0x7c] sm:$0xf]
      %v3593 = vld [vmem:[%s3570 + $0x84] sm:$0xf]
      %v3594 = vld [vmem:[%s3570 + $0x88] sm:$0xf]
      %v3595 = vld [vmem:[%s3570 + $0x90] sm:$0xf]
      %v3596 = vld [vmem:[%s3570 + $0x94] sm:$0xf]
      %v3597 = vld [vmem:[%s3570 + $0x9c] sm:$0xf]
      %v3598 = vld [vmem:[%s3570 + $0xa0] sm:$0xf]
      %v3599 = vld [vmem:[%s3570 + $0xa8] sm:$0xf]
      %v3600 = vld [vmem:[%s3570 + $0xac] sm:$0xf]
      %v3601 = vld [vmem:[%s3570 + $0xb4] sm:$0xf]
      %v3602 = vld [vmem:[%s3570 + $0xb8] sm:$0xf]
      %v3603 = vunpack.c.l.bf16 %v3571
      %v3604 = vunpack.c.l.bf16 %v3572
      %v3605 = vunpack.c.l.bf16 %v3573
      %v3606 = vunpack.c.l.bf16 %v3574
      %v3607 = vunpack.c.l.bf16 %v3575
      %v3608 = vunpack.c.l.bf16 %v3576
      %v3609 = vunpack.c.l.bf16 %v3577
      %v3610 = vunpack.c.l.bf16 %v3578
      %v3611 = vunpack.c.l.bf16 %v3579
      %v3612 = vunpack.c.l.bf16 %v3580
      %v3613 = vunpack.c.l.bf16 %v3581
      %v3614 = vunpack.c.l.bf16 %v3582
      %v3615 = vunpack.c.l.bf16 %v3583
      %v3616 = vunpack.c.l.bf16 %v3584
      %v3617 = vunpack.c.l.bf16 %v3585
      %v3618 = vunpack.c.l.bf16 %v3586
      %v3619 = vunpack.c.l.bf16 %v3587
      %v3620 = vunpack.c.l.bf16 %v3588
      %v3621 = vunpack.c.l.bf16 %v3589
      %v3622 = vunpack.c.l.bf16 %v3590
      %v3623 = vunpack.c.l.bf16 %v3591
      %v3624 = vunpack.c.l.bf16 %v3592
      %v3625 = vunpack.c.l.bf16 %v3593
      %v3626 = vunpack.c.l.bf16 %v3594
      %v3627 = vunpack.c.l.bf16 %v3595
      %v3628 = vunpack.c.l.bf16 %v3596
      %v3629 = vunpack.c.l.bf16 %v3597
      %v3630 = vunpack.c.l.bf16 %v3598
      %v3631 = vunpack.c.l.bf16 %v3599
      %v3632 = vunpack.c.l.bf16 %v3600
      %v3633 = vunpack.c.l.bf16 %v3601
      %v3634 = vunpack.c.l.bf16 %v3602
      %v3635 = vlaneseq
      %v3636 = vshrl.u32 %v3635, 7
      %v3637 = vsub.s32 6, %v3636
      %v3638 = vrot.slane %v2197, %v3637
      %v3639 = vmul.f32 %v3603, %v3638
      %v3640 = vmul.f32 %v3604, %v3638
      %v3641 = vmul.f32 %v3605, %v3638
      %v3642 = vmul.f32 %v3606, %v3638
      %v3643 = vmul.f32 %v3607, %v3638
      %v3644 = vmul.f32 %v3608, %v3638
      %v3645 = vmul.f32 %v3609, %v3638
      %v3646 = vmul.f32 %v3610, %v3638
      %v3647 = vmul.f32 %v3611, %v3638
      %v3648 = vmul.f32 %v3612, %v3638
      %v3649 = vmul.f32 %v3613, %v3638
      %v3650 = vmul.f32 %v3614, %v3638
      %v3651 = vmul.f32 %v3615, %v3638
      %v3652 = vmul.f32 %v3616, %v3638
      %v3653 = vmul.f32 %v3617, %v3638
      %v3654 = vmul.f32 %v3618, %v3638
      %v3655 = vmul.f32 %v3619, %v3638
      %v3656 = vmul.f32 %v3620, %v3638
      %v3657 = vmul.f32 %v3621, %v3638
      %v3658 = vmul.f32 %v3622, %v3638
      %v3659 = vmul.f32 %v3623, %v3638
      %v3660 = vmul.f32 %v3624, %v3638
      %v3661 = vmul.f32 %v3625, %v3638
      %v3662 = vmul.f32 %v3626, %v3638
      %v3663 = vmul.f32 %v3627, %v3638
      %v3664 = vmul.f32 %v3628, %v3638
      %v3665 = vmul.f32 %v3629, %v3638
      %v3666 = vmul.f32 %v3630, %v3638
      %v3667 = vmul.f32 %v3631, %v3638
      %v3668 = vmul.f32 %v3632, %v3638
      %v3669 = vmul.f32 %v3633, %v3638
      %v3670 = vmul.f32 %v3634, %v3638
      %v3671 = vadd.f32 %v3538, %v3639
      %v3672 = vadd.f32 %v3539, %v3640
      %v3673 = vadd.f32 %v3540, %v3641
      %v3674 = vadd.f32 %v3541, %v3642
      %v3675 = vadd.f32 %v3542, %v3643
      %v3676 = vadd.f32 %v3543, %v3644
      %v3677 = vadd.f32 %v3544, %v3645
      %v3678 = vadd.f32 %v3545, %v3646
      %v3679 = vadd.f32 %v3546, %v3647
      %v3680 = vadd.f32 %v3547, %v3648
      %v3681 = vadd.f32 %v3548, %v3649
      %v3682 = vadd.f32 %v3549, %v3650
      %v3683 = vadd.f32 %v3550, %v3651
      %v3684 = vadd.f32 %v3551, %v3652
      %v3685 = vadd.f32 %v3552, %v3653
      %v3686 = vadd.f32 %v3553, %v3654
      %v3687 = vadd.f32 %v3554, %v3655
      %v3688 = vadd.f32 %v3555, %v3656
      %v3689 = vadd.f32 %v3556, %v3657
      %v3690 = vadd.f32 %v3557, %v3658
      %v3691 = vadd.f32 %v3558, %v3659
      %v3692 = vadd.f32 %v3559, %v3660
      %v3693 = vadd.f32 %v3560, %v3661
      %v3694 = vadd.f32 %v3561, %v3662
      %v3695 = vadd.f32 %v3562, %v3663
      %v3696 = vadd.f32 %v3563, %v3664
      %v3697 = vadd.f32 %v3564, %v3665
      %v3698 = vadd.f32 %v3565, %v3666
      %v3699 = vadd.f32 %v3566, %v3667
      %v3700 = vadd.f32 %v3567, %v3668
      %v3701 = vadd.f32 %v3568, %v3669
      %v3702 = vadd.f32 %v3569, %v3670
      %v3703 = vld [vmem:[%s3570 + $0x8] sm:$0x1]
      %v3704 = vld [vmem:[%s3570 + $0x14] sm:$0x1]
      %v3705 = vld [vmem:[%s3570 + $0x20] sm:$0x1]
      %v3706 = vld [vmem:[%s3570 + $0x2c] sm:$0x1]
      %v3707 = vld [vmem:[%s3570 + $0x38] sm:$0x1]
      %v3708 = vld [vmem:[%s3570 + $0x44] sm:$0x1]
      %v3709 = vld [vmem:[%s3570 + $0x50] sm:$0x1]
      %v3710 = vld [vmem:[%s3570 + $0x5c] sm:$0x1]
      %v3711 = vld [vmem:[%s3570 + $0x68] sm:$0x1]
      %v3712 = vld [vmem:[%s3570 + $0x74] sm:$0x1]
      %v3713 = vld [vmem:[%s3570 + $0x80] sm:$0x1]
      %v3714 = vld [vmem:[%s3570 + $0x8c] sm:$0x1]
      %v3715 = vld [vmem:[%s3570 + $0x98] sm:$0x1]
      %v3716 = vld [vmem:[%s3570 + $0xa4] sm:$0x1]
      %v3717 = vld [vmem:[%s3570 + $0xb0] sm:$0x1]
      %v3718 = vld [vmem:[%s3570 + $0xbc] sm:$0x1]
      %v3719 = vunpack.c.l.bf16 %v3703
      %v3720 = vunpack.c.l.bf16 %v3704
      %v3721 = vunpack.c.l.bf16 %v3705
      %v3722 = vunpack.c.l.bf16 %v3706
      %v3723 = vunpack.c.l.bf16 %v3707
      %v3724 = vunpack.c.l.bf16 %v3708
      %v3725 = vunpack.c.l.bf16 %v3709
      %v3726 = vunpack.c.l.bf16 %v3710
      %v3727 = vunpack.c.l.bf16 %v3711
      %v3728 = vunpack.c.l.bf16 %v3712
      %v3729 = vunpack.c.l.bf16 %v3713
      %v3730 = vunpack.c.l.bf16 %v3714
      %v3731 = vunpack.c.l.bf16 %v3715
      %v3732 = vunpack.c.l.bf16 %v3716
      %v3733 = vunpack.c.l.bf16 %v3717
      %v3734 = vunpack.c.l.bf16 %v3718
      %v3735 = vlaneseq
      %v3736 = vshrl.u32 %v3735, 7
      %v3737 = vsub.s32 7, %v3736
      %v3738 = vrot.slane %v2197, %v3737
      %v3739 = vmul.f32 %v3603, %v3738
      %v3740 = vmul.f32 %v3604, %v3738
      %v3741 = vmul.f32 %v3719, %v3738
      %v3742 = vmul.f32 %v3605, %v3738
      %v3743 = vmul.f32 %v3606, %v3738
      %v3744 = vmul.f32 %v3720, %v3738
      %v3745 = vmul.f32 %v3607, %v3738
      %v3746 = vmul.f32 %v3608, %v3738
      %v3747 = vmul.f32 %v3721, %v3738
      %v3748 = vmul.f32 %v3609, %v3738
      %v3749 = vmul.f32 %v3610, %v3738
      %v3750 = vmul.f32 %v3722, %v3738
      %v3751 = vmul.f32 %v3611, %v3738
      %v3752 = vmul.f32 %v3612, %v3738
      %v3753 = vmul.f32 %v3723, %v3738
      %v3754 = vmul.f32 %v3613, %v3738
      %v3755 = vmul.f32 %v3614, %v3738
      %v3756 = vmul.f32 %v3724, %v3738
      %v3757 = vmul.f32 %v3615, %v3738
      %v3758 = vmul.f32 %v3616, %v3738
      %v3759 = vmul.f32 %v3725, %v3738
      %v3760 = vmul.f32 %v3617, %v3738
      %v3761 = vmul.f32 %v3618, %v3738
      %v3762 = vmul.f32 %v3726, %v3738
      %v3763 = vmul.f32 %v3619, %v3738
      %v3764 = vmul.f32 %v3620, %v3738
      %v3765 = vmul.f32 %v3727, %v3738
      %v3766 = vmul.f32 %v3621, %v3738
      %v3767 = vmul.f32 %v3622, %v3738
      %v3768 = vmul.f32 %v3728, %v3738
      %v3769 = vmul.f32 %v3623, %v3738
      %v3770 = vmul.f32 %v3624, %v3738
      %v3771 = vmul.f32 %v3729, %v3738
      %v3772 = vmul.f32 %v3625, %v3738
      %v3773 = vmul.f32 %v3626, %v3738
      %v3774 = vmul.f32 %v3730, %v3738
      %v3775 = vmul.f32 %v3627, %v3738
      %v3776 = vmul.f32 %v3628, %v3738
      %v3777 = vmul.f32 %v3731, %v3738
      %v3778 = vmul.f32 %v3629, %v3738
      %v3779 = vmul.f32 %v3630, %v3738
      %v3780 = vmul.f32 %v3732, %v3738
      %v3781 = vmul.f32 %v3631, %v3738
      %v3782 = vmul.f32 %v3632, %v3738
      %v3783 = vmul.f32 %v3733, %v3738
      %v3784 = vmul.f32 %v3633, %v3738
      %v3785 = vmul.f32 %v3634, %v3738
      %v3786 = vmul.f32 %v3734, %v3738
      %v3835 = vrot.slane %v3739, 1
      %v3836 = vrot.slane %v3740, 1
      %v3837 = vsel %vm2463, %v3835, %v3836
      %v3838 = vrot.slane %v3741, 1
      %v3839 = vsel %vm2463, %v3836, %v3838
      %v3840 = vrot.slane %v3742, 1
      %v3841 = vrot.slane %v3743, 1
      %v3842 = vsel %vm2463, %v3840, %v3841
      %v3843 = vrot.slane %v3744, 1
      %v3844 = vsel %vm2463, %v3841, %v3843
      %v3845 = vrot.slane %v3745, 1
      %v3846 = vrot.slane %v3746, 1
      %v3847 = vsel %vm2463, %v3845, %v3846
      %v3848 = vrot.slane %v3747, 1
      %v3849 = vsel %vm2463, %v3846, %v3848
      %v3850 = vrot.slane %v3748, 1
      %v3851 = vrot.slane %v3749, 1
      %v3852 = vsel %vm2463, %v3850, %v3851
      %v3853 = vrot.slane %v3750, 1
      %v3854 = vsel %vm2463, %v3851, %v3853
      %v3855 = vrot.slane %v3751, 1
      %v3856 = vrot.slane %v3752, 1
      %v3857 = vsel %vm2463, %v3855, %v3856
      %v3858 = vrot.slane %v3753, 1
      %v3859 = vsel %vm2463, %v3856, %v3858
      %v3860 = vrot.slane %v3754, 1
      %v3861 = vrot.slane %v3755, 1
      %v3862 = vsel %vm2463, %v3860, %v3861
      %v3863 = vrot.slane %v3756, 1
      %v3864 = vsel %vm2463, %v3861, %v3863
      %v3865 = vrot.slane %v3757, 1
      %v3866 = vrot.slane %v3758, 1
      %v3867 = vsel %vm2463, %v3865, %v3866
      %v3868 = vrot.slane %v3759, 1
      %v3869 = vsel %vm2463, %v3866, %v3868
      %v3870 = vrot.slane %v3760, 1
      %v3871 = vrot.slane %v3761, 1
      %v3872 = vsel %vm2463, %v3870, %v3871
      %v3873 = vrot.slane %v3762, 1
      %v3874 = vsel %vm2463, %v3871, %v3873
      %v3875 = vrot.slane %v3763, 1
      %v3876 = vrot.slane %v3764, 1
      %v3877 = vsel %vm2463, %v3875, %v3876
      %v3878 = vrot.slane %v3765, 1
      %v3879 = vsel %vm2463, %v3876, %v3878
      %v3880 = vrot.slane %v3766, 1
      %v3881 = vrot.slane %v3767, 1
      %v3882 = vsel %vm2463, %v3880, %v3881
      %v3883 = vrot.slane %v3768, 1
      %v3884 = vsel %vm2463, %v3881, %v3883
      %v3885 = vrot.slane %v3769, 1
      %v3886 = vrot.slane %v3770, 1
      %v3887 = vsel %vm2463, %v3885, %v3886
      %v3888 = vrot.slane %v3771, 1
      %v3889 = vsel %vm2463, %v3886, %v3888
      %v3890 = vrot.slane %v3772, 1
      %v3891 = vrot.slane %v3773, 1
      %v3892 = vsel %vm2463, %v3890, %v3891
      %v3893 = vrot.slane %v3774, 1
      %v3894 = vsel %vm2463, %v3891, %v3893
      %v3895 = vrot.slane %v3775, 1
      %v3896 = vrot.slane %v3776, 1
      %v3897 = vsel %vm2463, %v3895, %v3896
      %v3898 = vrot.slane %v3777, 1
      %v3899 = vsel %vm2463, %v3896, %v3898
      %v3900 = vrot.slane %v3778, 1
      %v3901 = vrot.slane %v3779, 1
      %v3902 = vsel %vm2463, %v3900, %v3901
      %v3903 = vrot.slane %v3780, 1
      %v3904 = vsel %vm2463, %v3901, %v3903
      %v3905 = vrot.slane %v3781, 1
      %v3906 = vrot.slane %v3782, 1
      %v3907 = vsel %vm2463, %v3905, %v3906
      %v3908 = vrot.slane %v3783, 1
      %v3909 = vsel %vm2463, %v3906, %v3908
      %v3910 = vrot.slane %v3784, 1
      %v3911 = vrot.slane %v3785, 1
      %v3912 = vsel %vm2463, %v3910, %v3911
      %v3913 = vrot.slane %v3786, 1
      %v3914 = vsel %vm2463, %v3911, %v3913
      %v3947 = vadd.f32 %v3671, %v3837
      %v3948 = vadd.f32 %v3672, %v3839
      %v3949 = vadd.f32 %v3673, %v3842
      %v3950 = vadd.f32 %v3674, %v3844
      %v3951 = vadd.f32 %v3675, %v3847
      %v3952 = vadd.f32 %v3676, %v3849
      %v3953 = vadd.f32 %v3677, %v3852
      %v3954 = vadd.f32 %v3678, %v3854
      %v3955 = vadd.f32 %v3679, %v3857
      %v3956 = vadd.f32 %v3680, %v3859
      %v3957 = vadd.f32 %v3681, %v3862
      %v3958 = vadd.f32 %v3682, %v3864
      %v3959 = vadd.f32 %v3683, %v3867
      %v3960 = vadd.f32 %v3684, %v3869
      %v3961 = vadd.f32 %v3685, %v3872
      %v3962 = vadd.f32 %v3686, %v3874
      %v3963 = vadd.f32 %v3687, %v3877
      %v3964 = vadd.f32 %v3688, %v3879
      %v3965 = vadd.f32 %v3689, %v3882
      %v3966 = vadd.f32 %v3690, %v3884
      %v3967 = vadd.f32 %v3691, %v3887
      %v3968 = vadd.f32 %v3692, %v3889
      %v3969 = vadd.f32 %v3693, %v3892
      %v3970 = vadd.f32 %v3694, %v3894
      %v3971 = vadd.f32 %v3695, %v3897
      %v3972 = vadd.f32 %v3696, %v3899
      %v3973 = vadd.f32 %v3697, %v3902
      %v3974 = vadd.f32 %v3698, %v3904
      %v3975 = vadd.f32 %v3699, %v3907
      %v3976 = vadd.f32 %v3700, %v3909
      %v3977 = vadd.f32 %v3701, %v3912
      %v3978 = vadd.f32 %v3702, %v3914
      %v3979 = vld [vmem:[%s3570] sm:$0xe]
      %v3980 = vld [vmem:[%s3570 + $0xc] sm:$0xe]
      %v3981 = vld [vmem:[%s3570 + $0x18] sm:$0xe]
      %v3982 = vld [vmem:[%s3570 + $0x24] sm:$0xe]
      %v3983 = vld [vmem:[%s3570 + $0x30] sm:$0xe]
      %v3984 = vld [vmem:[%s3570 + $0x3c] sm:$0xe]
      %v3985 = vld [vmem:[%s3570 + $0x48] sm:$0xe]
      %v3986 = vld [vmem:[%s3570 + $0x54] sm:$0xe]
      %v3987 = vld [vmem:[%s3570 + $0x60] sm:$0xe]
      %v3988 = vld [vmem:[%s3570 + $0x6c] sm:$0xe]
      %v3989 = vld [vmem:[%s3570 + $0x78] sm:$0xe]
      %v3990 = vld [vmem:[%s3570 + $0x84] sm:$0xe]
      %v3991 = vld [vmem:[%s3570 + $0x90] sm:$0xe]
      %v3992 = vld [vmem:[%s3570 + $0x9c] sm:$0xe]
      %v3993 = vld [vmem:[%s3570 + $0xa8] sm:$0xe]
      %v3994 = vld [vmem:[%s3570 + $0xb4] sm:$0xe]
      %v3995 = vunpack.c.l.bf16 %v3979
      %v3996 = vunpack.c.l.bf16 %v3980
      %v3997 = vunpack.c.l.bf16 %v3981
      %v3998 = vunpack.c.l.bf16 %v3982
      %v3999 = vunpack.c.l.bf16 %v3983
      %v4000 = vunpack.c.l.bf16 %v3984
      %v4001 = vunpack.c.l.bf16 %v3985
      %v4002 = vunpack.c.l.bf16 %v3986
      %v4003 = vunpack.c.l.bf16 %v3987
      %v4004 = vunpack.c.l.bf16 %v3988
      %v4005 = vunpack.c.l.bf16 %v3989
      %v4006 = vunpack.c.l.bf16 %v3990
      %v4007 = vunpack.c.l.bf16 %v3991
      %v4008 = vunpack.c.l.bf16 %v3992
      %v4009 = vunpack.c.l.bf16 %v3993
      %v4010 = vunpack.c.l.bf16 %v3994
      %v4011 = vlaneseq
      %v4012 = vshrl.u32 %v4011, 7
      %v4013 = vsub.s32 0, %v4012
      %v4014 = vrot.slane %v2198, %v4013
      %v4015 = vmul.f32 %v3995, %v4014
      %v4016 = vmul.f32 %v3604, %v4014
      %v4017 = vmul.f32 %v3719, %v4014
      %v4018 = vmul.f32 %v3996, %v4014
      %v4019 = vmul.f32 %v3606, %v4014
      %v4020 = vmul.f32 %v3720, %v4014
      %v4021 = vmul.f32 %v3997, %v4014
      %v4022 = vmul.f32 %v3608, %v4014
      %v4023 = vmul.f32 %v3721, %v4014
      %v4024 = vmul.f32 %v3998, %v4014
      %v4025 = vmul.f32 %v3610, %v4014
      %v4026 = vmul.f32 %v3722, %v4014
      %v4027 = vmul.f32 %v3999, %v4014
      %v4028 = vmul.f32 %v3612, %v4014
      %v4029 = vmul.f32 %v3723, %v4014
      %v4030 = vmul.f32 %v4000, %v4014
      %v4031 = vmul.f32 %v3614, %v4014
      %v4032 = vmul.f32 %v3724, %v4014
      %v4033 = vmul.f32 %v4001, %v4014
      %v4034 = vmul.f32 %v3616, %v4014
      %v4035 = vmul.f32 %v3725, %v4014
      %v4036 = vmul.f32 %v4002, %v4014
      %v4037 = vmul.f32 %v3618, %v4014
      %v4038 = vmul.f32 %v3726, %v4014
      %v4039 = vmul.f32 %v4003, %v4014
      %v4040 = vmul.f32 %v3620, %v4014
      %v4041 = vmul.f32 %v3727, %v4014
      %v4042 = vmul.f32 %v4004, %v4014
      %v4043 = vmul.f32 %v3622, %v4014
      %v4044 = vmul.f32 %v3728, %v4014
      %v4045 = vmul.f32 %v4005, %v4014
      %v4046 = vmul.f32 %v3624, %v4014
      %v4047 = vmul.f32 %v3729, %v4014
      %v4048 = vmul.f32 %v4006, %v4014
      %v4049 = vmul.f32 %v3626, %v4014
      %v4050 = vmul.f32 %v3730, %v4014
      %v4051 = vmul.f32 %v4007, %v4014
      %v4052 = vmul.f32 %v3628, %v4014
      %v4053 = vmul.f32 %v3731, %v4014
      %v4054 = vmul.f32 %v4008, %v4014
      %v4055 = vmul.f32 %v3630, %v4014
      %v4056 = vmul.f32 %v3732, %v4014
      %v4057 = vmul.f32 %v4009, %v4014
      %v4058 = vmul.f32 %v3632, %v4014
      %v4059 = vmul.f32 %v3733, %v4014
      %v4060 = vmul.f32 %v4010, %v4014
      %v4061 = vmul.f32 %v3634, %v4014
      %v4062 = vmul.f32 %v3734, %v4014
      %v4111 = vrot.slane %v4015, 2
      %v4112 = vrot.slane %v4016, 2
      %v4113 = vsel %vm2740, %v4111, %v4112
      %v4114 = vrot.slane %v4017, 2
      %v4115 = vsel %vm2740, %v4112, %v4114
      %v4116 = vrot.slane %v4018, 2
      %v4117 = vrot.slane %v4019, 2
      %v4118 = vsel %vm2740, %v4116, %v4117
      %v4119 = vrot.slane %v4020, 2
      %v4120 = vsel %vm2740, %v4117, %v4119
      %v4121 = vrot.slane %v4021, 2
      %v4122 = vrot.slane %v4022, 2
      %v4123 = vsel %vm2740, %v4121, %v4122
      %v4124 = vrot.slane %v4023, 2
      %v4125 = vsel %vm2740, %v4122, %v4124
      %v4126 = vrot.slane %v4024, 2
      %v4127 = vrot.slane %v4025, 2
      %v4128 = vsel %vm2740, %v4126, %v4127
      %v4129 = vrot.slane %v4026, 2
      %v4130 = vsel %vm2740, %v4127, %v4129
      %v4131 = vrot.slane %v4027, 2
      %v4132 = vrot.slane %v4028, 2
      %v4133 = vsel %vm2740, %v4131, %v4132
      %v4134 = vrot.slane %v4029, 2
      %v4135 = vsel %vm2740, %v4132, %v4134
      %v4136 = vrot.slane %v4030, 2
      %v4137 = vrot.slane %v4031, 2
      %v4138 = vsel %vm2740, %v4136, %v4137
      %v4139 = vrot.slane %v4032, 2
      %v4140 = vsel %vm2740, %v4137, %v4139
      %v4141 = vrot.slane %v4033, 2
      %v4142 = vrot.slane %v4034, 2
      %v4143 = vsel %vm2740, %v4141, %v4142
      %v4144 = vrot.slane %v4035, 2
      %v4145 = vsel %vm2740, %v4142, %v4144
      %v4146 = vrot.slane %v4036, 2
      %v4147 = vrot.slane %v4037, 2
      %v4148 = vsel %vm2740, %v4146, %v4147
      %v4149 = vrot.slane %v4038, 2
      %v4150 = vsel %vm2740, %v4147, %v4149
      %v4151 = vrot.slane %v4039, 2
      %v4152 = vrot.slane %v4040, 2
      %v4153 = vsel %vm2740, %v4151, %v4152
      %v4154 = vrot.slane %v4041, 2
      %v4155 = vsel %vm2740, %v4152, %v4154
      %v4156 = vrot.slane %v4042, 2
      %v4157 = vrot.slane %v4043, 2
      %v4158 = vsel %vm2740, %v4156, %v4157
      %v4159 = vrot.slane %v4044, 2
      %v4160 = vsel %vm2740, %v4157, %v4159
      %v4161 = vrot.slane %v4045, 2
      %v4162 = vrot.slane %v4046, 2
      %v4163 = vsel %vm2740, %v4161, %v4162
      %v4164 = vrot.slane %v4047, 2
      %v4165 = vsel %vm2740, %v4162, %v4164
      %v4166 = vrot.slane %v4048, 2
      %v4167 = vrot.slane %v4049, 2
      %v4168 = vsel %vm2740, %v4166, %v4167
      %v4169 = vrot.slane %v4050, 2
      %v4170 = vsel %vm2740, %v4167, %v4169
      %v4171 = vrot.slane %v4051, 2
      %v4172 = vrot.slane %v4052, 2
      %v4173 = vsel %vm2740, %v4171, %v4172
      %v4174 = vrot.slane %v4053, 2
      %v4175 = vsel %vm2740, %v4172, %v4174
      %v4176 = vrot.slane %v4054, 2
      %v4177 = vrot.slane %v4055, 2
      %v4178 = vsel %vm2740, %v4176, %v4177
      %v4179 = vrot.slane %v4056, 2
      %v4180 = vsel %vm2740, %v4177, %v4179
      %v4181 = vrot.slane %v4057, 2
      %v4182 = vrot.slane %v4058, 2
      %v4183 = vsel %vm2740, %v4181, %v4182
      %v4184 = vrot.slane %v4059, 2
      %v4185 = vsel %vm2740, %v4182, %v4184
      %v4186 = vrot.slane %v4060, 2
      %v4187 = vrot.slane %v4061, 2
      %v4188 = vsel %vm2740, %v4186, %v4187
      %v4189 = vrot.slane %v4062, 2
      %v4190 = vsel %vm2740, %v4187, %v4189
      %v4223 = vadd.f32 %v3947, %v4113
      %v4224 = vadd.f32 %v3948, %v4115
      %v4225 = vadd.f32 %v3949, %v4118
      %v4226 = vadd.f32 %v3950, %v4120
      %v4227 = vadd.f32 %v3951, %v4123
      %v4228 = vadd.f32 %v3952, %v4125
      %v4229 = vadd.f32 %v3953, %v4128
      %v4230 = vadd.f32 %v3954, %v4130
      %v4231 = vadd.f32 %v3955, %v4133
      %v4232 = vadd.f32 %v3956, %v4135
      %v4233 = vadd.f32 %v3957, %v4138
      %v4234 = vadd.f32 %v3958, %v4140
      %v4235 = vadd.f32 %v3959, %v4143
      %v4236 = vadd.f32 %v3960, %v4145
      %v4237 = vadd.f32 %v3961, %v4148
      %v4238 = vadd.f32 %v3962, %v4150
      %v4239 = vadd.f32 %v3963, %v4153
      %v4240 = vadd.f32 %v3964, %v4155
      %v4241 = vadd.f32 %v3965, %v4158
      %v4242 = vadd.f32 %v3966, %v4160
      %v4243 = vadd.f32 %v3967, %v4163
      %v4244 = vadd.f32 %v3968, %v4165
      %v4245 = vadd.f32 %v3969, %v4168
      %v4246 = vadd.f32 %v3970, %v4170
      %v4247 = vadd.f32 %v3971, %v4173
      %v4248 = vadd.f32 %v3972, %v4175
      %v4249 = vadd.f32 %v3973, %v4178
      %v4250 = vadd.f32 %v3974, %v4180
      %v4251 = vadd.f32 %v3975, %v4183
      %v4252 = vadd.f32 %v3976, %v4185
      %v4253 = vadd.f32 %v3977, %v4188
      %v4254 = vadd.f32 %v3978, %v4190
      %v4255 = vld [vmem:[%s4] sm:$0x1]
      %v4257 = vlaneseq
      %v4258 = vshrl.u32 %v4257, 7
      %v4259 = vsub.s32 0, %v4258
      %v4260 = vrot.slane %v4255, %v4259
      %v4262 = vadd.f32 %v4223, %v4260
      %v4263 = vadd.f32 %v4224, %v4260
      %v4264 = vadd.f32 %v4225, %v4260
      %v4265 = vadd.f32 %v4226, %v4260
      %v4266 = vadd.f32 %v4227, %v4260
      %v4267 = vadd.f32 %v4228, %v4260
      %v4268 = vadd.f32 %v4229, %v4260
      %v4269 = vadd.f32 %v4230, %v4260
      %v4270 = vadd.f32 %v4231, %v4260
      %v4271 = vadd.f32 %v4232, %v4260
      %v4272 = vadd.f32 %v4233, %v4260
      %v4273 = vadd.f32 %v4234, %v4260
      %v4274 = vadd.f32 %v4235, %v4260
      %v4275 = vadd.f32 %v4236, %v4260
      %v4276 = vadd.f32 %v4237, %v4260
      %v4277 = vadd.f32 %v4238, %v4260
      %v4278 = vadd.f32 %v4239, %v4260
      %v4279 = vadd.f32 %v4240, %v4260
      %v4280 = vadd.f32 %v4241, %v4260
      %v4281 = vadd.f32 %v4242, %v4260
      %v4282 = vadd.f32 %v4243, %v4260
      %v4283 = vadd.f32 %v4244, %v4260
      %v4284 = vadd.f32 %v4245, %v4260
      %v4285 = vadd.f32 %v4246, %v4260
      %v4286 = vadd.f32 %v4247, %v4260
      %v4287 = vadd.f32 %v4248, %v4260
      %v4288 = vadd.f32 %v4249, %v4260
      %v4289 = vadd.f32 %v4250, %v4260
      %v4290 = vadd.f32 %v4251, %v4260
      %v4291 = vadd.f32 %v4252, %v4260
      %v4292 = vadd.f32 %v4253, %v4260
      %v4293 = vadd.f32 %v4254, %v4260
      %v4294 = vmax.f32 %v4262, 0.0
      %v4295 = vmax.f32 %v4263, 0.0
      %v4296 = vmax.f32 %v4264, 0.0
      %v4297 = vmax.f32 %v4265, 0.0
      %v4298 = vmax.f32 %v4266, 0.0
      %v4299 = vmax.f32 %v4267, 0.0
      %v4300 = vmax.f32 %v4268, 0.0
      %v4301 = vmax.f32 %v4269, 0.0
      %v4302 = vmax.f32 %v4270, 0.0
      %v4303 = vmax.f32 %v4271, 0.0
      %v4304 = vmax.f32 %v4272, 0.0
      %v4305 = vmax.f32 %v4273, 0.0
      %v4306 = vmax.f32 %v4274, 0.0
      %v4307 = vmax.f32 %v4275, 0.0
      %v4308 = vmax.f32 %v4276, 0.0
      %v4309 = vmax.f32 %v4277, 0.0
      %v4310 = vmax.f32 %v4278, 0.0
      %v4311 = vmax.f32 %v4279, 0.0
      %v4312 = vmax.f32 %v4280, 0.0
      %v4313 = vmax.f32 %v4281, 0.0
      %v4314 = vmax.f32 %v4282, 0.0
      %v4315 = vmax.f32 %v4283, 0.0
      %v4316 = vmax.f32 %v4284, 0.0
      %v4317 = vmax.f32 %v4285, 0.0
      %v4318 = vmax.f32 %v4286, 0.0
      %v4319 = vmax.f32 %v4287, 0.0
      %v4320 = vmax.f32 %v4288, 0.0
      %v4321 = vmax.f32 %v4289, 0.0
      %v4322 = vmax.f32 %v4290, 0.0
      %v4323 = vmax.f32 %v4291, 0.0
      %v4324 = vmax.f32 %v4292, 0.0
      %v4325 = vmax.f32 %v4293, 0.0
      %v4326 = vmin.f32 %v4294, 6.0
      %v4327 = vmin.f32 %v4295, 6.0
      %v4328 = vmin.f32 %v4296, 6.0
      %v4329 = vmin.f32 %v4297, 6.0
      %v4330 = vmin.f32 %v4298, 6.0
      %v4331 = vmin.f32 %v4299, 6.0
      %v4332 = vmin.f32 %v4300, 6.0
      %v4333 = vmin.f32 %v4301, 6.0
      %v4334 = vmin.f32 %v4302, 6.0
      %v4335 = vmin.f32 %v4303, 6.0
      %v4336 = vmin.f32 %v4304, 6.0
      %v4337 = vmin.f32 %v4305, 6.0
      %v4338 = vmin.f32 %v4306, 6.0
      %v4339 = vmin.f32 %v4307, 6.0
      %v4340 = vmin.f32 %v4308, 6.0
      %v4341 = vmin.f32 %v4309, 6.0
      %v4342 = vmin.f32 %v4310, 6.0
      %v4343 = vmin.f32 %v4311, 6.0
      %v4344 = vmin.f32 %v4312, 6.0
      %v4345 = vmin.f32 %v4313, 6.0
      %v4346 = vmin.f32 %v4314, 6.0
      %v4347 = vmin.f32 %v4315, 6.0
      %v4348 = vmin.f32 %v4316, 6.0
      %v4349 = vmin.f32 %v4317, 6.0
      %v4350 = vmin.f32 %v4318, 6.0
      %v4351 = vmin.f32 %v4319, 6.0
      %v4352 = vmin.f32 %v4320, 6.0
      %v4353 = vmin.f32 %v4321, 6.0
      %v4354 = vmin.f32 %v4322, 6.0
      %v4355 = vmin.f32 %v4323, 6.0
      %v4356 = vmin.f32 %v4324, 6.0
      %v4357 = vmin.f32 %v4325, 6.0
      %v4358 = vpack.c.bf16 %v4327, %v4326
      %v4359 = vpack.c.bf16 %v4329, %v4328
      %v4360 = vpack.c.bf16 %v4331, %v4330
      %v4361 = vpack.c.bf16 %v4333, %v4332
      %v4362 = vpack.c.bf16 %v4335, %v4334
      %v4363 = vpack.c.bf16 %v4337, %v4336
      %v4364 = vpack.c.bf16 %v4339, %v4338
      %v4365 = vpack.c.bf16 %v4341, %v4340
      %v4366 = vpack.c.bf16 %v4343, %v4342
      %v4367 = vpack.c.bf16 %v4345, %v4344
      %v4368 = vpack.c.bf16 %v4347, %v4346
      %v4369 = vpack.c.bf16 %v4349, %v4348
      %v4370 = vpack.c.bf16 %v4351, %v4350
      %v4371 = vpack.c.bf16 %v4353, %v4352
      %v4372 = vpack.c.bf16 %v4355, %v4354
      %v4373 = vpack.c.bf16 %v4357, %v4356
      %v4374 = vld [vmem:[%s5] sm:$0xf]
      %v4375 = vld [vmem:[%s5 + $0x4] sm:$0xf]
      %v4376 = vld [vmem:[%s5 + $0x8] sm:$0xf]
      %v4377 = vld [vmem:[%s5 + $0xc] sm:$0xf]
      %v4378 = vld [vmem:[%s5 + $0x10] sm:$0xf]
      %v4379 = vld [vmem:[%s5 + $0x14] sm:$0xf]
      %v4380 = vld [vmem:[%s5 + $0x18] sm:$0xf]
      %v4381 = vld [vmem:[%s5 + $0x1c] sm:$0xf]
      %v4382 = vld [vmem:[%s5 + $0x20] sm:$0xf]
      %v4383 = vld [vmem:[%s5 + $0x24] sm:$0xf]
      %v4384 = vld [vmem:[%s5 + $0x28] sm:$0xf]
      %v4385 = vld [vmem:[%s5 + $0x2c] sm:$0xf]
      %v4386 = vld [vmem:[%s5 + $0x30] sm:$0xf]
      %v4387 = vld [vmem:[%s5 + $0x34] sm:$0xf]
      %v4388 = vld [vmem:[%s5 + $0x38] sm:$0xf]
      %v4389 = vld [vmem:[%s5 + $0x3c] sm:$0xf]
      %v4406 = vunpack.c.l.b16 %v4374
      %v4407 = vunpack.c.l.b16 %v4375
      %v4408 = vunpack.c.l.b16 %v4376
      %v4409 = vunpack.c.l.b16 %v4377
      %v4410 = vunpack.c.l.b16 %v4378
      %v4411 = vunpack.c.l.b16 %v4379
      %v4412 = vunpack.c.l.b16 %v4380
      %v4413 = vunpack.c.l.b16 %v4381
      %v4414 = vunpack.c.l.b16 %v4382
      %v4415 = vunpack.c.l.b16 %v4383
      %v4416 = vunpack.c.l.b16 %v4384
      %v4417 = vunpack.c.l.b16 %v4385
      %v4418 = vunpack.c.l.b16 %v4386
      %v4419 = vunpack.c.l.b16 %v4387
      %v4420 = vunpack.c.l.b16 %v4388
      %v4421 = vunpack.c.l.b16 %v4389
      %v4422 = vpack.c.b16 %v4407, %v4406
      %v4423 = vpack.c.b16 %v4409, %v4408
      %v4424 = vpack.c.b16 %v4411, %v4410
      %v4425 = vpack.c.b16 %v4413, %v4412
      %v4426 = vpack.c.b16 %v4415, %v4414
      %v4427 = vpack.c.b16 %v4417, %v4416
      %v4428 = vpack.c.b16 %v4419, %v4418
      %v4429 = vpack.c.b16 %v4421, %v4420
      %4438 = vmatprep.subr.bf16.mxu0 0
      %4439 = vmatpush1.bf16.msra.mxu0 %v4422
      %4440 = vmatprep.subr.bf16.mxu0 0
      %4441 = vmatpush1.bf16.msra.mxu0 %v4423
      %4442 = vmatprep.subr.bf16.mxu0 0
      %4443 = vmatpush1.bf16.msra.mxu0 %v4424
      %4444 = vmatprep.subr.bf16.mxu0 0
      %4445 = vmatpush1.bf16.msra.mxu0 %v4425
      %4446 = vmatprep.subr.bf16.mxu0 0
      %4447 = vmatpush1.bf16.msra.mxu0 %v4426
      %4448 = vmatprep.subr.bf16.mxu0 0
      %4449 = vmatpush1.bf16.msra.mxu0 %v4427
      %4450 = vmatprep.subr.bf16.mxu0 0
      %4451 = vmatpush1.bf16.msra.mxu0 %v4428
      %4452 = vmatprep.subr.bf16.mxu0 0
      %4453 = vmatpush1.bf16.msra.mxu0 %v4429
      %4454 = vmatprep.subr.bf16.mxu0 0
      %4455 = vmatpush1.bf16.msra.mxu0 0
      %4456 = vmatprep.subr.bf16.mxu0 0
      %4457 = vmatpush1.bf16.msra.mxu0 0
      %4458 = vmatprep.subr.bf16.mxu0 0
      %4459 = vmatpush1.bf16.msra.mxu0 0
      %4460 = vmatprep.subr.bf16.mxu0 0
      %4461 = vmatpush1.bf16.msra.mxu0 0
      %4462 = vmatprep.subr.bf16.mxu0 0
      %4463 = vmatpush1.bf16.msra.mxu0 0
      %4464 = vmatprep.subr.bf16.mxu0 0
      %4465 = vmatpush1.bf16.msra.mxu0 0
      %4466 = vmatprep.subr.bf16.mxu0 0
      %4467 = vmatpush1.bf16.msra.mxu0 0
      %4468 = vmatprep.subr.bf16.mxu0 0
      %4469 = vmatpush1.bf16.msra.mxu0 0
      %4470 = vmatprep.mubr.bf16.mxu0 0
      %4471 = vmatmul.mubr.bf16.gmra.mrb[0].mxu0 %v4358
      %v4472 = vpop.f32.mrb[0].mxu0
      %v4473 = vadd.f32 0.0, %v4472
      %v4474 = vpop.f32.mrb[0].mxu0
      %v4475 = vpop.f32.mrb[0].mxu0
      %v4476 = vadd.f32 0.0, %v4475
      %v4477 = vpop.f32.mrb[0].mxu0
      %4478 = vmatprep.mubr.bf16.mxu0 0
      %4479 = vmatmul.mubr.bf16.gmra.mrb[0].mxu0 %v4359
      %v4480 = vpop.f32.mrb[0].mxu0
      %v4481 = vadd.f32 0.0, %v4480
      %v4482 = vpop.f32.mrb[0].mxu0
      %v4483 = vpop.f32.mrb[0].mxu0
      %v4484 = vadd.f32 0.0, %v4483
      %v4485 = vpop.f32.mrb[0].mxu0
      %4486 = vmatprep.mubr.bf16.mxu0 0
      %4487 = vmatmul.mubr.bf16.gmra.mrb[0].mxu0 %v4360
      %v4488 = vpop.f32.mrb[0].mxu0
      %v4489 = vadd.f32 0.0, %v4488
      %v4490 = vpop.f32.mrb[0].mxu0
      %v4491 = vpop.f32.mrb[0].mxu0
      %v4492 = vadd.f32 0.0, %v4491
      %v4493 = vpop.f32.mrb[0].mxu0
      %4494 = vmatprep.mubr.bf16.mxu0 0
      %4495 = vmatmul.mubr.bf16.gmra.mrb[0].mxu0 %v4361
      %v4496 = vpop.f32.mrb[0].mxu0
      %v4497 = vadd.f32 0.0, %v4496
      %v4498 = vpop.f32.mrb[0].mxu0
      %v4499 = vpop.f32.mrb[0].mxu0
      %v4500 = vadd.f32 0.0, %v4499
      %v4501 = vpop.f32.mrb[0].mxu0
      %4502 = vmatprep.mubr.bf16.mxu0 0
      %4503 = vmatmul.mubr.bf16.gmra.mrb[0].mxu0 %v4362
      %v4504 = vpop.f32.mrb[0].mxu0
      %v4505 = vadd.f32 0.0, %v4504
      %v4506 = vpop.f32.mrb[0].mxu0
      %v4507 = vpop.f32.mrb[0].mxu0
      %v4508 = vadd.f32 0.0, %v4507
      %v4509 = vpop.f32.mrb[0].mxu0
      %4510 = vmatprep.mubr.bf16.mxu0 0
      %4511 = vmatmul.mubr.bf16.gmra.mrb[0].mxu0 %v4363
      %v4512 = vpop.f32.mrb[0].mxu0
      %v4513 = vadd.f32 0.0, %v4512
      %v4514 = vpop.f32.mrb[0].mxu0
      %v4515 = vpop.f32.mrb[0].mxu0
      %v4516 = vadd.f32 0.0, %v4515
      %v4517 = vpop.f32.mrb[0].mxu0
      %4518 = vmatprep.mubr.bf16.mxu0 0
      %4519 = vmatmul.mubr.bf16.gmra.mrb[0].mxu0 %v4364
      %v4520 = vpop.f32.mrb[0].mxu0
      %v4521 = vadd.f32 0.0, %v4520
      %v4522 = vpop.f32.mrb[0].mxu0
      %v4523 = vpop.f32.mrb[0].mxu0
      %v4524 = vadd.f32 0.0, %v4523
      %v4525 = vpop.f32.mrb[0].mxu0
      %4526 = vmatprep.mubr.bf16.mxu0 0
      %4527 = vmatmul.mubr.bf16.gmra.mrb[0].mxu0 %v4365
      %v4528 = vpop.f32.mrb[0].mxu0
      %v4529 = vadd.f32 0.0, %v4528
      %v4530 = vpop.f32.mrb[0].mxu0
      %v4531 = vpop.f32.mrb[0].mxu0
      %v4532 = vadd.f32 0.0, %v4531
      %v4533 = vpop.f32.mrb[0].mxu0
      %4534 = vmatprep.mubr.bf16.mxu0 0
      %4535 = vmatmul.mubr.bf16.gmra.mrb[0].mxu0 %v4366
      %v4536 = vpop.f32.mrb[0].mxu0
      %v4537 = vadd.f32 0.0, %v4536
      %v4538 = vpop.f32.mrb[0].mxu0
      %v4539 = vpop.f32.mrb[0].mxu0
      %v4540 = vadd.f32 0.0, %v4539
      %v4541 = vpop.f32.mrb[0].mxu0
      %4542 = vmatprep.mubr.bf16.mxu0 0
      %4543 = vmatmul.mubr.bf16.gmra.mrb[0].mxu0 %v4367
      %v4544 = vpop.f32.mrb[0].mxu0
      %v4545 = vadd.f32 0.0, %v4544
      %v4546 = vpop.f32.mrb[0].mxu0
      %v4547 = vpop.f32.mrb[0].mxu0
      %v4548 = vadd.f32 0.0, %v4547
      %v4549 = vpop.f32.mrb[0].mxu0
      %4550 = vmatprep.mubr.bf16.mxu0 0
      %4551 = vmatmul.mubr.bf16.gmra.mrb[0].mxu0 %v4368
      %v4552 = vpop.f32.mrb[0].mxu0
      %v4553 = vadd.f32 0.0, %v4552
      %v4554 = vpop.f32.mrb[0].mxu0
      %v4555 = vpop.f32.mrb[0].mxu0
      %v4556 = vadd.f32 0.0, %v4555
      %v4557 = vpop.f32.mrb[0].mxu0
      %4558 = vmatprep.mubr.bf16.mxu0 0
      %4559 = vmatmul.mubr.bf16.gmra.mrb[0].mxu0 %v4369
      %v4560 = vpop.f32.mrb[0].mxu0
      %v4561 = vadd.f32 0.0, %v4560
      %v4562 = vpop.f32.mrb[0].mxu0
      %v4563 = vpop.f32.mrb[0].mxu0
      %v4564 = vadd.f32 0.0, %v4563
      %v4565 = vpop.f32.mrb[0].mxu0
      %4566 = vmatprep.mubr.bf16.mxu0 0
      %4567 = vmatmul.mubr.bf16.gmra.mrb[0].mxu0 %v4370
      %v4568 = vpop.f32.mrb[0].mxu0
      %v4569 = vadd.f32 0.0, %v4568
      %v4570 = vpop.f32.mrb[0].mxu0
      %v4571 = vpop.f32.mrb[0].mxu0
      %v4572 = vadd.f32 0.0, %v4571
      %v4573 = vpop.f32.mrb[0].mxu0
      %4574 = vmatprep.mubr.bf16.mxu0 0
      %4575 = vmatmul.mubr.bf16.gmra.mrb[0].mxu0 %v4371
      %v4576 = vpop.f32.mrb[0].mxu0
      %v4577 = vadd.f32 0.0, %v4576
      %v4578 = vpop.f32.mrb[0].mxu0
      %v4579 = vpop.f32.mrb[0].mxu0
      %v4580 = vadd.f32 0.0, %v4579
      %v4581 = vpop.f32.mrb[0].mxu0
      %4582 = vmatprep.mubr.bf16.mxu0 0
      %4583 = vmatmul.mubr.bf16.gmra.mrb[0].mxu0 %v4372
      %v4584 = vpop.f32.mrb[0].mxu0
      %v4585 = vadd.f32 0.0, %v4584
      %v4586 = vpop.f32.mrb[0].mxu0
      %v4587 = vpop.f32.mrb[0].mxu0
      %v4588 = vadd.f32 0.0, %v4587
      %v4589 = vpop.f32.mrb[0].mxu0
      %4590 = vmatprep.mubr.bf16.mxu0 0
      %4591 = vmatmul.mubr.bf16.gmra.mrb[0].mxu0 %v4373
      %v4592 = vpop.f32.mrb[0].mxu0
      %v4593 = vadd.f32 0.0, %v4592
      %v4594 = vpop.f32.mrb[0].mxu0
      %v4595 = vpop.f32.mrb[0].mxu0
      %v4596 = vadd.f32 0.0, %v4595
      %v4597 = vpop.f32.mrb[0].mxu0
      %4598 = vdwg.mxu0
      %v4599 = vld [vmem:[%s6] sm:$0x1]
      %v4601 = vlaneseq
      %v4602 = vshrl.u32 %v4601, 7
      %v4603 = vsub.s32 0, %v4602
      %v4604 = vrot.slane %v4599, %v4603
      %v4606 = vadd.f32 %v4473, %v4604
      %v4607 = vadd.f32 %v4476, %v4604
      %v4608 = vadd.f32 %v4481, %v4604
      %v4609 = vadd.f32 %v4484, %v4604
      %v4610 = vadd.f32 %v4489, %v4604
      %v4611 = vadd.f32 %v4492, %v4604
      %v4612 = vadd.f32 %v4497, %v4604
      %v4613 = vadd.f32 %v4500, %v4604
      %v4614 = vadd.f32 %v4505, %v4604
      %v4615 = vadd.f32 %v4508, %v4604
      %v4616 = vadd.f32 %v4513, %v4604
      %v4617 = vadd.f32 %v4516, %v4604
      %v4618 = vadd.f32 %v4521, %v4604
      %v4619 = vadd.f32 %v4524, %v4604
      %v4620 = vadd.f32 %v4529, %v4604
      %v4621 = vadd.f32 %v4532, %v4604
      %v4622 = vadd.f32 %v4537, %v4604
      %v4623 = vadd.f32 %v4540, %v4604
      %v4624 = vadd.f32 %v4545, %v4604
      %v4625 = vadd.f32 %v4548, %v4604
      %v4626 = vadd.f32 %v4553, %v4604
      %v4627 = vadd.f32 %v4556, %v4604
      %v4628 = vadd.f32 %v4561, %v4604
      %v4629 = vadd.f32 %v4564, %v4604
      %v4630 = vadd.f32 %v4569, %v4604
      %v4631 = vadd.f32 %v4572, %v4604
      %v4632 = vadd.f32 %v4577, %v4604
      %v4633 = vadd.f32 %v4580, %v4604
      %v4634 = vadd.f32 %v4585, %v4604
      %v4635 = vadd.f32 %v4588, %v4604
      %v4636 = vadd.f32 %v4593, %v4604
      %v4637 = vadd.f32 %v4596, %v4604
      %s4638 = sadd.s32 %s359, 1
      %s4639 = smul.u32 %s4638, 2
      %s4640 = smul.addr %s4639, 4
      %s4641 = scalar_lea.vmem %s346, %s4640
      %v4642 = vld [vmem:[%s4641] sm:$0xf]
      %v4643 = vld [vmem:[%s4641 + $0x4] sm:$0xf]
      %v4644 = vld [vmem:[%s4641 + $0x8] sm:$0xf]
      %v4645 = vld [vmem:[%s4641 + $0xc] sm:$0xf]
      %v4646 = vld [vmem:[%s4641 + $0x10] sm:$0xf]
      %v4647 = vld [vmem:[%s4641 + $0x14] sm:$0xf]
      %v4648 = vld [vmem:[%s4641 + $0x18] sm:$0xf]
      %v4649 = vld [vmem:[%s4641 + $0x1c] sm:$0xf]
      %v4650 = vld [vmem:[%s4641 + $0x20] sm:$0xf]
      %v4651 = vld [vmem:[%s4641 + $0x24] sm:$0xf]
      %v4652 = vld [vmem:[%s4641 + $0x28] sm:$0xf]
      %v4653 = vld [vmem:[%s4641 + $0x2c] sm:$0xf]
      %v4654 = vld [vmem:[%s4641 + $0x30] sm:$0xf]
      %v4655 = vld [vmem:[%s4641 + $0x34] sm:$0xf]
      %v4656 = vld [vmem:[%s4641 + $0x38] sm:$0xf]
      %v4657 = vld [vmem:[%s4641 + $0x3c] sm:$0xf]
      %v4658 = vld [vmem:[%s4641 + $0x40] sm:$0xf]
      %v4659 = vld [vmem:[%s4641 + $0x44] sm:$0xf]
      %v4660 = vld [vmem:[%s4641 + $0x48] sm:$0xf]
      %v4661 = vld [vmem:[%s4641 + $0x4c] sm:$0xf]
      %v4662 = vld [vmem:[%s4641 + $0x50] sm:$0xf]
      %v4663 = vld [vmem:[%s4641 + $0x54] sm:$0xf]
      %v4664 = vld [vmem:[%s4641 + $0x58] sm:$0xf]
      %v4665 = vld [vmem:[%s4641 + $0x5c] sm:$0xf]
      %v4666 = vld [vmem:[%s4641 + $0x60] sm:$0xf]
      %v4667 = vld [vmem:[%s4641 + $0x64] sm:$0xf]
      %v4668 = vld [vmem:[%s4641 + $0x68] sm:$0xf]
      %v4669 = vld [vmem:[%s4641 + $0x6c] sm:$0xf]
      %v4670 = vld [vmem:[%s4641 + $0x70] sm:$0xf]
      %v4671 = vld [vmem:[%s4641 + $0x74] sm:$0xf]
      %v4672 = vld [vmem:[%s4641 + $0x78] sm:$0xf]
      %v4673 = vld [vmem:[%s4641 + $0x7c] sm:$0xf]
      %v4674 = vunpack.c.l.bf16 %v4642
      %v4675 = vunpack.c.l.bf16 %v4643
      %v4676 = vunpack.c.l.bf16 %v4644
      %v4677 = vunpack.c.l.bf16 %v4645
      %v4678 = vunpack.c.l.bf16 %v4646
      %v4679 = vunpack.c.l.bf16 %v4647
      %v4680 = vunpack.c.l.bf16 %v4648
      %v4681 = vunpack.c.l.bf16 %v4649
      %v4682 = vunpack.c.l.bf16 %v4650
      %v4683 = vunpack.c.l.bf16 %v4651
      %v4684 = vunpack.c.l.bf16 %v4652
      %v4685 = vunpack.c.l.bf16 %v4653
      %v4686 = vunpack.c.l.bf16 %v4654
      %v4687 = vunpack.c.l.bf16 %v4655
      %v4688 = vunpack.c.l.bf16 %v4656
      %v4689 = vunpack.c.l.bf16 %v4657
      %v4690 = vunpack.c.l.bf16 %v4658
      %v4691 = vunpack.c.l.bf16 %v4659
      %v4692 = vunpack.c.l.bf16 %v4660
      %v4693 = vunpack.c.l.bf16 %v4661
      %v4694 = vunpack.c.l.bf16 %v4662
      %v4695 = vunpack.c.l.bf16 %v4663
      %v4696 = vunpack.c.l.bf16 %v4664
      %v4697 = vunpack.c.l.bf16 %v4665
      %v4698 = vunpack.c.l.bf16 %v4666
      %v4699 = vunpack.c.l.bf16 %v4667
      %v4700 = vunpack.c.l.bf16 %v4668
      %v4701 = vunpack.c.l.bf16 %v4669
      %v4702 = vunpack.c.l.bf16 %v4670
      %v4703 = vunpack.c.l.bf16 %v4671
      %v4704 = vunpack.c.l.bf16 %v4672
      %v4705 = vunpack.c.l.bf16 %v4673
      %v4706 = vld [vmem:[%s7] sm:$0x1]
      %v4707 = vunpack.c.l.bf16 %v4706
      %4709 = vset.pattern.permute.xlu0 0
      %4710 = vperm.xlu0 %4709, %v4674
      %v4711 = vpop.permute.xlu0 %4710
      %4714 = vset.pattern.permute.xlu0 0
      %4715 = vperm.xlu0 %4714, %v4675
      %v4716 = vpop.permute.xlu0 %4715
      %4719 = vset.pattern.permute.xlu0 0
      %4720 = vperm.xlu0 %4719, %v4676
      %v4721 = vpop.permute.xlu0 %4720
      %4724 = vset.pattern.permute.xlu0 0
      %4725 = vperm.xlu0 %4724, %v4677
      %v4726 = vpop.permute.xlu0 %4725
      %4729 = vset.pattern.permute.xlu0 0
      %4730 = vperm.xlu0 %4729, %v4678
      %v4731 = vpop.permute.xlu0 %4730
      %4734 = vset.pattern.permute.xlu0 0
      %4735 = vperm.xlu0 %4734, %v4679
      %v4736 = vpop.permute.xlu0 %4735
      %4739 = vset.pattern.permute.xlu0 0
      %4740 = vperm.xlu0 %4739, %v4680
      %v4741 = vpop.permute.xlu0 %4740
      %4744 = vset.pattern.permute.xlu0 0
      %4745 = vperm.xlu0 %4744, %v4681
      %v4746 = vpop.permute.xlu0 %4745
      %4749 = vset.pattern.permute.xlu0 0
      %4750 = vperm.xlu0 %4749, %v4682
      %v4751 = vpop.permute.xlu0 %4750
      %4754 = vset.pattern.permute.xlu0 0
      %4755 = vperm.xlu0 %4754, %v4683
      %v4756 = vpop.permute.xlu0 %4755
      %4759 = vset.pattern.permute.xlu0 0
      %4760 = vperm.xlu0 %4759, %v4684
      %v4761 = vpop.permute.xlu0 %4760
      %4764 = vset.pattern.permute.xlu0 0
      %4765 = vperm.xlu0 %4764, %v4685
      %v4766 = vpop.permute.xlu0 %4765
      %4769 = vset.pattern.permute.xlu0 0
      %4770 = vperm.xlu0 %4769, %v4686
      %v4771 = vpop.permute.xlu0 %4770
      %4774 = vset.pattern.permute.xlu0 0
      %4775 = vperm.xlu0 %4774, %v4687
      %v4776 = vpop.permute.xlu0 %4775
      %4779 = vset.pattern.permute.xlu0 0
      %4780 = vperm.xlu0 %4779, %v4688
      %v4781 = vpop.permute.xlu0 %4780
      %4784 = vset.pattern.permute.xlu0 0
      %4785 = vperm.xlu0 %4784, %v4689
      %v4786 = vpop.permute.xlu0 %4785
      %4789 = vset.pattern.permute.xlu0 0
      %4790 = vperm.xlu0 %4789, %v4690
      %v4791 = vpop.permute.xlu0 %4790
      %4794 = vset.pattern.permute.xlu0 0
      %4795 = vperm.xlu0 %4794, %v4691
      %v4796 = vpop.permute.xlu0 %4795
      %4799 = vset.pattern.permute.xlu0 0
      %4800 = vperm.xlu0 %4799, %v4692
      %v4801 = vpop.permute.xlu0 %4800
      %4804 = vset.pattern.permute.xlu0 0
      %4805 = vperm.xlu0 %4804, %v4693
      %v4806 = vpop.permute.xlu0 %4805
      %4809 = vset.pattern.permute.xlu0 0
      %4810 = vperm.xlu0 %4809, %v4694
      %v4811 = vpop.permute.xlu0 %4810
      %4814 = vset.pattern.permute.xlu0 0
      %4815 = vperm.xlu0 %4814, %v4695
      %v4816 = vpop.permute.xlu0 %4815
      %4819 = vset.pattern.permute.xlu0 0
      %4820 = vperm.xlu0 %4819, %v4696
      %v4821 = vpop.permute.xlu0 %4820
      %4824 = vset.pattern.permute.xlu0 0
      %4825 = vperm.xlu0 %4824, %v4697
      %v4826 = vpop.permute.xlu0 %4825
      %4829 = vset.pattern.permute.xlu0 0
      %4830 = vperm.xlu0 %4829, %v4698
      %v4831 = vpop.permute.xlu0 %4830
      %4834 = vset.pattern.permute.xlu0 0
      %4835 = vperm.xlu0 %4834, %v4699
      %v4836 = vpop.permute.xlu0 %4835
      %4839 = vset.pattern.permute.xlu0 0
      %4840 = vperm.xlu0 %4839, %v4700
      %v4841 = vpop.permute.xlu0 %4840
      %4844 = vset.pattern.permute.xlu0 0
      %4845 = vperm.xlu0 %4844, %v4701
      %v4846 = vpop.permute.xlu0 %4845
      %4849 = vset.pattern.permute.xlu0 0
      %4850 = vperm.xlu0 %4849, %v4702
      %v4851 = vpop.permute.xlu0 %4850
      %4854 = vset.pattern.permute.xlu0 0
      %4855 = vperm.xlu0 %4854, %v4703
      %v4856 = vpop.permute.xlu0 %4855
      %4859 = vset.pattern.permute.xlu0 0
      %4860 = vperm.xlu0 %4859, %v4704
      %v4861 = vpop.permute.xlu0 %4860
      %4864 = vset.pattern.permute.xlu0 0
      %4865 = vperm.xlu0 %4864, %v4705
      %v4866 = vpop.permute.xlu0 %4865
      %v4868 = vlaneseq
      %v4869 = vshrl.u32 %v4868, 7
      %v4870 = vsub.s32 0, %v4869
      %v4871 = vrot.slane %v4707, %v4870
      %v4872 = vmul.f32 %v4711, %v4871
      %v4873 = vmul.f32 %v4716, %v4871
      %v4874 = vmul.f32 %v4721, %v4871
      %v4875 = vmul.f32 %v4726, %v4871
      %v4876 = vmul.f32 %v4731, %v4871
      %v4877 = vmul.f32 %v4736, %v4871
      %v4878 = vmul.f32 %v4741, %v4871
      %v4879 = vmul.f32 %v4746, %v4871
      %v4880 = vmul.f32 %v4751, %v4871
      %v4881 = vmul.f32 %v4756, %v4871
      %v4882 = vmul.f32 %v4761, %v4871
      %v4883 = vmul.f32 %v4766, %v4871
      %v4884 = vmul.f32 %v4771, %v4871
      %v4885 = vmul.f32 %v4776, %v4871
      %v4886 = vmul.f32 %v4781, %v4871
      %v4887 = vmul.f32 %v4786, %v4871
      %v4888 = vmul.f32 %v4791, %v4871
      %v4889 = vmul.f32 %v4796, %v4871
      %v4890 = vmul.f32 %v4801, %v4871
      %v4891 = vmul.f32 %v4806, %v4871
      %v4892 = vmul.f32 %v4811, %v4871
      %v4893 = vmul.f32 %v4816, %v4871
      %v4894 = vmul.f32 %v4821, %v4871
      %v4895 = vmul.f32 %v4826, %v4871
      %v4896 = vmul.f32 %v4831, %v4871
      %v4897 = vmul.f32 %v4836, %v4871
      %v4898 = vmul.f32 %v4841, %v4871
      %v4899 = vmul.f32 %v4846, %v4871
      %v4900 = vmul.f32 %v4851, %v4871
      %v4901 = vmul.f32 %v4856, %v4871
      %v4902 = vmul.f32 %v4861, %v4871
      %v4903 = vmul.f32 %v4866, %v4871
      %v4904 = vadd.f32 %v4872, 0.0
      %v4905 = vadd.f32 %v4873, 0.0
      %v4906 = vadd.f32 %v4874, 0.0
      %v4907 = vadd.f32 %v4875, 0.0
      %v4908 = vadd.f32 %v4876, 0.0
      %v4909 = vadd.f32 %v4877, 0.0
      %v4910 = vadd.f32 %v4878, 0.0
      %v4911 = vadd.f32 %v4879, 0.0
      %v4912 = vadd.f32 %v4880, 0.0
      %v4913 = vadd.f32 %v4881, 0.0
      %v4914 = vadd.f32 %v4882, 0.0
      %v4915 = vadd.f32 %v4883, 0.0
      %v4916 = vadd.f32 %v4884, 0.0
      %v4917 = vadd.f32 %v4885, 0.0
      %v4918 = vadd.f32 %v4886, 0.0
      %v4919 = vadd.f32 %v4887, 0.0
      %v4920 = vadd.f32 %v4888, 0.0
      %v4921 = vadd.f32 %v4889, 0.0
      %v4922 = vadd.f32 %v4890, 0.0
      %v4923 = vadd.f32 %v4891, 0.0
      %v4924 = vadd.f32 %v4892, 0.0
      %v4925 = vadd.f32 %v4893, 0.0
      %v4926 = vadd.f32 %v4894, 0.0
      %v4927 = vadd.f32 %v4895, 0.0
      %v4928 = vadd.f32 %v4896, 0.0
      %v4929 = vadd.f32 %v4897, 0.0
      %v4930 = vadd.f32 %v4898, 0.0
      %v4931 = vadd.f32 %v4899, 0.0
      %v4932 = vadd.f32 %v4900, 0.0
      %v4933 = vadd.f32 %v4901, 0.0
      %v4934 = vadd.f32 %v4902, 0.0
      %v4935 = vadd.f32 %v4903, 0.0
      %4936 = vset.pattern.permute.xlu0 1
      %4937 = vperm.xlu0 %4936, %v4674
      %v4938 = vpop.permute.xlu0 %4937
      %4940 = vset.pattern.permute.xlu0 1
      %4941 = vperm.xlu0 %4940, %v4675
      %v4942 = vpop.permute.xlu0 %4941
      %4944 = vset.pattern.permute.xlu0 1
      %4945 = vperm.xlu0 %4944, %v4676
      %v4946 = vpop.permute.xlu0 %4945
      %4948 = vset.pattern.permute.xlu0 1
      %4949 = vperm.xlu0 %4948, %v4677
      %v4950 = vpop.permute.xlu0 %4949
      %4952 = vset.pattern.permute.xlu0 1
      %4953 = vperm.xlu0 %4952, %v4678
      %v4954 = vpop.permute.xlu0 %4953
      %4956 = vset.pattern.permute.xlu0 1
      %4957 = vperm.xlu0 %4956, %v4679
      %v4958 = vpop.permute.xlu0 %4957
      %4960 = vset.pattern.permute.xlu0 1
      %4961 = vperm.xlu0 %4960, %v4680
      %v4962 = vpop.permute.xlu0 %4961
      %4964 = vset.pattern.permute.xlu0 1
      %4965 = vperm.xlu0 %4964, %v4681
      %v4966 = vpop.permute.xlu0 %4965
      %4968 = vset.pattern.permute.xlu0 1
      %4969 = vperm.xlu0 %4968, %v4682
      %v4970 = vpop.permute.xlu0 %4969
      %4972 = vset.pattern.permute.xlu0 1
      %4973 = vperm.xlu0 %4972, %v4683
      %v4974 = vpop.permute.xlu0 %4973
      %4976 = vset.pattern.permute.xlu0 1
      %4977 = vperm.xlu0 %4976, %v4684
      %v4978 = vpop.permute.xlu0 %4977
      %4980 = vset.pattern.permute.xlu0 1
      %4981 = vperm.xlu0 %4980, %v4685
      %v4982 = vpop.permute.xlu0 %4981
      %4984 = vset.pattern.permute.xlu0 1
      %4985 = vperm.xlu0 %4984, %v4686
      %v4986 = vpop.permute.xlu0 %4985
      %4988 = vset.pattern.permute.xlu0 1
      %4989 = vperm.xlu0 %4988, %v4687
      %v4990 = vpop.permute.xlu0 %4989
      %4992 = vset.pattern.permute.xlu0 1
      %4993 = vperm.xlu0 %4992, %v4688
      %v4994 = vpop.permute.xlu0 %4993
      %4996 = vset.pattern.permute.xlu0 1
      %4997 = vperm.xlu0 %4996, %v4689
      %v4998 = vpop.permute.xlu0 %4997
      %5000 = vset.pattern.permute.xlu0 1
      %5001 = vperm.xlu0 %5000, %v4690
      %v5002 = vpop.permute.xlu0 %5001
      %5004 = vset.pattern.permute.xlu0 1
      %5005 = vperm.xlu0 %5004, %v4691
      %v5006 = vpop.permute.xlu0 %5005
      %5008 = vset.pattern.permute.xlu0 1
      %5009 = vperm.xlu0 %5008, %v4692
      %v5010 = vpop.permute.xlu0 %5009
      %5012 = vset.pattern.permute.xlu0 1
      %5013 = vperm.xlu0 %5012, %v4693
      %v5014 = vpop.permute.xlu0 %5013
      %5016 = vset.pattern.permute.xlu0 1
      %5017 = vperm.xlu0 %5016, %v4694
      %v5018 = vpop.permute.xlu0 %5017
      %5020 = vset.pattern.permute.xlu0 1
      %5021 = vperm.xlu0 %5020, %v4695
      %v5022 = vpop.permute.xlu0 %5021
      %5024 = vset.pattern.permute.xlu0 1
      %5025 = vperm.xlu0 %5024, %v4696
      %v5026 = vpop.permute.xlu0 %5025
      %5028 = vset.pattern.permute.xlu0 1
      %5029 = vperm.xlu0 %5028, %v4697
      %v5030 = vpop.permute.xlu0 %5029
      %5032 = vset.pattern.permute.xlu0 1
      %5033 = vperm.xlu0 %5032, %v4698
      %v5034 = vpop.permute.xlu0 %5033
      %5036 = vset.pattern.permute.xlu0 1
      %5037 = vperm.xlu0 %5036, %v4699
      %v5038 = vpop.permute.xlu0 %5037
      %5040 = vset.pattern.permute.xlu0 1
      %5041 = vperm.xlu0 %5040, %v4700
      %v5042 = vpop.permute.xlu0 %5041
      %5044 = vset.pattern.permute.xlu0 1
      %5045 = vperm.xlu0 %5044, %v4701
      %v5046 = vpop.permute.xlu0 %5045
      %5048 = vset.pattern.permute.xlu0 1
      %5049 = vperm.xlu0 %5048, %v4702
      %v5050 = vpop.permute.xlu0 %5049
      %5052 = vset.pattern.permute.xlu0 1
      %5053 = vperm.xlu0 %5052, %v4703
      %v5054 = vpop.permute.xlu0 %5053
      %5056 = vset.pattern.permute.xlu0 1
      %5057 = vperm.xlu0 %5056, %v4704
      %v5058 = vpop.permute.xlu0 %5057
      %5060 = vset.pattern.permute.xlu0 1
      %5061 = vperm.xlu0 %5060, %v4705
      %v5062 = vpop.permute.xlu0 %5061
      %v5064 = vlaneseq
      %v5065 = vshrl.u32 %v5064, 7
      %v5066 = vsub.s32 1, %v5065
      %v5067 = vrot.slane %v4707, %v5066
      %v5068 = vmul.f32 %v4938, %v5067
      %v5069 = vmul.f32 %v4942, %v5067
      %v5070 = vmul.f32 %v4946, %v5067
      %v5071 = vmul.f32 %v4950, %v5067
      %v5072 = vmul.f32 %v4954, %v5067
      %v5073 = vmul.f32 %v4958, %v5067
      %v5074 = vmul.f32 %v4962, %v5067
      %v5075 = vmul.f32 %v4966, %v5067
      %v5076 = vmul.f32 %v4970, %v5067
      %v5077 = vmul.f32 %v4974, %v5067
      %v5078 = vmul.f32 %v4978, %v5067
      %v5079 = vmul.f32 %v4982, %v5067
      %v5080 = vmul.f32 %v4986, %v5067
      %v5081 = vmul.f32 %v4990, %v5067
      %v5082 = vmul.f32 %v4994, %v5067
      %v5083 = vmul.f32 %v4998, %v5067
      %v5084 = vmul.f32 %v5002, %v5067
      %v5085 = vmul.f32 %v5006, %v5067
      %v5086 = vmul.f32 %v5010, %v5067
      %v5087 = vmul.f32 %v5014, %v5067
      %v5088 = vmul.f32 %v5018, %v5067
      %v5089 = vmul.f32 %v5022, %v5067
      %v5090 = vmul.f32 %v5026, %v5067
      %v5091 = vmul.f32 %v5030, %v5067
      %v5092 = vmul.f32 %v5034, %v5067
      %v5093 = vmul.f32 %v5038, %v5067
      %v5094 = vmul.f32 %v5042, %v5067
      %v5095 = vmul.f32 %v5046, %v5067
      %v5096 = vmul.f32 %v5050, %v5067
      %v5097 = vmul.f32 %v5054, %v5067
      %v5098 = vmul.f32 %v5058, %v5067
      %v5099 = vmul.f32 %v5062, %v5067
      %v5100 = vadd.f32 %v4904, %v5068
      %v5101 = vadd.f32 %v4905, %v5069
      %v5102 = vadd.f32 %v4906, %v5070
      %v5103 = vadd.f32 %v4907, %v5071
      %v5104 = vadd.f32 %v4908, %v5072
      %v5105 = vadd.f32 %v4909, %v5073
      %v5106 = vadd.f32 %v4910, %v5074
      %v5107 = vadd.f32 %v4911, %v5075
      %v5108 = vadd.f32 %v4912, %v5076
      %v5109 = vadd.f32 %v4913, %v5077
      %v5110 = vadd.f32 %v4914, %v5078
      %v5111 = vadd.f32 %v4915, %v5079
      %v5112 = vadd.f32 %v4916, %v5080
      %v5113 = vadd.f32 %v4917, %v5081
      %v5114 = vadd.f32 %v4918, %v5082
      %v5115 = vadd.f32 %v4919, %v5083
      %v5116 = vadd.f32 %v4920, %v5084
      %v5117 = vadd.f32 %v4921, %v5085
      %v5118 = vadd.f32 %v4922, %v5086
      %v5119 = vadd.f32 %v4923, %v5087
      %v5120 = vadd.f32 %v4924, %v5088
      %v5121 = vadd.f32 %v4925, %v5089
      %v5122 = vadd.f32 %v4926, %v5090
      %v5123 = vadd.f32 %v4927, %v5091
      %v5124 = vadd.f32 %v4928, %v5092
      %v5125 = vadd.f32 %v4929, %v5093
      %v5126 = vadd.f32 %v4930, %v5094
      %v5127 = vadd.f32 %v4931, %v5095
      %v5128 = vadd.f32 %v4932, %v5096
      %v5129 = vadd.f32 %v4933, %v5097
      %v5130 = vadd.f32 %v4934, %v5098
      %v5131 = vadd.f32 %v4935, %v5099
      %v5132 = vld [vmem:[%s7] sm:$0x2]
      %v5133 = vunpack.c.l.bf16 %v5132
      %5134 = vset.pattern.permute.xlu0 2
      %5135 = vperm.xlu0 %5134, %v4674
      %v5136 = vpop.permute.xlu0 %5135
      %5138 = vset.pattern.permute.xlu0 2
      %5139 = vperm.xlu0 %5138, %v4675
      %v5140 = vpop.permute.xlu0 %5139
      %5142 = vset.pattern.permute.xlu0 2
      %5143 = vperm.xlu0 %5142, %v4676
      %v5144 = vpop.permute.xlu0 %5143
      %5146 = vset.pattern.permute.xlu0 2
      %5147 = vperm.xlu0 %5146, %v4677
      %v5148 = vpop.permute.xlu0 %5147
      %5150 = vset.pattern.permute.xlu0 2
      %5151 = vperm.xlu0 %5150, %v4678
      %v5152 = vpop.permute.xlu0 %5151
      %5154 = vset.pattern.permute.xlu0 2
      %5155 = vperm.xlu0 %5154, %v4679
      %v5156 = vpop.permute.xlu0 %5155
      %5158 = vset.pattern.permute.xlu0 2
      %5159 = vperm.xlu0 %5158, %v4680
      %v5160 = vpop.permute.xlu0 %5159
      %5162 = vset.pattern.permute.xlu0 2
      %5163 = vperm.xlu0 %5162, %v4681
      %v5164 = vpop.permute.xlu0 %5163
      %5166 = vset.pattern.permute.xlu0 2
      %5167 = vperm.xlu0 %5166, %v4682
      %v5168 = vpop.permute.xlu0 %5167
      %5170 = vset.pattern.permute.xlu0 2
      %5171 = vperm.xlu0 %5170, %v4683
      %v5172 = vpop.permute.xlu0 %5171
      %5174 = vset.pattern.permute.xlu0 2
      %5175 = vperm.xlu0 %5174, %v4684
      %v5176 = vpop.permute.xlu0 %5175
      %5178 = vset.pattern.permute.xlu0 2
      %5179 = vperm.xlu0 %5178, %v4685
      %v5180 = vpop.permute.xlu0 %5179
      %5182 = vset.pattern.permute.xlu0 2
      %5183 = vperm.xlu0 %5182, %v4686
      %v5184 = vpop.permute.xlu0 %5183
      %5186 = vset.pattern.permute.xlu0 2
      %5187 = vperm.xlu0 %5186, %v4687
      %v5188 = vpop.permute.xlu0 %5187
      %5190 = vset.pattern.permute.xlu0 2
      %5191 = vperm.xlu0 %5190, %v4688
      %v5192 = vpop.permute.xlu0 %5191
      %5194 = vset.pattern.permute.xlu0 2
      %5195 = vperm.xlu0 %5194, %v4689
      %v5196 = vpop.permute.xlu0 %5195
      %5198 = vset.pattern.permute.xlu0 2
      %5199 = vperm.xlu0 %5198, %v4690
      %v5200 = vpop.permute.xlu0 %5199
      %5202 = vset.pattern.permute.xlu0 2
      %5203 = vperm.xlu0 %5202, %v4691
      %v5204 = vpop.permute.xlu0 %5203
      %5206 = vset.pattern.permute.xlu0 2
      %5207 = vperm.xlu0 %5206, %v4692
      %v5208 = vpop.permute.xlu0 %5207
      %5210 = vset.pattern.permute.xlu0 2
      %5211 = vperm.xlu0 %5210, %v4693
      %v5212 = vpop.permute.xlu0 %5211
      %5214 = vset.pattern.permute.xlu0 2
      %5215 = vperm.xlu0 %5214, %v4694
      %v5216 = vpop.permute.xlu0 %5215
      %5218 = vset.pattern.permute.xlu0 2
      %5219 = vperm.xlu0 %5218, %v4695
      %v5220 = vpop.permute.xlu0 %5219
      %5222 = vset.pattern.permute.xlu0 2
      %5223 = vperm.xlu0 %5222, %v4696
      %v5224 = vpop.permute.xlu0 %5223
      %5226 = vset.pattern.permute.xlu0 2
      %5227 = vperm.xlu0 %5226, %v4697
      %v5228 = vpop.permute.xlu0 %5227
      %5230 = vset.pattern.permute.xlu0 2
      %5231 = vperm.xlu0 %5230, %v4698
      %v5232 = vpop.permute.xlu0 %5231
      %5234 = vset.pattern.permute.xlu0 2
      %5235 = vperm.xlu0 %5234, %v4699
      %v5236 = vpop.permute.xlu0 %5235
      %5238 = vset.pattern.permute.xlu0 2
      %5239 = vperm.xlu0 %5238, %v4700
      %v5240 = vpop.permute.xlu0 %5239
      %5242 = vset.pattern.permute.xlu0 2
      %5243 = vperm.xlu0 %5242, %v4701
      %v5244 = vpop.permute.xlu0 %5243
      %5246 = vset.pattern.permute.xlu0 2
      %5247 = vperm.xlu0 %5246, %v4702
      %v5248 = vpop.permute.xlu0 %5247
      %5250 = vset.pattern.permute.xlu0 2
      %5251 = vperm.xlu0 %5250, %v4703
      %v5252 = vpop.permute.xlu0 %5251
      %5254 = vset.pattern.permute.xlu0 2
      %5255 = vperm.xlu0 %5254, %v4704
      %v5256 = vpop.permute.xlu0 %5255
      %5258 = vset.pattern.permute.xlu0 2
      %5259 = vperm.xlu0 %5258, %v4705
      %v5260 = vpop.permute.xlu0 %5259
      %v5262 = vlaneseq
      %v5263 = vshrl.u32 %v5262, 7
      %v5264 = vsub.s32 2, %v5263
      %v5265 = vrot.slane %v5133, %v5264
      %v5266 = vmul.f32 %v5136, %v5265
      %v5267 = vmul.f32 %v5140, %v5265
      %v5268 = vmul.f32 %v5144, %v5265
      %v5269 = vmul.f32 %v5148, %v5265
      %v5270 = vmul.f32 %v5152, %v5265
      %v5271 = vmul.f32 %v5156, %v5265
      %v5272 = vmul.f32 %v5160, %v5265
      %v5273 = vmul.f32 %v5164, %v5265
      %v5274 = vmul.f32 %v5168, %v5265
      %v5275 = vmul.f32 %v5172, %v5265
      %v5276 = vmul.f32 %v5176, %v5265
      %v5277 = vmul.f32 %v5180, %v5265
      %v5278 = vmul.f32 %v5184, %v5265
      %v5279 = vmul.f32 %v5188, %v5265
      %v5280 = vmul.f32 %v5192, %v5265
      %v5281 = vmul.f32 %v5196, %v5265
      %v5282 = vmul.f32 %v5200, %v5265
      %v5283 = vmul.f32 %v5204, %v5265
      %v5284 = vmul.f32 %v5208, %v5265
      %v5285 = vmul.f32 %v5212, %v5265
      %v5286 = vmul.f32 %v5216, %v5265
      %v5287 = vmul.f32 %v5220, %v5265
      %v5288 = vmul.f32 %v5224, %v5265
      %v5289 = vmul.f32 %v5228, %v5265
      %v5290 = vmul.f32 %v5232, %v5265
      %v5291 = vmul.f32 %v5236, %v5265
      %v5292 = vmul.f32 %v5240, %v5265
      %v5293 = vmul.f32 %v5244, %v5265
      %v5294 = vmul.f32 %v5248, %v5265
      %v5295 = vmul.f32 %v5252, %v5265
      %v5296 = vmul.f32 %v5256, %v5265
      %v5297 = vmul.f32 %v5260, %v5265
      %v5298 = vadd.f32 %v5100, %v5266
      %v5299 = vadd.f32 %v5101, %v5267
      %v5300 = vadd.f32 %v5102, %v5268
      %v5301 = vadd.f32 %v5103, %v5269
      %v5302 = vadd.f32 %v5104, %v5270
      %v5303 = vadd.f32 %v5105, %v5271
      %v5304 = vadd.f32 %v5106, %v5272
      %v5305 = vadd.f32 %v5107, %v5273
      %v5306 = vadd.f32 %v5108, %v5274
      %v5307 = vadd.f32 %v5109, %v5275
      %v5308 = vadd.f32 %v5110, %v5276
      %v5309 = vadd.f32 %v5111, %v5277
      %v5310 = vadd.f32 %v5112, %v5278
      %v5311 = vadd.f32 %v5113, %v5279
      %v5312 = vadd.f32 %v5114, %v5280
      %v5313 = vadd.f32 %v5115, %v5281
      %v5314 = vadd.f32 %v5116, %v5282
      %v5315 = vadd.f32 %v5117, %v5283
      %v5316 = vadd.f32 %v5118, %v5284
      %v5317 = vadd.f32 %v5119, %v5285
      %v5318 = vadd.f32 %v5120, %v5286
      %v5319 = vadd.f32 %v5121, %v5287
      %v5320 = vadd.f32 %v5122, %v5288
      %v5321 = vadd.f32 %v5123, %v5289
      %v5322 = vadd.f32 %v5124, %v5290
      %v5323 = vadd.f32 %v5125, %v5291
      %v5324 = vadd.f32 %v5126, %v5292
      %v5325 = vadd.f32 %v5127, %v5293
      %v5326 = vadd.f32 %v5128, %v5294
      %v5327 = vadd.f32 %v5129, %v5295
      %v5328 = vadd.f32 %v5130, %v5296
      %v5329 = vadd.f32 %v5131, %v5297
      %5330 = vset.pattern.permute.xlu0 3
      %5331 = vperm.xlu0 %5330, %v4674
      %v5332 = vpop.permute.xlu0 %5331
      %5334 = vset.pattern.permute.xlu0 3
      %5335 = vperm.xlu0 %5334, %v4675
      %v5336 = vpop.permute.xlu0 %5335
      %5338 = vset.pattern.permute.xlu0 3
      %5339 = vperm.xlu0 %5338, %v4676
      %v5340 = vpop.permute.xlu0 %5339
      %5342 = vset.pattern.permute.xlu0 3
      %5343 = vperm.xlu0 %5342, %v4677
      %v5344 = vpop.permute.xlu0 %5343
      %5346 = vset.pattern.permute.xlu0 3
      %5347 = vperm.xlu0 %5346, %v4678
      %v5348 = vpop.permute.xlu0 %5347
      %5350 = vset.pattern.permute.xlu0 3
      %5351 = vperm.xlu0 %5350, %v4679
      %v5352 = vpop.permute.xlu0 %5351
      %5354 = vset.pattern.permute.xlu0 3
      %5355 = vperm.xlu0 %5354, %v4680
      %v5356 = vpop.permute.xlu0 %5355
      %5358 = vset.pattern.permute.xlu0 3
      %5359 = vperm.xlu0 %5358, %v4681
      %v5360 = vpop.permute.xlu0 %5359
      %5362 = vset.pattern.permute.xlu0 3
      %5363 = vperm.xlu0 %5362, %v4682
      %v5364 = vpop.permute.xlu0 %5363
      %5366 = vset.pattern.permute.xlu0 3
      %5367 = vperm.xlu0 %5366, %v4683
      %v5368 = vpop.permute.xlu0 %5367
      %5370 = vset.pattern.permute.xlu0 3
      %5371 = vperm.xlu0 %5370, %v4684
      %v5372 = vpop.permute.xlu0 %5371
      %5374 = vset.pattern.permute.xlu0 3
      %5375 = vperm.xlu0 %5374, %v4685
      %v5376 = vpop.permute.xlu0 %5375
      %5378 = vset.pattern.permute.xlu0 3
      %5379 = vperm.xlu0 %5378, %v4686
      %v5380 = vpop.permute.xlu0 %5379
      %5382 = vset.pattern.permute.xlu0 3
      %5383 = vperm.xlu0 %5382, %v4687
      %v5384 = vpop.permute.xlu0 %5383
      %5386 = vset.pattern.permute.xlu0 3
      %5387 = vperm.xlu0 %5386, %v4688
      %v5388 = vpop.permute.xlu0 %5387
      %5390 = vset.pattern.permute.xlu0 3
      %5391 = vperm.xlu0 %5390, %v4689
      %v5392 = vpop.permute.xlu0 %5391
      %5394 = vset.pattern.permute.xlu0 3
      %5395 = vperm.xlu0 %5394, %v4690
      %v5396 = vpop.permute.xlu0 %5395
      %5398 = vset.pattern.permute.xlu0 3
      %5399 = vperm.xlu0 %5398, %v4691
      %v5400 = vpop.permute.xlu0 %5399
      %5402 = vset.pattern.permute.xlu0 3
      %5403 = vperm.xlu0 %5402, %v4692
      %v5404 = vpop.permute.xlu0 %5403
      %5406 = vset.pattern.permute.xlu0 3
      %5407 = vperm.xlu0 %5406, %v4693
      %v5408 = vpop.permute.xlu0 %5407
      %5410 = vset.pattern.permute.xlu0 3
      %5411 = vperm.xlu0 %5410, %v4694
      %v5412 = vpop.permute.xlu0 %5411
      %5414 = vset.pattern.permute.xlu0 3
      %5415 = vperm.xlu0 %5414, %v4695
      %v5416 = vpop.permute.xlu0 %5415
      %5418 = vset.pattern.permute.xlu0 3
      %5419 = vperm.xlu0 %5418, %v4696
      %v5420 = vpop.permute.xlu0 %5419
      %5422 = vset.pattern.permute.xlu0 3
      %5423 = vperm.xlu0 %5422, %v4697
      %v5424 = vpop.permute.xlu0 %5423
      %5426 = vset.pattern.permute.xlu0 3
      %5427 = vperm.xlu0 %5426, %v4698
      %v5428 = vpop.permute.xlu0 %5427
      %5430 = vset.pattern.permute.xlu0 3
      %5431 = vperm.xlu0 %5430, %v4699
      %v5432 = vpop.permute.xlu0 %5431
      %5434 = vset.pattern.permute.xlu0 3
      %5435 = vperm.xlu0 %5434, %v4700
      %v5436 = vpop.permute.xlu0 %5435
      %5438 = vset.pattern.permute.xlu0 3
      %5439 = vperm.xlu0 %5438, %v4701
      %v5440 = vpop.permute.xlu0 %5439
      %5442 = vset.pattern.permute.xlu0 3
      %5443 = vperm.xlu0 %5442, %v4702
      %v5444 = vpop.permute.xlu0 %5443
      %5446 = vset.pattern.permute.xlu0 3
      %5447 = vperm.xlu0 %5446, %v4703
      %v5448 = vpop.permute.xlu0 %5447
      %5450 = vset.pattern.permute.xlu0 3
      %5451 = vperm.xlu0 %5450, %v4704
      %v5452 = vpop.permute.xlu0 %5451
      %5454 = vset.pattern.permute.xlu0 3
      %5455 = vperm.xlu0 %5454, %v4705
      %v5456 = vpop.permute.xlu0 %5455
      %v5458 = vlaneseq
      %v5459 = vshrl.u32 %v5458, 7
      %v5460 = vsub.s32 3, %v5459
      %v5461 = vrot.slane %v5133, %v5460
      %v5462 = vmul.f32 %v5332, %v5461
      %v5463 = vmul.f32 %v5336, %v5461
      %v5464 = vmul.f32 %v5340, %v5461
      %v5465 = vmul.f32 %v5344, %v5461
      %v5466 = vmul.f32 %v5348, %v5461
      %v5467 = vmul.f32 %v5352, %v5461
      %v5468 = vmul.f32 %v5356, %v5461
      %v5469 = vmul.f32 %v5360, %v5461
      %v5470 = vmul.f32 %v5364, %v5461
      %v5471 = vmul.f32 %v5368, %v5461
      %v5472 = vmul.f32 %v5372, %v5461
      %v5473 = vmul.f32 %v5376, %v5461
      %v5474 = vmul.f32 %v5380, %v5461
      %v5475 = vmul.f32 %v5384, %v5461
      %v5476 = vmul.f32 %v5388, %v5461
      %v5477 = vmul.f32 %v5392, %v5461
      %v5478 = vmul.f32 %v5396, %v5461
      %v5479 = vmul.f32 %v5400, %v5461
      %v5480 = vmul.f32 %v5404, %v5461
      %v5481 = vmul.f32 %v5408, %v5461
      %v5482 = vmul.f32 %v5412, %v5461
      %v5483 = vmul.f32 %v5416, %v5461
      %v5484 = vmul.f32 %v5420, %v5461
      %v5485 = vmul.f32 %v5424, %v5461
      %v5486 = vmul.f32 %v5428, %v5461
      %v5487 = vmul.f32 %v5432, %v5461
      %v5488 = vmul.f32 %v5436, %v5461
      %v5489 = vmul.f32 %v5440, %v5461
      %v5490 = vmul.f32 %v5444, %v5461
      %v5491 = vmul.f32 %v5448, %v5461
      %v5492 = vmul.f32 %v5452, %v5461
      %v5493 = vmul.f32 %v5456, %v5461
      %v5494 = vadd.f32 %v5298, %v5462
      %v5495 = vadd.f32 %v5299, %v5463
      %v5496 = vadd.f32 %v5300, %v5464
      %v5497 = vadd.f32 %v5301, %v5465
      %v5498 = vadd.f32 %v5302, %v5466
      %v5499 = vadd.f32 %v5303, %v5467
      %v5500 = vadd.f32 %v5304, %v5468
      %v5501 = vadd.f32 %v5305, %v5469
      %v5502 = vadd.f32 %v5306, %v5470
      %v5503 = vadd.f32 %v5307, %v5471
      %v5504 = vadd.f32 %v5308, %v5472
      %v5505 = vadd.f32 %v5309, %v5473
      %v5506 = vadd.f32 %v5310, %v5474
      %v5507 = vadd.f32 %v5311, %v5475
      %v5508 = vadd.f32 %v5312, %v5476
      %v5509 = vadd.f32 %v5313, %v5477
      %v5510 = vadd.f32 %v5314, %v5478
      %v5511 = vadd.f32 %v5315, %v5479
      %v5512 = vadd.f32 %v5316, %v5480
      %v5513 = vadd.f32 %v5317, %v5481
      %v5514 = vadd.f32 %v5318, %v5482
      %v5515 = vadd.f32 %v5319, %v5483
      %v5516 = vadd.f32 %v5320, %v5484
      %v5517 = vadd.f32 %v5321, %v5485
      %v5518 = vadd.f32 %v5322, %v5486
      %v5519 = vadd.f32 %v5323, %v5487
      %v5520 = vadd.f32 %v5324, %v5488
      %v5521 = vadd.f32 %v5325, %v5489
      %v5522 = vadd.f32 %v5326, %v5490
      %v5523 = vadd.f32 %v5327, %v5491
      %v5524 = vadd.f32 %v5328, %v5492
      %v5525 = vadd.f32 %v5329, %v5493
      %v5526 = vadd.f32 %v4606, %v5494
      %v5527 = vadd.f32 %v4607, %v5495
      %v5528 = vadd.f32 %v4608, %v5496
      %v5529 = vadd.f32 %v4609, %v5497
      %v5530 = vadd.f32 %v4610, %v5498
      %v5531 = vadd.f32 %v4611, %v5499
      %v5532 = vadd.f32 %v4612, %v5500
      %v5533 = vadd.f32 %v4613, %v5501
      %v5534 = vadd.f32 %v4614, %v5502
      %v5535 = vadd.f32 %v4615, %v5503
      %v5536 = vadd.f32 %v4616, %v5504
      %v5537 = vadd.f32 %v4617, %v5505
      %v5538 = vadd.f32 %v4618, %v5506
      %v5539 = vadd.f32 %v4619, %v5507
      %v5540 = vadd.f32 %v4620, %v5508
      %v5541 = vadd.f32 %v4621, %v5509
      %v5542 = vadd.f32 %v4622, %v5510
      %v5543 = vadd.f32 %v4623, %v5511
      %v5544 = vadd.f32 %v4624, %v5512
      %v5545 = vadd.f32 %v4625, %v5513
      %v5546 = vadd.f32 %v4626, %v5514
      %v5547 = vadd.f32 %v4627, %v5515
      %v5548 = vadd.f32 %v4628, %v5516
      %v5549 = vadd.f32 %v4629, %v5517
      %v5550 = vadd.f32 %v4630, %v5518
      %v5551 = vadd.f32 %v4631, %v5519
      %v5552 = vadd.f32 %v4632, %v5520
      %v5553 = vadd.f32 %v4633, %v5521
      %v5554 = vadd.f32 %v4634, %v5522
      %v5555 = vadd.f32 %v4635, %v5523
      %v5556 = vadd.f32 %v4636, %v5524
      %v5557 = vadd.f32 %v4637, %v5525
      %v5558 = vld [vmem:[%s8] sm:$0x1]
      %v5560 = vlaneseq
      %v5561 = vshrl.u32 %v5560, 7
      %v5562 = vsub.s32 0, %v5561
      %v5563 = vrot.slane %v5558, %v5562
      %v5565 = vadd.f32 %v5526, %v5563
      %v5566 = vadd.f32 %v5527, %v5563
      %v5567 = vadd.f32 %v5528, %v5563
      %v5568 = vadd.f32 %v5529, %v5563
      %v5569 = vadd.f32 %v5530, %v5563
      %v5570 = vadd.f32 %v5531, %v5563
      %v5571 = vadd.f32 %v5532, %v5563
      %v5572 = vadd.f32 %v5533, %v5563
      %v5573 = vadd.f32 %v5534, %v5563
      %v5574 = vadd.f32 %v5535, %v5563
      %v5575 = vadd.f32 %v5536, %v5563
      %v5576 = vadd.f32 %v5537, %v5563
      %v5577 = vadd.f32 %v5538, %v5563
      %v5578 = vadd.f32 %v5539, %v5563
      %v5579 = vadd.f32 %v5540, %v5563
      %v5580 = vadd.f32 %v5541, %v5563
      %v5581 = vadd.f32 %v5542, %v5563
      %v5582 = vadd.f32 %v5543, %v5563
      %v5583 = vadd.f32 %v5544, %v5563
      %v5584 = vadd.f32 %v5545, %v5563
      %v5585 = vadd.f32 %v5546, %v5563
      %v5586 = vadd.f32 %v5547, %v5563
      %v5587 = vadd.f32 %v5548, %v5563
      %v5588 = vadd.f32 %v5549, %v5563
      %v5589 = vadd.f32 %v5550, %v5563
      %v5590 = vadd.f32 %v5551, %v5563
      %v5591 = vadd.f32 %v5552, %v5563
      %v5592 = vadd.f32 %v5553, %v5563
      %v5593 = vadd.f32 %v5554, %v5563
      %v5594 = vadd.f32 %v5555, %v5563
      %v5595 = vadd.f32 %v5556, %v5563
      %v5596 = vadd.f32 %v5557, %v5563
      %vm5597 = vcmask 64512
      %5598 = vst.msk [vmem:[%s356] sm:$0xff] %vm5597, %v5565
      %5599 = vst.msk [vmem:[%s356 + $0x8] sm:$0xff] %vm5597, %v5566
      %5600 = vst.msk [vmem:[%s356 + $0x10] sm:$0xff] %vm5597, %v5567
      %5601 = vst.msk [vmem:[%s356 + $0x18] sm:$0xff] %vm5597, %v5568
      %5602 = vst.msk [vmem:[%s356 + $0x20] sm:$0xff] %vm5597, %v5569
      %5603 = vst.msk [vmem:[%s356 + $0x28] sm:$0xff] %vm5597, %v5570
      %5604 = vst.msk [vmem:[%s356 + $0x30] sm:$0xff] %vm5597, %v5571
      %5605 = vst.msk [vmem:[%s356 + $0x38] sm:$0xff] %vm5597, %v5572
      %5606 = vst.msk [vmem:[%s356 + $0x40] sm:$0xff] %vm5597, %v5573
      %5607 = vst.msk [vmem:[%s356 + $0x48] sm:$0xff] %vm5597, %v5574
      %5608 = vst.msk [vmem:[%s356 + $0x50] sm:$0xff] %vm5597, %v5575
      %5609 = vst.msk [vmem:[%s356 + $0x58] sm:$0xff] %vm5597, %v5576
      %5610 = vst.msk [vmem:[%s356 + $0x60] sm:$0xff] %vm5597, %v5577
      %5611 = vst.msk [vmem:[%s356 + $0x68] sm:$0xff] %vm5597, %v5578
      %5612 = vst.msk [vmem:[%s356 + $0x70] sm:$0xff] %vm5597, %v5579
      %5613 = vst.msk [vmem:[%s356 + $0x78] sm:$0xff] %vm5597, %v5580
      %5614 = vst.msk [vmem:[%s356 + $0x80] sm:$0xff] %vm5597, %v5581
      %5615 = vst.msk [vmem:[%s356 + $0x88] sm:$0xff] %vm5597, %v5582
      %5616 = vst.msk [vmem:[%s356 + $0x90] sm:$0xff] %vm5597, %v5583
      %5617 = vst.msk [vmem:[%s356 + $0x98] sm:$0xff] %vm5597, %v5584
      %5618 = vst.msk [vmem:[%s356 + $0xa0] sm:$0xff] %vm5597, %v5585
      %5619 = vst.msk [vmem:[%s356 + $0xa8] sm:$0xff] %vm5597, %v5586
      %5620 = vst.msk [vmem:[%s356 + $0xb0] sm:$0xff] %vm5597, %v5587
      %5621 = vst.msk [vmem:[%s356 + $0xb8] sm:$0xff] %vm5597, %v5588
      %5622 = vst.msk [vmem:[%s356 + $0xc0] sm:$0xff] %vm5597, %v5589
      %5623 = vst.msk [vmem:[%s356 + $0xc8] sm:$0xff] %vm5597, %v5590
      %5624 = vst.msk [vmem:[%s356 + $0xd0] sm:$0xff] %vm5597, %v5591
      %5625 = vst.msk [vmem:[%s356 + $0xd8] sm:$0xff] %vm5597, %v5592
      %5626 = vst.msk [vmem:[%s356 + $0xe0] sm:$0xff] %vm5597, %v5593
      %5627 = vst.msk [vmem:[%s356 + $0xe8] sm:$0xff] %vm5597, %v5594
      %5628 = vst.msk [vmem:[%s356 + $0xf0] sm:$0xff] %vm5597, %v5595
      %5629 = vst.msk [vmem:[%s356 + $0xf8] sm:$0xff] %vm5597, %v5596
      %s5630 = smul.u32 16, %s25
      %p5631 = scmp.lt.s32.totalorder %s24, 1
      %s5632 = scalar_select %p5631, %s24, 1
      %p5633 = scmp.lt.s32.totalorder %s5630, 15
      %s5634 = scalar_select %p5633, %s5630, 15
      %s5635 = smul.addr %s5634, 2
      %s5636 = smul.addr %s5632, 32
      %s5637 = sadd.s32 %s5635, %s5636
      %s5638 = smul.addr %s5637, 8
      %s5639 = scalar_lea.vmem %s9, %s5638
      // Predicated region
      $region65: #{tpu_custom_call.1} parent=55 // pred_check
        %p5640 = pneg %p246
      $region66: #{tpu_custom_call.1} parent=55 // pred_check_branch
        %5642 = sbr.rel (%p5640) target = $region68
      $region67: #{tpu_custom_call.1} parent=55 // pred_region
        %s5643 = smul.u32 16, %s25
      $region68: #{tpu_custom_call.1} parent=55 // pred_fallthru
        _
    $region56: #{tpu_custom_call.1} parent=5 // pred_fallthru
      _
    %p5644 = scmp.le.s32.totalorder 2, %s15
    // Predicated region
    $region69: #{tpu_custom_call.1} parent=5 // pred_check
      %p5645 = pneg %p5644
    $region70: #{tpu_custom_call.1} parent=5 // pred_check_branch
      %5647 = sbr.rel (%p5645) target = $region72
    $region71: #{tpu_custom_call.1} parent=5 // pred_region
      %s5648 = ssub.s32 %s15, 2
      // Predicated region
      $region73: #{tpu_custom_call.1} parent=71 // pred_check
        %p5649 = pneg %p252
      $region74: #{tpu_custom_call.1} parent=71 // pred_check_branch
        %5651 = sbr.rel (%p5649) target = $region76
      $region75: #{tpu_custom_call.1} parent=71 // pred_region
        %s5652 = smul.u32 16, %s27
        %p5653 = scmp.lt.s32.totalorder %s26, 1
        %s5654 = scalar_select %p5653, %s26, 1
        %p5655 = scmp.lt.s32.totalorder %s5652, 15
        %s5656 = scalar_select %p5655, %s5652, 15
        %s5657 = smul.addr %s5656, 2
        %s5658 = smul.addr %s5654, 32
        %s5659 = sadd.s32 %s5657, %s5658
        %s5660 = smul.addr %s5659, 8
        %s5661 = scalar_lea.vmem %s9, %s5660
      $region76: #{tpu_custom_call.1} parent=71 // pred_fallthru
        _
    $region72: #{tpu_custom_call.1} parent=5 // pred_fallthru
      _
  $region6: #{tpu_custom_call.1} parent=0 // loop_footer
    %s19 = sadd.s32 1, %s15
  $region7: #{tpu_custom_call.1} parent=0 // loop_footer_branch
    %14 = sbr.rel target = $region3
  $region8: #{tpu_custom_call.1} parent=0 // loop_exit
    _

</llo_original>
